<compile_context>
chip_gen: v6e
topology: v6e:2x2x1
jax: 0.10.0
libtpu: 0.0.40
codegen_flags: <defaults>
</compile_context>

<pallas_src>
import functools
import math

import jax
import jax.numpy as jnp
from jax.experimental import pallas as pl
from jax.experimental.pallas import tpu as pltpu


def _elu(x):
    # F.elu with alpha=1:  x if x>0 else exp(x)-1  (overflow-safe exp arg)
    return jnp.where(x > 0, x, jnp.exp(jnp.minimum(x, 0.0)) - 1.0)


def _round_up(n, m):
    return ((n + m - 1) // m) * m


def _mann_kernel(
    xg_ref, xm_ref,
    gmean_ref, ginvstd_ref, mmean_ref, minvstd_ref,
    gw1t_ref, gb1_ref, gw2t_ref, gb2_ref, gw3t_ref, gb3_ref,
    ew1f_ref, ew2f_ref, ew3f_ref,
    ew1t_ref, ew2t_ref, ew3t_ref,
    eb1_ref, eb2_ref, eb3_ref,
    ymean_ref, ystd_ref,
    y_ref, g_ref, w0_ref, w1_ref, w2_ref,
):
    f32 = jnp.float32

    # ---- input normalization (utility.Normalize), multiply by 1/std --------
    xg = (xg_ref[...] - gmean_ref[...]) * ginvstd_ref[...]        # [Bt, Gin]
    xm = (xm_ref[...] - mmean_ref[...]) * minvstd_ref[...]        # [Bt, Min]

    # TODO(synk): F.dropout is identity in eval mode; training-mode dropout not implemented.

    # ---- gating network (MXU matmuls) ---------------------------------------
    h = _elu(jnp.dot(xg, gw1t_ref[...], preferred_element_type=f32)
             + gb1_ref[...])                                      # [Bt, Gh]
    h = _elu(jnp.dot(h, gw2t_ref[...], preferred_element_type=f32)
             + gb2_ref[...])                                      # [Bt, Gh]
    logits = (jnp.dot(h, gw3t_ref[...], preferred_element_type=f32)
              + gb3_ref[...])                                     # [Bt, Gout]
    logits = logits - jnp.max(logits, axis=-1, keepdims=True)
    eg = jnp.exp(logits)
    g = eg * pl.reciprocal(jnp.sum(eg, axis=-1, keepdims=True), approx=False)
    g_ref[...] = g                                                # [Bt, Gout]

    # ---- expert-weight blend as a single MXU matmul (lane-dense outputs) ---
    w0_ref[...] = jnp.dot(g, ew1f_ref[...], preferred_element_type=f32)
    w1_ref[...] = jnp.dot(g, ew2f_ref[...], preferred_element_type=f32)
    w2_ref[...] = jnp.dot(g, ew3f_ref[...], preferred_element_type=f32)

    # ---- blended biases:  g [Bt,Gout] @ Eb [Gout,R] -> [Bt,R] ---------------
    b0 = jnp.dot(g, eb1_ref[...], preferred_element_type=f32)     # [Bt, Mh]
    b1 = jnp.dot(g, eb2_ref[...], preferred_element_type=f32)     # [Bt, Mh]
    b2 = jnp.dot(g, eb3_ref[...], preferred_element_type=f32)     # [Bt, Mout]

    n_experts = eb1_ref.shape[0]

    # ---- main network, computed per-expert on the MXU -----------------------
    #   (sum_e g_e * W_e) @ x  ==  sum_e g_e * (x @ W_e^T)
    def expert_layer(x_in, ewt_ref, bias):
        acc = bias
        for e in range(n_experts):
            acc = acc + g[:, e:e + 1] * jnp.dot(
                x_in, ewt_ref[e], preferred_element_type=f32)
        return acc

    m = _elu(expert_layer(xm, ew1t_ref, b0))                      # [Bt, Mh]
    m = _elu(expert_layer(m, ew2t_ref, b1))                       # [Bt, Mh]
    m = expert_layer(m, ew3t_ref, b2)                             # [Bt, Mout]

    # ---- output renormalization (utility.Renormalize) ------------------------
    y_ref[...] = m * ystd_ref[...] + ymean_ref[...]


def mann_forward(x, params, gating_indices, main_indices, *, block_b=128):
    """x: [B, F] float32. Returns (y, g, w0, w1, w2) with PyTorch shapes."""
    f32 = jnp.float32
    Xnorm, Ynorm = params["Xnorm"], params["Ynorm"]

    gi = jnp.asarray(gating_indices)
    mi = jnp.asarray(main_indices)

    B = x.shape[0]
    Gout, Mh, Min = params["EW1"].shape
    Mout = params["EW3"].shape[1]
    Gin = gi.shape[0]
    Gh = params["GW1"].shape[0]

    # batch tiling (sublane aligned); pad batch to a multiple of the tile
    Bt = min(_round_up(block_b, 8), _round_up(B, 8))
    Bp = _round_up(B, Bt)

    x = x.astype(f32)
    if Bp != B:
        x = jnp.pad(x, ((0, Bp - B), (0, 0)))

    # glue: feature gather, per-branch norm stats (as 1/std), weight transposes
    xg = jnp.take(x, gi, axis=1)                                   # [Bp, Gin]
    xm = jnp.take(x, mi, axis=1)                                   # [Bp, Min]
    gmean = jnp.take(Xnorm[0], gi)[None, :].astype(f32)
    ginvstd = (1.0 / jnp.take(Xnorm[1], gi))[None, :].astype(f32)
    mmean = jnp.take(Xnorm[0], mi)[None, :].astype(f32)
    minvstd = (1.0 / jnp.take(Xnorm[1], mi))[None, :].astype(f32)
    ymean = Ynorm[0][None, :].astype(f32)
    ystd = Ynorm[1][None, :].astype(f32)

    gw1t = params["GW1"].T.astype(f32)                             # [Gin, Gh]
    gw2t = params["GW2"].T.astype(f32)                             # [Gh, Gh]
    gw3t = params["GW3"].T.astype(f32)                             # [Gh, Gout]
    gb1 = params["Gb1"].T.astype(f32)                              # [1, Gh]
    gb2 = params["Gb2"].T.astype(f32)                              # [1, Gh]
    gb3 = params["Gb3"].T.astype(f32)                              # [1, Gout]

    ew1 = params["EW1"].astype(f32)                                # [Gout, Mh, Min]
    ew2 = params["EW2"].astype(f32)                                # [Gout, Mh, Mh]
    ew3 = params["EW3"].astype(f32)                                # [Gout, Mout, Mh]
    ew1f = ew1.reshape(Gout, Mh * Min)                             # blend (row-major)
    ew2f = ew2.reshape(Gout, Mh * Mh)
    ew3f = ew3.reshape(Gout, Mout * Mh)
    ew1t = jnp.swapaxes(ew1, 1, 2)                                 # [Gout, Min, Mh]
    ew2t = jnp.swapaxes(ew2, 1, 2)                                 # [Gout, Mh, Mh]
    ew3t = jnp.swapaxes(ew3, 1, 2)                                 # [Gout, Mh, Mout]
    eb1 = params["Eb1"][..., 0].astype(f32)                        # [Gout, Mh]
    eb2 = params["Eb2"][..., 0].astype(f32)                        # [Gout, Mh]
    eb3 = params["Eb3"][..., 0].astype(f32)                        # [Gout, Mout]

    inputs = (xg, xm, gmean, ginvstd, mmean, minvstd,
              gw1t, gb1, gw2t, gb2, gw3t, gb3,
              ew1f, ew2f, ew3f, ew1t, ew2t, ew3t,
              eb1, eb2, eb3, ymean, ystd)

    def tiled(arr):
        return pl.BlockSpec((Bt, arr.shape[1]), lambda i: (i, 0))

    def rep(arr):
        if arr.ndim == 2:
            return pl.BlockSpec(arr.shape, lambda i: (0, 0))
        return pl.BlockSpec(arr.shape, lambda i: (0, 0, 0))

    in_specs = [tiled(xg), tiled(xm)] + [rep(a) for a in inputs[2:]]

    out_shape = (
        jax.ShapeDtypeStruct((Bp, Mout), f32),        # y
        jax.ShapeDtypeStruct((Bp, Gout), f32),        # g (batch-major)
        jax.ShapeDtypeStruct((Bp, Mh * Min), f32),    # w0 flat (lane-dense)
        jax.ShapeDtypeStruct((Bp, Mh * Mh), f32),     # w1 flat
        jax.ShapeDtypeStruct((Bp, Mout * Mh), f32),   # w2 flat
    )
    out_specs = (
        pl.BlockSpec((Bt, Mout), lambda i: (i, 0)),
        pl.BlockSpec((Bt, Gout), lambda i: (i, 0)),
        pl.BlockSpec((Bt, Mh * Min), lambda i: (i, 0)),
        pl.BlockSpec((Bt, Mh * Mh), lambda i: (i, 0)),
        pl.BlockSpec((Bt, Mout * Mh), lambda i: (i, 0)),
    )

    flops = 2 * Bp * (
        Gin * Gh + Gh * Gh + Gh * Gout                 # gating MLP
        + Gout * (Mh * Min + Mh * Mh + Mout * Mh)      # weight blends
        + Gout * (Min * Mh + Mh * Mh + Mh * Mout)      # per-expert main MLP
        + Gout * (2 * Mh + Mout))                      # bias blends
    bytes_accessed = 4 * (sum(a.size for a in inputs)
                          + sum(math.prod(s.shape) for s in out_shape))

    y_p, g_p, w0f, w1f, w2f = pl.pallas_call(
        _mann_kernel,
        out_shape=out_shape,
        grid=(Bp // Bt,),
        in_specs=in_specs,
        out_specs=out_specs,
        compiler_params=pltpu.CompilerParams(
            dimension_semantics=("parallel",),
            vmem_limit_bytes=32 * 1024 * 1024,
        ),
        cost_estimate=pl.CostEstimate(
            flops=flops,
            transcendentals=Bp * (2 * Gh + Gout + 2 * Mh),
            bytes_accessed=bytes_accessed,
        ),
    )(*inputs)

    # reshape / transpose at the edges so results match PyTorch layout exactly
    y = y_p[:B]
    g = g_p[:B].T                                      # [Gout, B]
    w0 = w0f[:B].reshape(B, Mh, Min)
    w1 = w1f[:B].reshape(B, Mh, Mh)
    w2 = w2f[:B].reshape(B, Mout, Mh)
    return y, g, w0, w1, w2


# ----------------------------- reference (plain JAX, PyTorch layout) --------
def ref_forward(x, p, gi, mi):
    xn = (x - p["Xnorm"][0]) / p["Xnorm"][1]
    g = xn[:, gi].T
    g = _elu(p["GW1"] @ g + p["Gb1"])
    g = _elu(p["GW2"] @ g + p["Gb2"])
    g = jax.nn.softmax(p["GW3"] @ g + p["Gb3"], axis=0)            # [Gout, B]
    m = xn[:, mi][..., None]                                       # [B, Min, 1]

    def blend(gmat, E):
        return jnp.einsum("eb,e...->b...", gmat, E)

    w0 = blend(g, p["EW1"])
    m = _elu(jnp.matmul(w0, m) + blend(g, p["Eb1"]))
    w1 = blend(g, p["EW2"])
    m = _elu(jnp.matmul(w1, m) + blend(g, p["Eb2"]))
    w2 = blend(g, p["EW3"])
    m = jnp.matmul(w2, m) + blend(g, p["Eb3"])
    m = m[..., 0]
    y = m * p["Ynorm"][1] + p["Ynorm"][0]
    return y, g, w0, w1, w2


# ----------------------------- parameter construction ------------------------
def make_params(key, gating_input, gating_hidden, gating_output,
                main_input, main_hidden, main_output, n_features):
    def weights(key, shape):
        bound = jnp.sqrt(6.0 / (shape[-2] * shape[-1]))
        return jax.random.uniform(key, shape, jnp.float32, -bound, bound)

    keys = jax.random.split(key, 16)
    p = {}
    p["GW1"] = weights(keys[0], (gating_hidden, gating_input))
    p["Gb1"] = 0.05 * jax.random.normal(keys[1], (gating_hidden, 1), jnp.float32)
    p["GW2"] = weights(keys[2], (gating_hidden, gating_hidden))
    p["Gb2"] = 0.05 * jax.random.normal(keys[3], (gating_hidden, 1), jnp.float32)
    p["GW3"] = weights(keys[4], (gating_output, gating_hidden))
    p["Gb3"] = 0.05 * jax.random.normal(keys[5], (gating_output, 1), jnp.float32)
    p["EW1"] = weights(keys[6], (gating_output, main_hidden, main_input))
    p["Eb1"] = 0.05 * jax.random.normal(keys[7], (gating_output, main_hidden, 1), jnp.float32)
    p["EW2"] = weights(keys[8], (gating_output, main_hidden, main_hidden))
    p["Eb2"] = 0.05 * jax.random.normal(keys[9], (gating_output, main_hidden, 1), jnp.float32)
    p["EW3"] = weights(keys[10], (gating_output, main_output, main_hidden))
    p["Eb3"] = 0.05 * jax.random.normal(keys[11], (gating_output, main_output, 1), jnp.float32)
    xmean = jax.random.normal(keys[12], (n_features,), jnp.float32)
    xstd = jnp.abs(jax.random.normal(keys[13], (n_features,), jnp.float32)) + 0.5
    p["Xnorm"] = jnp.stack([xmean, xstd])                          # [2, F]
    ymean = jax.random.normal(keys[14], (main_output,), jnp.float32)
    ystd = jnp.abs(jax.random.normal(keys[15], (main_output,), jnp.float32)) + 0.5
    p["Ynorm"] = jnp.stack([ymean, ystd])                          # [2, Mout]
    return p


if __name__ == "__main__":
    # small shapes consistent with the module
    B = 16
    GATING_INPUT, GATING_HIDDEN, GATING_OUTPUT = 16, 32, 4
    MAIN_INPUT, MAIN_HIDDEN, MAIN_OUTPUT = 48, 32, 16
    N_FEATURES = GATING_INPUT + MAIN_INPUT                         # 64

    # disjoint partition of the feature axis (gating = every 4th feature)
    all_idx = jnp.arange(N_FEATURES)
    gating_indices = all_idx[::4]                                  # 16 idx
    mask = jnp.ones((N_FEATURES,), bool).at[gating_indices].set(False)
    main_indices = all_idx[mask]                                   # 48 idx

    key = jax.random.PRNGKey(0)
    pkey, xkey = jax.random.split(key)
    params = make_params(pkey, GATING_INPUT, GATING_HIDDEN, GATING_OUTPUT,
                         MAIN_INPUT, MAIN_HIDDEN, MAIN_OUTPUT, N_FEATURES)
    x = jax.random.normal(xkey, (B, N_FEATURES), jnp.float32)

    fwd = jax.jit(functools.partial(mann_forward,
                                    gating_indices=gating_indices,
                                    main_indices=main_indices,
                                    block_b=8))                    # grid=(2,)
    y, g, w0, w1, w2 = fwd(x, params)
    jax.block_until_ready((y, g, w0, w1, w2))

    # sanity check against a plain-JAX reference that mirrors the PyTorch code
    yr, gr, w0r, w1r, w2r = ref_forward(x, params, gating_indices, main_indices)
    for got, want in ((y, yr), (g, gr), (w0, w0r), (w1, w1r), (w2, w2r)):
        assert got.shape == want.shape, (got.shape, want.shape)
        assert jnp.allclose(got, want, rtol=1e-4, atol=1e-4), float(
            jnp.max(jnp.abs(got - want)))

    print("KERNEL_OK")
</pallas_src>

<mosaic_0001>
module attributes {stable_mosaic.version = 11 : i64} {
  func.func @_mann_kernel(%arg0: i32, %arg1: memref<8x16xf32, #tpu.memory_space<vmem>>, %arg2: memref<8x48xf32, #tpu.memory_space<vmem>>, %arg3: memref<1x16xf32, #tpu.memory_space<vmem>>, %arg4: memref<1x16xf32, #tpu.memory_space<vmem>>, %arg5: memref<1x48xf32, #tpu.memory_space<vmem>>, %arg6: memref<1x48xf32, #tpu.memory_space<vmem>>, %arg7: memref<16x32xf32, #tpu.memory_space<vmem>>, %arg8: memref<1x32xf32, #tpu.memory_space<vmem>>, %arg9: memref<32x32xf32, #tpu.memory_space<vmem>>, %arg10: memref<1x32xf32, #tpu.memory_space<vmem>>, %arg11: memref<32x4xf32, #tpu.memory_space<vmem>>, %arg12: memref<1x4xf32, #tpu.memory_space<vmem>>, %arg13: memref<4x1536xf32, #tpu.memory_space<vmem>>, %arg14: memref<4x1024xf32, #tpu.memory_space<vmem>>, %arg15: memref<4x512xf32, #tpu.memory_space<vmem>>, %arg16: memref<4x48x32xf32, #tpu.memory_space<vmem>>, %arg17: memref<4x32x32xf32, #tpu.memory_space<vmem>>, %arg18: memref<4x32x16xf32, #tpu.memory_space<vmem>>, %arg19: memref<4x32xf32, #tpu.memory_space<vmem>>, %arg20: memref<4x32xf32, #tpu.memory_space<vmem>>, %arg21: memref<4x16xf32, #tpu.memory_space<vmem>>, %arg22: memref<1x16xf32, #tpu.memory_space<vmem>>, %arg23: memref<1x16xf32, #tpu.memory_space<vmem>>, %arg24: memref<8x16xf32, #tpu.memory_space<vmem>>, %arg25: memref<8x4xf32, #tpu.memory_space<vmem>>, %arg26: memref<8x1536xf32, #tpu.memory_space<vmem>>, %arg27: memref<8x1024xf32, #tpu.memory_space<vmem>>, %arg28: memref<8x512xf32, #tpu.memory_space<vmem>>) attributes {dimension_semantics = [#tpu.dimension_semantics<parallel>], iteration_bounds = array<i64: 2>, scalar_prefetch = 0 : i64, scratch_operands = 0 : i64, tpu.core_type = #tpu.core_type<tc>, window_params = [{transform_indices = @transform_0, window_bounds = array<i64: 8, 16>}, {transform_indices = @transform_1, window_bounds = array<i64: 8, 48>}, {pipeline_mode = #tpu.pipeline_mode<synchronous>, transform_indices = @transform_2, window_bounds = array<i64: 1, 16>}, {pipeline_mode = #tpu.pipeline_mode<synchronous>, transform_indices = @transform_3, window_bounds = array<i64: 1, 16>}, {pipeline_mode = #tpu.pipeline_mode<synchronous>, transform_indices = @transform_4, window_bounds = array<i64: 1, 48>}, {pipeline_mode = #tpu.pipeline_mode<synchronous>, transform_indices = @transform_5, window_bounds = array<i64: 1, 48>}, {pipeline_mode = #tpu.pipeline_mode<synchronous>, transform_indices = @transform_6, window_bounds = array<i64: 16, 32>}, {pipeline_mode = #tpu.pipeline_mode<synchronous>, transform_indices = @transform_7, window_bounds = array<i64: 1, 32>}, {pipeline_mode = #tpu.pipeline_mode<synchronous>, transform_indices = @transform_8, window_bounds = array<i64: 32, 32>}, {pipeline_mode = #tpu.pipeline_mode<synchronous>, transform_indices = @transform_9, window_bounds = array<i64: 1, 32>}, {pipeline_mode = #tpu.pipeline_mode<synchronous>, transform_indices = @transform_10, window_bounds = array<i64: 32, 4>}, {pipeline_mode = #tpu.pipeline_mode<synchronous>, transform_indices = @transform_11, window_bounds = array<i64: 1, 4>}, {pipeline_mode = #tpu.pipeline_mode<synchronous>, transform_indices = @transform_12, window_bounds = array<i64: 4, 1536>}, {pipeline_mode = #tpu.pipeline_mode<synchronous>, transform_indices = @transform_13, window_bounds = array<i64: 4, 1024>}, {pipeline_mode = #tpu.pipeline_mode<synchronous>, transform_indices = @transform_14, window_bounds = array<i64: 4, 512>}, {pipeline_mode = #tpu.pipeline_mode<synchronous>, transform_indices = @transform_15, window_bounds = array<i64: 4, 48, 32>}, {pipeline_mode = #tpu.pipeline_mode<synchronous>, transform_indices = @transform_16, window_bounds = array<i64: 4, 32, 32>}, {pipeline_mode = #tpu.pipeline_mode<synchronous>, transform_indices = @transform_17, window_bounds = array<i64: 4, 32, 16>}, {pipeline_mode = #tpu.pipeline_mode<synchronous>, transform_indices = @transform_18, window_bounds = array<i64: 4, 32>}, {pipeline_mode = #tpu.pipeline_mode<synchronous>, transform_indices = @transform_19, window_bounds = array<i64: 4, 32>}, {pipeline_mode = #tpu.pipeline_mode<synchronous>, transform_indices = @transform_20, window_bounds = array<i64: 4, 16>}, {pipeline_mode = #tpu.pipeline_mode<synchronous>, transform_indices = @transform_21, window_bounds = array<i64: 1, 16>}, {pipeline_mode = #tpu.pipeline_mode<synchronous>, transform_indices = @transform_22, window_bounds = array<i64: 1, 16>}, {transform_indices = @transform_23, window_bounds = array<i64: 8, 16>}, {transform_indices = @transform_24, window_bounds = array<i64: 8, 4>}, {transform_indices = @transform_25, window_bounds = array<i64: 8, 1536>}, {transform_indices = @transform_26, window_bounds = array<i64: 8, 1024>}, {transform_indices = @transform_27, window_bounds = array<i64: 8, 512>}]} {
    %c0 = arith.constant 0 : index
    %c0_0 = arith.constant 0 : index
    %0 = vector.load %arg1[%c0, %c0_0] : memref<8x16xf32, #tpu.memory_space<vmem>>, vector<8x16xf32>
    %c0_1 = arith.constant 0 : index
    %c0_2 = arith.constant 0 : index
    %1 = vector.load %arg3[%c0_1, %c0_2] : memref<1x16xf32, #tpu.memory_space<vmem>>, vector<1x16xf32>
    %2 = vector.broadcast %1 : vector<1x16xf32> to vector<8x16xf32>
    %3 = arith.subf %0, %2 : vector<8x16xf32>
    %c0_3 = arith.constant 0 : index
    %c0_4 = arith.constant 0 : index
    %4 = vector.load %arg4[%c0_3, %c0_4] : memref<1x16xf32, #tpu.memory_space<vmem>>, vector<1x16xf32>
    %5 = vector.broadcast %4 : vector<1x16xf32> to vector<8x16xf32>
    %6 = arith.mulf %3, %5 : vector<8x16xf32>
    %c0_5 = arith.constant 0 : index
    %c0_6 = arith.constant 0 : index
    %7 = vector.load %arg2[%c0_5, %c0_6] : memref<8x48xf32, #tpu.memory_space<vmem>>, vector<8x48xf32>
    %c0_7 = arith.constant 0 : index
    %c0_8 = arith.constant 0 : index
    %8 = vector.load %arg5[%c0_7, %c0_8] : memref<1x48xf32, #tpu.memory_space<vmem>>, vector<1x48xf32>
    %9 = vector.broadcast %8 : vector<1x48xf32> to vector<8x48xf32>
    %10 = arith.subf %7, %9 : vector<8x48xf32>
    %c0_9 = arith.constant 0 : index
    %c0_10 = arith.constant 0 : index
    %11 = vector.load %arg6[%c0_9, %c0_10] : memref<1x48xf32, #tpu.memory_space<vmem>>, vector<1x48xf32>
    %12 = vector.broadcast %11 : vector<1x48xf32> to vector<8x48xf32>
    %13 = arith.mulf %10, %12 : vector<8x48xf32>
    %c0_11 = arith.constant 0 : index
    %c0_12 = arith.constant 0 : index
    %14 = vector.load %arg7[%c0_11, %c0_12] : memref<16x32xf32, #tpu.memory_space<vmem>>, vector<16x32xf32>
    %cst = arith.constant dense<0.000000e+00> : vector<8x32xf32>
    %15 = tpu.matmul %6, %14, %cst {dimension_numbers = #tpu.dot_dimension_numbers<[1], [0], [0], [1], [0, 0, 1, 1], [], []>} : vector<8x16xf32>, vector<16x32xf32>, vector<8x32xf32> -> vector<8x32xf32>
    %c0_13 = arith.constant 0 : index
    %c0_14 = arith.constant 0 : index
    %16 = vector.load %arg8[%c0_13, %c0_14] : memref<1x32xf32, #tpu.memory_space<vmem>>, vector<1x32xf32>
    %17 = vector.broadcast %16 : vector<1x32xf32> to vector<8x32xf32>
    %18 = arith.addf %15, %17 : vector<8x32xf32>
    %cst_15 = arith.constant 0.000000e+00 : f32
    %19 = vector.broadcast %cst_15 : f32 to vector<8x32xf32>
    %20 = arith.cmpf ogt, %18, %19 : vector<8x32xf32>
    %cst_16 = arith.constant 0.000000e+00 : f32
    %21 = vector.broadcast %cst_16 : f32 to vector<8x32xf32>
    %22 = arith.minimumf %18, %21 : vector<8x32xf32>
    %23 = math.exp %22 : vector<8x32xf32>
    %cst_17 = arith.constant 1.000000e+00 : f32
    %24 = vector.broadcast %cst_17 : f32 to vector<8x32xf32>
    %25 = arith.subf %23, %24 : vector<8x32xf32>
    %26 = arith.select %20, %18, %25 : vector<8x32xi1>, vector<8x32xf32>
    %c0_18 = arith.constant 0 : index
    %c0_19 = arith.constant 0 : index
    %27 = vector.load %arg9[%c0_18, %c0_19] : memref<32x32xf32, #tpu.memory_space<vmem>>, vector<32x32xf32>
    %cst_20 = arith.constant dense<0.000000e+00> : vector<8x32xf32>
    %28 = tpu.matmul %26, %27, %cst_20 {dimension_numbers = #tpu.dot_dimension_numbers<[1], [0], [0], [1], [0, 0, 1, 1], [], []>} : vector<8x32xf32>, vector<32x32xf32>, vector<8x32xf32> -> vector<8x32xf32>
    %c0_21 = arith.constant 0 : index
    %c0_22 = arith.constant 0 : index
    %29 = vector.load %arg10[%c0_21, %c0_22] : memref<1x32xf32, #tpu.memory_space<vmem>>, vector<1x32xf32>
    %30 = vector.broadcast %29 : vector<1x32xf32> to vector<8x32xf32>
    %31 = arith.addf %28, %30 : vector<8x32xf32>
    %cst_23 = arith.constant 0.000000e+00 : f32
    %32 = vector.broadcast %cst_23 : f32 to vector<8x32xf32>
    %33 = arith.cmpf ogt, %31, %32 : vector<8x32xf32>
    %cst_24 = arith.constant 0.000000e+00 : f32
    %34 = vector.broadcast %cst_24 : f32 to vector<8x32xf32>
    %35 = arith.minimumf %31, %34 : vector<8x32xf32>
    %36 = math.exp %35 : vector<8x32xf32>
    %cst_25 = arith.constant 1.000000e+00 : f32
    %37 = vector.broadcast %cst_25 : f32 to vector<8x32xf32>
    %38 = arith.subf %36, %37 : vector<8x32xf32>
    %39 = arith.select %33, %31, %38 : vector<8x32xi1>, vector<8x32xf32>
    %c0_26 = arith.constant 0 : index
    %c0_27 = arith.constant 0 : index
    %40 = vector.load %arg11[%c0_26, %c0_27] : memref<32x4xf32, #tpu.memory_space<vmem>>, vector<32x4xf32>
    %cst_28 = arith.constant dense<0.000000e+00> : vector<8x4xf32>
    %41 = tpu.matmul %39, %40, %cst_28 {dimension_numbers = #tpu.dot_dimension_numbers<[1], [0], [0], [1], [0, 0, 1, 1], [], []>} : vector<8x32xf32>, vector<32x4xf32>, vector<8x4xf32> -> vector<8x4xf32>
    %c0_29 = arith.constant 0 : index
    %c0_30 = arith.constant 0 : index
    %42 = vector.load %arg12[%c0_29, %c0_30] : memref<1x4xf32, #tpu.memory_space<vmem>>, vector<1x4xf32>
    %43 = vector.broadcast %42 : vector<1x4xf32> to vector<8x4xf32>
    %44 = arith.addf %41, %43 : vector<8x4xf32>
    %cst_31 = arith.constant dense<0xFF800000> : vector<8xf32>
    %45 = vector.multi_reduction <maximumf>, %44, %cst_31 [1] : vector<8x4xf32> to vector<8xf32>
    %46 = vector.shape_cast %45 : vector<8xf32> to vector<8x1xf32>
    %47 = vector.broadcast %46 : vector<8x1xf32> to vector<8x4xf32>
    %48 = arith.subf %44, %47 : vector<8x4xf32>
    %49 = math.exp %48 : vector<8x4xf32>
    %cst_32 = arith.constant dense<0.000000e+00> : vector<8xf32>
    %50 = vector.multi_reduction <add>, %49, %cst_32 [1] : vector<8x4xf32> to vector<8xf32>
    %51 = vector.shape_cast %50 : vector<8xf32> to vector<8x1xf32>
    %52 = tpu.reciprocal %51 : vector<8x1xf32> -> vector<8x1xf32>
    %53 = vector.broadcast %52 : vector<8x1xf32> to vector<8x4xf32>
    %54 = arith.mulf %49, %53 : vector<8x4xf32>
    %c0_33 = arith.constant 0 : index
    %c0_34 = arith.constant 0 : index
    %55 = vector.load %arg25[%c0_33, %c0_34] : memref<8x4xf32, #tpu.memory_space<vmem>>, vector<8x4xf32>
    tpu.vector_store %arg25[%c0_33, %c0_34], %54 {strides = array<i32>} : memref<8x4xf32, #tpu.memory_space<vmem>>, vector<8x4xf32>,
    %c0_35 = arith.constant 0 : index
    %c0_36 = arith.constant 0 : index
    %56 = vector.load %arg13[%c0_35, %c0_36] : memref<4x1536xf32, #tpu.memory_space<vmem>>, vector<4x1536xf32>
    %cst_37 = arith.constant dense<0.000000e+00> : vector<8x1536xf32>
    %57 = tpu.matmul %54, %56, %cst_37 {dimension_numbers = #tpu.dot_dimension_numbers<[1], [0], [0], [1], [0, 0, 1, 1], [], []>} : vector<8x4xf32>, vector<4x1536xf32>, vector<8x1536xf32> -> vector<8x1536xf32>
    %c0_38 = arith.constant 0 : index
    %c0_39 = arith.constant 0 : index
    %58 = vector.load %arg26[%c0_38, %c0_39] : memref<8x1536xf32, #tpu.memory_space<vmem>>, vector<8x1536xf32>
    tpu.vector_store %arg26[%c0_38, %c0_39], %57 {strides = array<i32>} : memref<8x1536xf32, #tpu.memory_space<vmem>>, vector<8x1536xf32>,
    %c0_40 = arith.constant 0 : index
    %c0_41 = arith.constant 0 : index
    %59 = vector.load %arg14[%c0_40, %c0_41] : memref<4x1024xf32, #tpu.memory_space<vmem>>, vector<4x1024xf32>
    %cst_42 = arith.constant dense<0.000000e+00> : vector<8x1024xf32>
    %60 = tpu.matmul %54, %59, %cst_42 {dimension_numbers = #tpu.dot_dimension_numbers<[1], [0], [0], [1], [0, 0, 1, 1], [], []>} : vector<8x4xf32>, vector<4x1024xf32>, vector<8x1024xf32> -> vector<8x1024xf32>
    %c0_43 = arith.constant 0 : index
    %c0_44 = arith.constant 0 : index
    %61 = vector.load %arg27[%c0_43, %c0_44] : memref<8x1024xf32, #tpu.memory_space<vmem>>, vector<8x1024xf32>
    tpu.vector_store %arg27[%c0_43, %c0_44], %60 {strides = array<i32>} : memref<8x1024xf32, #tpu.memory_space<vmem>>, vector<8x1024xf32>,
    %c0_45 = arith.constant 0 : index
    %c0_46 = arith.constant 0 : index
    %62 = vector.load %arg15[%c0_45, %c0_46] : memref<4x512xf32, #tpu.memory_space<vmem>>, vector<4x512xf32>
    %cst_47 = arith.constant dense<0.000000e+00> : vector<8x512xf32>
    %63 = tpu.matmul %54, %62, %cst_47 {dimension_numbers = #tpu.dot_dimension_numbers<[1], [0], [0], [1], [0, 0, 1, 1], [], []>} : vector<8x4xf32>, vector<4x512xf32>, vector<8x512xf32> -> vector<8x512xf32>
    %c0_48 = arith.constant 0 : index
    %c0_49 = arith.constant 0 : index
    %64 = vector.load %arg28[%c0_48, %c0_49] : memref<8x512xf32, #tpu.memory_space<vmem>>, vector<8x512xf32>
    tpu.vector_store %arg28[%c0_48, %c0_49], %63 {strides = array<i32>} : memref<8x512xf32, #tpu.memory_space<vmem>>, vector<8x512xf32>,
    %c0_50 = arith.constant 0 : index
    %c0_51 = arith.constant 0 : index
    %65 = vector.load %arg19[%c0_50, %c0_51] : memref<4x32xf32, #tpu.memory_space<vmem>>, vector<4x32xf32>
    %cst_52 = arith.constant dense<0.000000e+00> : vector<8x32xf32>
    %66 = tpu.matmul %54, %65, %cst_52 {dimension_numbers = #tpu.dot_dimension_numbers<[1], [0], [0], [1], [0, 0, 1, 1], [], []>} : vector<8x4xf32>, vector<4x32xf32>, vector<8x32xf32> -> vector<8x32xf32>
    %c0_53 = arith.constant 0 : index
    %c0_54 = arith.constant 0 : index
    %67 = vector.load %arg20[%c0_53, %c0_54] : memref<4x32xf32, #tpu.memory_space<vmem>>, vector<4x32xf32>
    %cst_55 = arith.constant dense<0.000000e+00> : vector<8x32xf32>
    %68 = tpu.matmul %54, %67, %cst_55 {dimension_numbers = #tpu.dot_dimension_numbers<[1], [0], [0], [1], [0, 0, 1, 1], [], []>} : vector<8x4xf32>, vector<4x32xf32>, vector<8x32xf32> -> vector<8x32xf32>
    %c0_56 = arith.constant 0 : index
    %c0_57 = arith.constant 0 : index
    %69 = vector.load %arg21[%c0_56, %c0_57] : memref<4x16xf32, #tpu.memory_space<vmem>>, vector<4x16xf32>
    %cst_58 = arith.constant dense<0.000000e+00> : vector<8x16xf32>
    %70 = tpu.matmul %54, %69, %cst_58 {dimension_numbers = #tpu.dot_dimension_numbers<[1], [0], [0], [1], [0, 0, 1, 1], [], []>} : vector<8x4xf32>, vector<4x16xf32>, vector<8x16xf32> -> vector<8x16xf32>
    %71 = vector.extract_strided_slice %54 {offsets = [0, 0], sizes = [8, 1], strides = [1, 1]} : vector<8x4xf32> to vector<8x1xf32>
    %c0_59 = arith.constant 0 : index
    %c0_60 = arith.constant 0 : index
    %c0_61 = arith.constant 0 : index
    %72 = vector.load %arg16[%c0_59, %c0_60, %c0_61] : memref<4x48x32xf32, #tpu.memory_space<vmem>>, vector<1x48x32xf32>
    %73 = vector.shape_cast %72 : vector<1x48x32xf32> to vector<48x32xf32>
    %cst_62 = arith.constant dense<0.000000e+00> : vector<8x32xf32>
    %74 = tpu.matmul %13, %73, %cst_62 {dimension_numbers = #tpu.dot_dimension_numbers<[1], [0], [0], [1], [0, 0, 1, 1], [], []>} : vector<8x48xf32>, vector<48x32xf32>, vector<8x32xf32> -> vector<8x32xf32>
    %75 = vector.broadcast %71 : vector<8x1xf32> to vector<8x32xf32>
    %76 = arith.mulf %75, %74 : vector<8x32xf32>
    %77 = arith.addf %66, %76 : vector<8x32xf32>
    %78 = vector.extract_strided_slice %54 {offsets = [0, 1], sizes = [8, 1], strides = [1, 1]} : vector<8x4xf32> to vector<8x1xf32>
    %c1 = arith.constant 1 : index
    %c0_63 = arith.constant 0 : index
    %c0_64 = arith.constant 0 : index
    %79 = vector.load %arg16[%c1, %c0_63, %c0_64] : memref<4x48x32xf32, #tpu.memory_space<vmem>>, vector<1x48x32xf32>
    %80 = vector.shape_cast %79 : vector<1x48x32xf32> to vector<48x32xf32>
    %cst_65 = arith.constant dense<0.000000e+00> : vector<8x32xf32>
    %81 = tpu.matmul %13, %80, %cst_65 {dimension_numbers = #tpu.dot_dimension_numbers<[1], [0], [0], [1], [0, 0, 1, 1], [], []>} : vector<8x48xf32>, vector<48x32xf32>, vector<8x32xf32> -> vector<8x32xf32>
    %82 = vector.broadcast %78 : vector<8x1xf32> to vector<8x32xf32>
    %83 = arith.mulf %82, %81 : vector<8x32xf32>
    %84 = arith.addf %77, %83 : vector<8x32xf32>
    %85 = vector.extract_strided_slice %54 {offsets = [0, 2], sizes = [8, 1], strides = [1, 1]} : vector<8x4xf32> to vector<8x1xf32>
    %c2 = arith.constant 2 : index
    %c0_66 = arith.constant 0 : index
    %c0_67 = arith.constant 0 : index
    %86 = vector.load %arg16[%c2, %c0_66, %c0_67] : memref<4x48x32xf32, #tpu.memory_space<vmem>>, vector<1x48x32xf32>
    %87 = vector.shape_cast %86 : vector<1x48x32xf32> to vector<48x32xf32>
    %cst_68 = arith.constant dense<0.000000e+00> : vector<8x32xf32>
    %88 = tpu.matmul %13, %87, %cst_68 {dimension_numbers = #tpu.dot_dimension_numbers<[1], [0], [0], [1], [0, 0, 1, 1], [], []>} : vector<8x48xf32>, vector<48x32xf32>, vector<8x32xf32> -> vector<8x32xf32>
    %89 = vector.broadcast %85 : vector<8x1xf32> to vector<8x32xf32>
    %90 = arith.mulf %89, %88 : vector<8x32xf32>
    %91 = arith.addf %84, %90 : vector<8x32xf32>
    %92 = vector.extract_strided_slice %54 {offsets = [0, 3], sizes = [8, 1], strides = [1, 1]} : vector<8x4xf32> to vector<8x1xf32>
    %c3 = arith.constant 3 : index
    %c0_69 = arith.constant 0 : index
    %c0_70 = arith.constant 0 : index
    %93 = vector.load %arg16[%c3, %c0_69, %c0_70] : memref<4x48x32xf32, #tpu.memory_space<vmem>>, vector<1x48x32xf32>
    %94 = vector.shape_cast %93 : vector<1x48x32xf32> to vector<48x32xf32>
    %cst_71 = arith.constant dense<0.000000e+00> : vector<8x32xf32>
    %95 = tpu.matmul %13, %94, %cst_71 {dimension_numbers = #tpu.dot_dimension_numbers<[1], [0], [0], [1], [0, 0, 1, 1], [], []>} : vector<8x48xf32>, vector<48x32xf32>, vector<8x32xf32> -> vector<8x32xf32>
    %96 = vector.broadcast %92 : vector<8x1xf32> to vector<8x32xf32>
    %97 = arith.mulf %96, %95 : vector<8x32xf32>
    %98 = arith.addf %91, %97 : vector<8x32xf32>
    %cst_72 = arith.constant 0.000000e+00 : f32
    %99 = vector.broadcast %cst_72 : f32 to vector<8x32xf32>
    %100 = arith.cmpf ogt, %98, %99 : vector<8x32xf32>
    %cst_73 = arith.constant 0.000000e+00 : f32
    %101 = vector.broadcast %cst_73 : f32 to vector<8x32xf32>
    %102 = arith.minimumf %98, %101 : vector<8x32xf32>
    %103 = math.exp %102 : vector<8x32xf32>
    %cst_74 = arith.constant 1.000000e+00 : f32
    %104 = vector.broadcast %cst_74 : f32 to vector<8x32xf32>
    %105 = arith.subf %103, %104 : vector<8x32xf32>
    %106 = arith.select %100, %98, %105 : vector<8x32xi1>, vector<8x32xf32>
    %107 = vector.extract_strided_slice %54 {offsets = [0, 0], sizes = [8, 1], strides = [1, 1]} : vector<8x4xf32> to vector<8x1xf32>
    %c0_75 = arith.constant 0 : index
    %c0_76 = arith.constant 0 : index
    %c0_77 = arith.constant 0 : index
    %108 = vector.load %arg17[%c0_75, %c0_76, %c0_77] : memref<4x32x32xf32, #tpu.memory_space<vmem>>, vector<1x32x32xf32>
    %109 = vector.shape_cast %108 : vector<1x32x32xf32> to vector<32x32xf32>
    %cst_78 = arith.constant dense<0.000000e+00> : vector<8x32xf32>
    %110 = tpu.matmul %106, %109, %cst_78 {dimension_numbers = #tpu.dot_dimension_numbers<[1], [0], [0], [1], [0, 0, 1, 1], [], []>} : vector<8x32xf32>, vector<32x32xf32>, vector<8x32xf32> -> vector<8x32xf32>
    %111 = vector.broadcast %107 : vector<8x1xf32> to vector<8x32xf32>
    %112 = arith.mulf %111, %110 : vector<8x32xf32>
    %113 = arith.addf %68, %112 : vector<8x32xf32>
    %114 = vector.extract_strided_slice %54 {offsets = [0, 1], sizes = [8, 1], strides = [1, 1]} : vector<8x4xf32> to vector<8x1xf32>
    %c1_79 = arith.constant 1 : index
    %c0_80 = arith.constant 0 : index
    %c0_81 = arith.constant 0 : index
    %115 = vector.load %arg17[%c1_79, %c0_80, %c0_81] : memref<4x32x32xf32, #tpu.memory_space<vmem>>, vector<1x32x32xf32>
    %116 = vector.shape_cast %115 : vector<1x32x32xf32> to vector<32x32xf32>
    %cst_82 = arith.constant dense<0.000000e+00> : vector<8x32xf32>
    %117 = tpu.matmul %106, %116, %cst_82 {dimension_numbers = #tpu.dot_dimension_numbers<[1], [0], [0], [1], [0, 0, 1, 1], [], []>} : vector<8x32xf32>, vector<32x32xf32>, vector<8x32xf32> -> vector<8x32xf32>
    %118 = vector.broadcast %114 : vector<8x1xf32> to vector<8x32xf32>
    %119 = arith.mulf %118, %117 : vector<8x32xf32>
    %120 = arith.addf %113, %119 : vector<8x32xf32>
    %121 = vector.extract_strided_slice %54 {offsets = [0, 2], sizes = [8, 1], strides = [1, 1]} : vector<8x4xf32> to vector<8x1xf32>
    %c2_83 = arith.constant 2 : index
    %c0_84 = arith.constant 0 : index
    %c0_85 = arith.constant 0 : index
    %122 = vector.load %arg17[%c2_83, %c0_84, %c0_85] : memref<4x32x32xf32, #tpu.memory_space<vmem>>, vector<1x32x32xf32>
    %123 = vector.shape_cast %122 : vector<1x32x32xf32> to vector<32x32xf32>
    %cst_86 = arith.constant dense<0.000000e+00> : vector<8x32xf32>
    %124 = tpu.matmul %106, %123, %cst_86 {dimension_numbers = #tpu.dot_dimension_numbers<[1], [0], [0], [1], [0, 0, 1, 1], [], []>} : vector<8x32xf32>, vector<32x32xf32>, vector<8x32xf32> -> vector<8x32xf32>
    %125 = vector.broadcast %121 : vector<8x1xf32> to vector<8x32xf32>
    %126 = arith.mulf %125, %124 : vector<8x32xf32>
    %127 = arith.addf %120, %126 : vector<8x32xf32>
    %128 = vector.extract_strided_slice %54 {offsets = [0, 3], sizes = [8, 1], strides = [1, 1]} : vector<8x4xf32> to vector<8x1xf32>
    %c3_87 = arith.constant 3 : index
    %c0_88 = arith.constant 0 : index
    %c0_89 = arith.constant 0 : index
    %129 = vector.load %arg17[%c3_87, %c0_88, %c0_89] : memref<4x32x32xf32, #tpu.memory_space<vmem>>, vector<1x32x32xf32>
    %130 = vector.shape_cast %129 : vector<1x32x32xf32> to vector<32x32xf32>
    %cst_90 = arith.constant dense<0.000000e+00> : vector<8x32xf32>
    %131 = tpu.matmul %106, %130, %cst_90 {dimension_numbers = #tpu.dot_dimension_numbers<[1], [0], [0], [1], [0, 0, 1, 1], [], []>} : vector<8x32xf32>, vector<32x32xf32>, vector<8x32xf32> -> vector<8x32xf32>
    %132 = vector.broadcast %128 : vector<8x1xf32> to vector<8x32xf32>
    %133 = arith.mulf %132, %131 : vector<8x32xf32>
    %134 = arith.addf %127, %133 : vector<8x32xf32>
    %cst_91 = arith.constant 0.000000e+00 : f32
    %135 = vector.broadcast %cst_91 : f32 to vector<8x32xf32>
    %136 = arith.cmpf ogt, %134, %135 : vector<8x32xf32>
    %cst_92 = arith.constant 0.000000e+00 : f32
    %137 = vector.broadcast %cst_92 : f32 to vector<8x32xf32>
    %138 = arith.minimumf %134, %137 : vector<8x32xf32>
    %139 = math.exp %138 : vector<8x32xf32>
    %cst_93 = arith.constant 1.000000e+00 : f32
    %140 = vector.broadcast %cst_93 : f32 to vector<8x32xf32>
    %141 = arith.subf %139, %140 : vector<8x32xf32>
    %142 = arith.select %136, %134, %141 : vector<8x32xi1>, vector<8x32xf32>
    %143 = vector.extract_strided_slice %54 {offsets = [0, 0], sizes = [8, 1], strides = [1, 1]} : vector<8x4xf32> to vector<8x1xf32>
    %c0_94 = arith.constant 0 : index
    %c0_95 = arith.constant 0 : index
    %c0_96 = arith.constant 0 : index
    %144 = vector.load %arg18[%c0_94, %c0_95, %c0_96] : memref<4x32x16xf32, #tpu.memory_space<vmem>>, vector<1x32x16xf32>
    %145 = vector.shape_cast %144 : vector<1x32x16xf32> to vector<32x16xf32>
    %cst_97 = arith.constant dense<0.000000e+00> : vector<8x16xf32>
    %146 = tpu.matmul %142, %145, %cst_97 {dimension_numbers = #tpu.dot_dimension_numbers<[1], [0], [0], [1], [0, 0, 1, 1], [], []>} : vector<8x32xf32>, vector<32x16xf32>, vector<8x16xf32> -> vector<8x16xf32>
    %147 = vector.broadcast %143 : vector<8x1xf32> to vector<8x16xf32>
    %148 = arith.mulf %147, %146 : vector<8x16xf32>
    %149 = arith.addf %70, %148 : vector<8x16xf32>
    %150 = vector.extract_strided_slice %54 {offsets = [0, 1], sizes = [8, 1], strides = [1, 1]} : vector<8x4xf32> to vector<8x1xf32>
    %c1_98 = arith.constant 1 : index
    %c0_99 = arith.constant 0 : index
    %c0_100 = arith.constant 0 : index
    %151 = vector.load %arg18[%c1_98, %c0_99, %c0_100] : memref<4x32x16xf32, #tpu.memory_space<vmem>>, vector<1x32x16xf32>
    %152 = vector.shape_cast %151 : vector<1x32x16xf32> to vector<32x16xf32>
    %cst_101 = arith.constant dense<0.000000e+00> : vector<8x16xf32>
    %153 = tpu.matmul %142, %152, %cst_101 {dimension_numbers = #tpu.dot_dimension_numbers<[1], [0], [0], [1], [0, 0, 1, 1], [], []>} : vector<8x32xf32>, vector<32x16xf32>, vector<8x16xf32> -> vector<8x16xf32>
    %154 = vector.broadcast %150 : vector<8x1xf32> to vector<8x16xf32>
    %155 = arith.mulf %154, %153 : vector<8x16xf32>
    %156 = arith.addf %149, %155 : vector<8x16xf32>
    %157 = vector.extract_strided_slice %54 {offsets = [0, 2], sizes = [8, 1], strides = [1, 1]} : vector<8x4xf32> to vector<8x1xf32>
    %c2_102 = arith.constant 2 : index
    %c0_103 = arith.constant 0 : index
    %c0_104 = arith.constant 0 : index
    %158 = vector.load %arg18[%c2_102, %c0_103, %c0_104] : memref<4x32x16xf32, #tpu.memory_space<vmem>>, vector<1x32x16xf32>
    %159 = vector.shape_cast %158 : vector<1x32x16xf32> to vector<32x16xf32>
    %cst_105 = arith.constant dense<0.000000e+00> : vector<8x16xf32>
    %160 = tpu.matmul %142, %159, %cst_105 {dimension_numbers = #tpu.dot_dimension_numbers<[1], [0], [0], [1], [0, 0, 1, 1], [], []>} : vector<8x32xf32>, vector<32x16xf32>, vector<8x16xf32> -> vector<8x16xf32>
    %161 = vector.broadcast %157 : vector<8x1xf32> to vector<8x16xf32>
    %162 = arith.mulf %161, %160 : vector<8x16xf32>
    %163 = arith.addf %156, %162 : vector<8x16xf32>
    %164 = vector.extract_strided_slice %54 {offsets = [0, 3], sizes = [8, 1], strides = [1, 1]} : vector<8x4xf32> to vector<8x1xf32>
    %c3_106 = arith.constant 3 : index
    %c0_107 = arith.constant 0 : index
    %c0_108 = arith.constant 0 : index
    %165 = vector.load %arg18[%c3_106, %c0_107, %c0_108] : memref<4x32x16xf32, #tpu.memory_space<vmem>>, vector<1x32x16xf32>
    %166 = vector.shape_cast %165 : vector<1x32x16xf32> to vector<32x16xf32>
    %cst_109 = arith.constant dense<0.000000e+00> : vector<8x16xf32>
    %167 = tpu.matmul %142, %166, %cst_109 {dimension_numbers = #tpu.dot_dimension_numbers<[1], [0], [0], [1], [0, 0, 1, 1], [], []>} : vector<8x32xf32>, vector<32x16xf32>, vector<8x16xf32> -> vector<8x16xf32>
    %168 = vector.broadcast %164 : vector<8x1xf32> to vector<8x16xf32>
    %169 = arith.mulf %168, %167 : vector<8x16xf32>
    %170 = arith.addf %163, %169 : vector<8x16xf32>
    %c0_110 = arith.constant 0 : index
    %c0_111 = arith.constant 0 : index
    %171 = vector.load %arg23[%c0_110, %c0_111] : memref<1x16xf32, #tpu.memory_space<vmem>>, vector<1x16xf32>
    %172 = vector.broadcast %171 : vector<1x16xf32> to vector<8x16xf32>
    %173 = arith.mulf %170, %172 : vector<8x16xf32>
    %c0_112 = arith.constant 0 : index
    %c0_113 = arith.constant 0 : index
    %174 = vector.load %arg22[%c0_112, %c0_113] : memref<1x16xf32, #tpu.memory_space<vmem>>, vector<1x16xf32>
    %175 = vector.broadcast %174 : vector<1x16xf32> to vector<8x16xf32>
    %176 = arith.addf %173, %175 : vector<8x16xf32>
    %c0_114 = arith.constant 0 : index
    %c0_115 = arith.constant 0 : index
    %177 = vector.load %arg24[%c0_114, %c0_115] : memref<8x16xf32, #tpu.memory_space<vmem>>, vector<8x16xf32>
    tpu.vector_store %arg24[%c0_114, %c0_115], %176 {strides = array<i32>} : memref<8x16xf32, #tpu.memory_space<vmem>>, vector<8x16xf32>,
    return
  }
  func.func @transform_0(%arg0: i32) -> (i32, i32) {
    %c0_i32 = arith.constant 0 : i32
    %c0_i32_0 = arith.constant 0 : i32
    return %arg0, %c0_i32 : i32, i32
  }
  func.func @transform_1(%arg0: i32) -> (i32, i32) {
    %c0_i32 = arith.constant 0 : i32
    %c0_i32_0 = arith.constant 0 : i32
    return %arg0, %c0_i32 : i32, i32
  }
  func.func @transform_2(%arg0: i32) -> (i32, i32) {
    %c0_i32 = arith.constant 0 : i32
    %c0_i32_0 = arith.constant 0 : i32
    %c0_i32_1 = arith.constant 0 : i32
    return %c0_i32, %c0_i32_0 : i32, i32
  }
  func.func @transform_3(%arg0: i32) -> (i32, i32) {
    %c0_i32 = arith.constant 0 : i32
    %c0_i32_0 = arith.constant 0 : i32
    %c0_i32_1 = arith.constant 0 : i32
    return %c0_i32, %c0_i32_0 : i32, i32
  }
  func.func @transform_4(%arg0: i32) -> (i32, i32) {
    %c0_i32 = arith.constant 0 : i32
    %c0_i32_0 = arith.constant 0 : i32
    %c0_i32_1 = arith.constant 0 : i32
    return %c0_i32, %c0_i32_0 : i32, i32
  }
  func.func @transform_5(%arg0: i32) -> (i32, i32) {
    %c0_i32 = arith.constant 0 : i32
    %c0_i32_0 = arith.constant 0 : i32
    %c0_i32_1 = arith.constant 0 : i32
    return %c0_i32, %c0_i32_0 : i32, i32
  }
  func.func @transform_6(%arg0: i32) -> (i32, i32) {
    %c0_i32 = arith.constant 0 : i32
    %c0_i32_0 = arith.constant 0 : i32
    %c0_i32_1 = arith.constant 0 : i32
    return %c0_i32, %c0_i32_0 : i32, i32
  }
  func.func @transform_7(%arg0: i32) -> (i32, i32) {
    %c0_i32 = arith.constant 0 : i32
    %c0_i32_0 = arith.constant 0 : i32
    %c0_i32_1 = arith.constant 0 : i32
    return %c0_i32, %c0_i32_0 : i32, i32
  }
  func.func @transform_8(%arg0: i32) -> (i32, i32) {
    %c0_i32 = arith.constant 0 : i32
    %c0_i32_0 = arith.constant 0 : i32
    %c0_i32_1 = arith.constant 0 : i32
    return %c0_i32, %c0_i32_0 : i32, i32
  }
  func.func @transform_9(%arg0: i32) -> (i32, i32) {
    %c0_i32 = arith.constant 0 : i32
    %c0_i32_0 = arith.constant 0 : i32
    %c0_i32_1 = arith.constant 0 : i32
    return %c0_i32, %c0_i32_0 : i32, i32
  }
  func.func @transform_10(%arg0: i32) -> (i32, i32) {
    %c0_i32 = arith.constant 0 : i32
    %c0_i32_0 = arith.constant 0 : i32
    %c0_i32_1 = arith.constant 0 : i32
    return %c0_i32, %c0_i32_0 : i32, i32
  }
  func.func @transform_11(%arg0: i32) -> (i32, i32) {
    %c0_i32 = arith.constant 0 : i32
    %c0_i32_0 = arith.constant 0 : i32
    %c0_i32_1 = arith.constant 0 : i32
    return %c0_i32, %c0_i32_0 : i32, i32
  }
  func.func @transform_12(%arg0: i32) -> (i32, i32) {
    %c0_i32 = arith.constant 0 : i32
    %c0_i32_0 = arith.constant 0 : i32
    %c0_i32_1 = arith.constant 0 : i32
    return %c0_i32, %c0_i32_0 : i32, i32
  }
  func.func @transform_13(%arg0: i32) -> (i32, i32) {
    %c0_i32 = arith.constant 0 : i32
    %c0_i32_0 = arith.constant 0 : i32
    %c0_i32_1 = arith.constant 0 : i32
    return %c0_i32, %c0_i32_0 : i32, i32
  }
  func.func @transform_14(%arg0: i32) -> (i32, i32) {
    %c0_i32 = arith.constant 0 : i32
    %c0_i32_0 = arith.constant 0 : i32
    %c0_i32_1 = arith.constant 0 : i32
    return %c0_i32, %c0_i32_0 : i32, i32
  }
  func.func @transform_15(%arg0: i32) -> (i32, i32, i32) {
    %c0_i32 = arith.constant 0 : i32
    %c0_i32_0 = arith.constant 0 : i32
    %c0_i32_1 = arith.constant 0 : i32
    %c0_i32_2 = arith.constant 0 : i32
    return %c0_i32, %c0_i32_0, %c0_i32_1 : i32, i32, i32
  }
  func.func @transform_16(%arg0: i32) -> (i32, i32, i32) {
    %c0_i32 = arith.constant 0 : i32
    %c0_i32_0 = arith.constant 0 : i32
    %c0_i32_1 = arith.constant 0 : i32
    %c0_i32_2 = arith.constant 0 : i32
    return %c0_i32, %c0_i32_0, %c0_i32_1 : i32, i32, i32
  }
  func.func @transform_17(%arg0: i32) -> (i32, i32, i32) {
    %c0_i32 = arith.constant 0 : i32
    %c0_i32_0 = arith.constant 0 : i32
    %c0_i32_1 = arith.constant 0 : i32
    %c0_i32_2 = arith.constant 0 : i32
    return %c0_i32, %c0_i32_0, %c0_i32_1 : i32, i32, i32
  }
  func.func @transform_18(%arg0: i32) -> (i32, i32) {
    %c0_i32 = arith.constant 0 : i32
    %c0_i32_0 = arith.constant 0 : i32
    %c0_i32_1 = arith.constant 0 : i32
    return %c0_i32, %c0_i32_0 : i32, i32
  }
  func.func @transform_19(%arg0: i32) -> (i32, i32) {
    %c0_i32 = arith.constant 0 : i32
    %c0_i32_0 = arith.constant 0 : i32
    %c0_i32_1 = arith.constant 0 : i32
    return %c0_i32, %c0_i32_0 : i32, i32
  }
  func.func @transform_20(%arg0: i32) -> (i32, i32) {
    %c0_i32 = arith.constant 0 : i32
    %c0_i32_0 = arith.constant 0 : i32
    %c0_i32_1 = arith.constant 0 : i32
    return %c0_i32, %c0_i32_0 : i32, i32
  }
  func.func @transform_21(%arg0: i32) -> (i32, i32) {
    %c0_i32 = arith.constant 0 : i32
    %c0_i32_0 = arith.constant 0 : i32
    %c0_i32_1 = arith.constant 0 : i32
    return %c0_i32, %c0_i32_0 : i32, i32
  }
  func.func @transform_22(%arg0: i32) -> (i32, i32) {
    %c0_i32 = arith.constant 0 : i32
    %c0_i32_0 = arith.constant 0 : i32
    %c0_i32_1 = arith.constant 0 : i32
    return %c0_i32, %c0_i32_0 : i32, i32
  }
  func.func @transform_23(%arg0: i32) -> (i32, i32) {
    %c0_i32 = arith.constant 0 : i32
    %c0_i32_0 = arith.constant 0 : i32
    return %arg0, %c0_i32 : i32, i32
  }
  func.func @transform_24(%arg0: i32) -> (i32, i32) {
    %c0_i32 = arith.constant 0 : i32
    %c0_i32_0 = arith.constant 0 : i32
    return %arg0, %c0_i32 : i32, i32
  }
  func.func @transform_25(%arg0: i32) -> (i32, i32) {
    %c0_i32 = arith.constant 0 : i32
    %c0_i32_0 = arith.constant 0 : i32
    return %arg0, %c0_i32 : i32, i32
  }
  func.func @transform_26(%arg0: i32) -> (i32, i32) {
    %c0_i32 = arith.constant 0 : i32
    %c0_i32_0 = arith.constant 0 : i32
    return %arg0, %c0_i32 : i32, i32
  }
  func.func @transform_27(%arg0: i32) -> (i32, i32) {
    %c0_i32 = arith.constant 0 : i32
    %c0_i32_0 = arith.constant 0 : i32
    return %arg0, %c0_i32 : i32, i32
  }
}

</mosaic_0001>

<llo_original>
// kernel: mann_forward.1
$region0: #{mann_forward.1}
  #allocation0 [shape = 'u32[]', space=smem, size = 0x4, offset = 0x4, fixed_abs, tag = 'smem constant byte address 0x4 - core index']
  #allocation1 [shape = 'u32[144,128]{1,0:T(1,128)}', space=vmem, size = 0x12000, scoped, tag = 'internal scratch']
  %s0 = inlined_call_operand.vmem [shape: f32[16,16], index: 0, kind: input, shape index: {}]
  %s1 = inlined_call_operand.vmem [shape: f32[16,48], index: 1, kind: input, shape index: {}]
  %s2 = inlined_call_operand.vmem [shape: f32[1,16], index: 2, kind: input, shape index: {}]
  %s3 = inlined_call_operand.vmem [shape: f32[1,16], index: 3, kind: input, shape index: {}]
  %s4 = inlined_call_operand.vmem [shape: f32[1,48], index: 4, kind: input, shape index: {}]
  %s5 = inlined_call_operand.vmem [shape: f32[1,48], index: 5, kind: input, shape index: {}]
  %s6 = inlined_call_operand.vmem [shape: f32[16,32], index: 6, kind: input, shape index: {}]
  %s7 = inlined_call_operand.vmem [shape: f32[1,32], index: 7, kind: input, shape index: {}]
  %s8 = inlined_call_operand.vmem [shape: f32[32,32], index: 8, kind: input, shape index: {}]
  %s9 = inlined_call_operand.vmem [shape: f32[1,32], index: 9, kind: input, shape index: {}]
  %s10 = inlined_call_operand.vmem [shape: f32[32,4], index: 10, kind: input, shape index: {}]
  %s11 = inlined_call_operand.vmem [shape: f32[1,4], index: 11, kind: input, shape index: {}]
  %s12 = inlined_call_operand.vmem [shape: f32[4,1536], index: 12, kind: input, shape index: {}]
  %s13 = inlined_call_operand.vmem [shape: f32[4,1024], index: 13, kind: input, shape index: {}]
  %s14 = inlined_call_operand.vmem [shape: f32[4,512], index: 14, kind: input, shape index: {}]
  %s15 = inlined_call_operand.vmem [shape: f32[4,48,32], index: 15, kind: input, shape index: {}]
  %s16 = inlined_call_operand.vmem [shape: f32[4,32,32], index: 16, kind: input, shape index: {}]
  %s17 = inlined_call_operand.vmem [shape: f32[4,32,16], index: 17, kind: input, shape index: {}]
  %s18 = inlined_call_operand.vmem [shape: f32[4,32], index: 18, kind: input, shape index: {}]
  %s19 = inlined_call_operand.vmem [shape: f32[4,32], index: 19, kind: input, shape index: {}]
  %s20 = inlined_call_operand.vmem [shape: f32[4,16], index: 20, kind: input, shape index: {}]
  %s21 = inlined_call_operand.vmem [shape: f32[1,16], index: 21, kind: input, shape index: {}]
  %s22 = inlined_call_operand.vmem [shape: f32[1,16], index: 22, kind: input, shape index: {}]
  %s23 = inlined_call_operand.hbm [shape: f32[16,16], index: 23, kind: output, shape index: {0}]
  %s24 = inlined_call_operand.vmem [shape: f32[16,4], index: 24, kind: output, shape index: {1}]
  %s25 = inlined_call_operand.vmem [shape: f32[16,1536], index: 25, kind: output, shape index: {2}]
  %s26 = inlined_call_operand.vmem [shape: f32[16,1024], index: 26, kind: output, shape index: {3}]
  %s27 = inlined_call_operand.vmem [shape: f32[16,512], index: 27, kind: output, shape index: {4}]
  %28 = xla_tuple %s23, %s24, %s25, %s26, %s27
  %s29 = sld [smem:[#allocation0]]
  $region157: #{mann_forward.1} parent=0
    _
  %s31 = ssub.s32 1, %s29
  %s32 = scalar_select 0, %s31, %s29
  $region1: #{mann_forward.1} parent=0
    #allocation2 [shape = 'u8[8192]{0}', space=vmem, size = 0x2000, scoped, tag = 'output window, operand 0']
    #allocation3 [shape = 's32[2]{0}', space=sflag, size = 0x8, scoped, tag = 'scoped memory for mann_forward.1']
    %33 = vsyncpa [#allocation3], 0
    %s34 = scalar_lea.sflag [#allocation3], 1
    %35 = vsyncpa %s34, 0
    loop: start=0, step=1, limit=4
    $region2: #{mann_forward.1} parent=1 // loop_pre_header
      _
    $region3: #{mann_forward.1} parent=1 // loop_header
      %s37 = sphi 0, %s41
      %p38 = scmp.ge.s32.totalorder %s37, 4
      %s47 = sphi 0, %s49
      %s50 = sphi 0, %s47
      %s51 = sphi 0, %s50
      %s67 = sphi 0, %s51
      %s73 = sphi 0, %s75
      %s76 = sphi 0, %s73
      %s77 = sphi 0, %s76
      %s93 = sphi 0, %s77
      %s97 = sphi 0, %s97
      %s99 = sphi 0, %s97
      %s100 = sphi 0, %s99
      %s114 = sphi 0, %s100
      %s118 = sphi 0, %s118
      %s120 = sphi 0, %s118
      %s121 = sphi 0, %s120
      %s135 = sphi 0, %s121
      %s139 = sphi 0, %s139
      %s141 = sphi 0, %s139
      %s142 = sphi 0, %s141
      %s156 = sphi 0, %s142
      %s160 = sphi 0, %s160
      %s162 = sphi 0, %s160
      %s163 = sphi 0, %s162
      %s177 = sphi 0, %s163
      %s181 = sphi 0, %s181
      %s183 = sphi 0, %s181
      %s184 = sphi 0, %s183
      %s198 = sphi 0, %s184
      %s202 = sphi 0, %s202
      %s204 = sphi 0, %s202
      %s205 = sphi 0, %s204
      %s219 = sphi 0, %s205
      %s223 = sphi 0, %s223
      %s225 = sphi 0, %s223
      %s226 = sphi 0, %s225
      %s240 = sphi 0, %s226
      %s244 = sphi 0, %s244
      %s246 = sphi 0, %s244
      %s247 = sphi 0, %s246
      %s261 = sphi 0, %s247
      %s265 = sphi 0, %s265
      %s267 = sphi 0, %s265
      %s268 = sphi 0, %s267
      %s282 = sphi 0, %s268
      %s286 = sphi 0, %s286
      %s288 = sphi 0, %s286
      %s289 = sphi 0, %s288
      %s303 = sphi 0, %s289
      %s307 = sphi 0, %s307
      %s309 = sphi 0, %s307
      %s310 = sphi 0, %s309
      %s324 = sphi 0, %s310
      %s328 = sphi 0, %s328
      %s330 = sphi 0, %s328
      %s331 = sphi 0, %s330
      %s345 = sphi 0, %s331
      %s349 = sphi 0, %s349
      %s351 = sphi 0, %s349
      %s352 = sphi 0, %s351
      %s366 = sphi 0, %s352
      %s370 = sphi 0, %s370
      %s372 = sphi 0, %s370
      %s373 = sphi 0, %s372
      %s387 = sphi 0, %s373
      %s391 = sphi 0, %s391
      %s393 = sphi 0, %s391
      %s394 = sphi 0, %s393
      %s408 = sphi 0, %s394
      %s412 = sphi 0, %s412
      %s414 = sphi 0, %s412
      %s415 = sphi 0, %s414
      %s429 = sphi 0, %s415
      %s433 = sphi 0, %s433
      %s435 = sphi 0, %s433
      %s436 = sphi 0, %s435
      %s450 = sphi 0, %s436
      %s454 = sphi 0, %s454
      %s456 = sphi 0, %s454
      %s457 = sphi 0, %s456
      %s471 = sphi 0, %s457
      %s475 = sphi 0, %s475
      %s477 = sphi 0, %s475
      %s478 = sphi 0, %s477
      %s492 = sphi 0, %s478
      %s496 = sphi 0, %s496
      %s498 = sphi 0, %s496
      %s499 = sphi 0, %s498
      %s513 = sphi 0, %s499
      %s517 = sphi 0, %s517
      %s519 = sphi 0, %s517
      %s520 = sphi 0, %s519
      %s534 = sphi 0, %s520
      %s540 = sphi 0, %s542
      %s543 = sphi 0, %s540
      %s544 = sphi 0, %s543
      %s560 = sphi 0, %s544
      %s566 = sphi 0, %s568
      %s569 = sphi 0, %s566
      %s570 = sphi 0, %s569
      %s586 = sphi 0, %s570
      %s592 = sphi 0, %s594
      %s595 = sphi 0, %s592
      %s596 = sphi 0, %s595
      %s612 = sphi 0, %s596
      %s618 = sphi 0, %s620
      %s621 = sphi 0, %s618
      %s622 = sphi 0, %s621
      %s638 = sphi 0, %s622
      %s644 = sphi 0, %s646
      %s647 = sphi 0, %s644
      %s648 = sphi 0, %s647
      %s664 = sphi 0, %s648
    $region4: #{mann_forward.1} parent=1 // loop_header_branch
      %40 = sbr.rel (%p38) target = $region8
    $region5: #{mann_forward.1} parent=1 // loop_body
      %s42 = ssub.s32 %s37, 1
      %s43 = ssub.s32 %s37, 2
      %s44 = sadd.s32 %s37, 1
      %s45 = ssub.s32 %s37, %s44
      %p46 = scmp.eq.s32.totalorder %s45, 0
      %s48 = sadd.s32 %s47, 1
      %s49 = scalar_select %p46, %s47, %s48
      %p52 = pneg %p46
      %p53 = scmp.eq.s32.totalorder %s37, 1
      %p54 = por %p52, %p53
      %p55 = scmp.ne.s32.totalorder %s47, %s50
      %p56 = scmp.eq.s32.totalorder %s37, 0
      %p57 = por %p55, %p56
      %p58 = scmp.ne.s32.totalorder %s47, %s50
      %p59 = scmp.eq.s32.totalorder %s42, 1
      %p60 = por %p58, %p59
      %p61 = scmp.ne.s32.totalorder %s50, %s51
      %p62 = scmp.eq.s32.totalorder %s42, 0
      %p63 = por %p61, %p62
      %p64 = scmp.ne.s32.totalorder %s50, %s51
      %p65 = scmp.eq.s32.totalorder %s43, 1
      %p66 = por %p64, %p65
      %p68 = scmp.ne.s32.totalorder %s51, %s67
      %p69 = scmp.eq.s32.totalorder %s43, 0
      %p70 = por %p68, %p69
      %s71 = ssub.s32 %s37, %s44
      %p72 = scmp.eq.s32.totalorder %s71, 0
      %s74 = sadd.s32 %s73, 1
      %s75 = scalar_select %p72, %s73, %s74
      %p78 = pneg %p72
      %p79 = scmp.eq.s32.totalorder %s37, 1
      %p80 = por %p78, %p79
      %p81 = scmp.ne.s32.totalorder %s73, %s76
      %p82 = scmp.eq.s32.totalorder %s37, 0
      %p83 = por %p81, %p82
      %p84 = scmp.ne.s32.totalorder %s73, %s76
      %p85 = scmp.eq.s32.totalorder %s42, 1
      %p86 = por %p84, %p85
      %p87 = scmp.ne.s32.totalorder %s76, %s77
      %p88 = scmp.eq.s32.totalorder %s42, 0
      %p89 = por %p87, %p88
      %p90 = scmp.ne.s32.totalorder %s76, %s77
      %p91 = scmp.eq.s32.totalorder %s43, 1
      %p92 = por %p90, %p91
      %p94 = scmp.ne.s32.totalorder %s77, %s93
      %p95 = scmp.eq.s32.totalorder %s43, 0
      %p96 = por %p94, %p95
      %s98 = sadd.s32 %s97, 1
      %p101 = scmp.eq.s32.totalorder %s37, 1
      %p102 = scmp.ne.s32.totalorder %s97, %s99
      %p103 = scmp.eq.s32.totalorder %s37, 0
      %p104 = por %p102, %p103
      %p105 = scmp.ne.s32.totalorder %s97, %s99
      %p106 = scmp.eq.s32.totalorder %s42, 1
      %p107 = por %p105, %p106
      %p108 = scmp.ne.s32.totalorder %s99, %s100
      %p109 = scmp.eq.s32.totalorder %s42, 0
      %p110 = por %p108, %p109
      %p111 = scmp.ne.s32.totalorder %s99, %s100
      %p112 = scmp.eq.s32.totalorder %s43, 1
      %p113 = por %p111, %p112
      %p115 = scmp.ne.s32.totalorder %s100, %s114
      %p116 = scmp.eq.s32.totalorder %s43, 0
      %p117 = por %p115, %p116
      %s119 = sadd.s32 %s118, 1
      %p122 = scmp.eq.s32.totalorder %s37, 1
      %p123 = scmp.ne.s32.totalorder %s118, %s120
      %p124 = scmp.eq.s32.totalorder %s37, 0
      %p125 = por %p123, %p124
      %p126 = scmp.ne.s32.totalorder %s118, %s120
      %p127 = scmp.eq.s32.totalorder %s42, 1
      %p128 = por %p126, %p127
      %p129 = scmp.ne.s32.totalorder %s120, %s121
      %p130 = scmp.eq.s32.totalorder %s42, 0
      %p131 = por %p129, %p130
      %p132 = scmp.ne.s32.totalorder %s120, %s121
      %p133 = scmp.eq.s32.totalorder %s43, 1
      %p134 = por %p132, %p133
      %p136 = scmp.ne.s32.totalorder %s121, %s135
      %p137 = scmp.eq.s32.totalorder %s43, 0
      %p138 = por %p136, %p137
      %s140 = sadd.s32 %s139, 1
      %p143 = scmp.eq.s32.totalorder %s37, 1
      %p144 = scmp.ne.s32.totalorder %s139, %s141
      %p145 = scmp.eq.s32.totalorder %s37, 0
      %p146 = por %p144, %p145
      %p147 = scmp.ne.s32.totalorder %s139, %s141
      %p148 = scmp.eq.s32.totalorder %s42, 1
      %p149 = por %p147, %p148
      %p150 = scmp.ne.s32.totalorder %s141, %s142
      %p151 = scmp.eq.s32.totalorder %s42, 0
      %p152 = por %p150, %p151
      %p153 = scmp.ne.s32.totalorder %s141, %s142
      %p154 = scmp.eq.s32.totalorder %s43, 1
      %p155 = por %p153, %p154
      %p157 = scmp.ne.s32.totalorder %s142, %s156
      %p158 = scmp.eq.s32.totalorder %s43, 0
      %p159 = por %p157, %p158
      %s161 = sadd.s32 %s160, 1
      %p164 = scmp.eq.s32.totalorder %s37, 1
      %p165 = scmp.ne.s32.totalorder %s160, %s162
      %p166 = scmp.eq.s32.totalorder %s37, 0
      %p167 = por %p165, %p166
      %p168 = scmp.ne.s32.totalorder %s160, %s162
      %p169 = scmp.eq.s32.totalorder %s42, 1
      %p170 = por %p168, %p169
      %p171 = scmp.ne.s32.totalorder %s162, %s163
      %p172 = scmp.eq.s32.totalorder %s42, 0
      %p173 = por %p171, %p172
      %p174 = scmp.ne.s32.totalorder %s162, %s163
      %p175 = scmp.eq.s32.totalorder %s43, 1
      %p176 = por %p174, %p175
      %p178 = scmp.ne.s32.totalorder %s163, %s177
      %p179 = scmp.eq.s32.totalorder %s43, 0
      %p180 = por %p178, %p179
      %s182 = sadd.s32 %s181, 1
      %p185 = scmp.eq.s32.totalorder %s37, 1
      %p186 = scmp.ne.s32.totalorder %s181, %s183
      %p187 = scmp.eq.s32.totalorder %s37, 0
      %p188 = por %p186, %p187
      %p189 = scmp.ne.s32.totalorder %s181, %s183
      %p190 = scmp.eq.s32.totalorder %s42, 1
      %p191 = por %p189, %p190
      %p192 = scmp.ne.s32.totalorder %s183, %s184
      %p193 = scmp.eq.s32.totalorder %s42, 0
      %p194 = por %p192, %p193
      %p195 = scmp.ne.s32.totalorder %s183, %s184
      %p196 = scmp.eq.s32.totalorder %s43, 1
      %p197 = por %p195, %p196
      %p199 = scmp.ne.s32.totalorder %s184, %s198
      %p200 = scmp.eq.s32.totalorder %s43, 0
      %p201 = por %p199, %p200
      %s203 = sadd.s32 %s202, 1
      %p206 = scmp.eq.s32.totalorder %s37, 1
      %p207 = scmp.ne.s32.totalorder %s202, %s204
      %p208 = scmp.eq.s32.totalorder %s37, 0
      %p209 = por %p207, %p208
      %p210 = scmp.ne.s32.totalorder %s202, %s204
      %p211 = scmp.eq.s32.totalorder %s42, 1
      %p212 = por %p210, %p211
      %p213 = scmp.ne.s32.totalorder %s204, %s205
      %p214 = scmp.eq.s32.totalorder %s42, 0
      %p215 = por %p213, %p214
      %p216 = scmp.ne.s32.totalorder %s204, %s205
      %p217 = scmp.eq.s32.totalorder %s43, 1
      %p218 = por %p216, %p217
      %p220 = scmp.ne.s32.totalorder %s205, %s219
      %p221 = scmp.eq.s32.totalorder %s43, 0
      %p222 = por %p220, %p221
      %s224 = sadd.s32 %s223, 1
      %p227 = scmp.eq.s32.totalorder %s37, 1
      %p228 = scmp.ne.s32.totalorder %s223, %s225
      %p229 = scmp.eq.s32.totalorder %s37, 0
      %p230 = por %p228, %p229
      %p231 = scmp.ne.s32.totalorder %s223, %s225
      %p232 = scmp.eq.s32.totalorder %s42, 1
      %p233 = por %p231, %p232
      %p234 = scmp.ne.s32.totalorder %s225, %s226
      %p235 = scmp.eq.s32.totalorder %s42, 0
      %p236 = por %p234, %p235
      %p237 = scmp.ne.s32.totalorder %s225, %s226
      %p238 = scmp.eq.s32.totalorder %s43, 1
      %p239 = por %p237, %p238
      %p241 = scmp.ne.s32.totalorder %s226, %s240
      %p242 = scmp.eq.s32.totalorder %s43, 0
      %p243 = por %p241, %p242
      %s245 = sadd.s32 %s244, 1
      %p248 = scmp.eq.s32.totalorder %s37, 1
      %p249 = scmp.ne.s32.totalorder %s244, %s246
      %p250 = scmp.eq.s32.totalorder %s37, 0
      %p251 = por %p249, %p250
      %p252 = scmp.ne.s32.totalorder %s244, %s246
      %p253 = scmp.eq.s32.totalorder %s42, 1
      %p254 = por %p252, %p253
      %p255 = scmp.ne.s32.totalorder %s246, %s247
      %p256 = scmp.eq.s32.totalorder %s42, 0
      %p257 = por %p255, %p256
      %p258 = scmp.ne.s32.totalorder %s246, %s247
      %p259 = scmp.eq.s32.totalorder %s43, 1
      %p260 = por %p258, %p259
      %p262 = scmp.ne.s32.totalorder %s247, %s261
      %p263 = scmp.eq.s32.totalorder %s43, 0
      %p264 = por %p262, %p263
      %s266 = sadd.s32 %s265, 1
      %p269 = scmp.eq.s32.totalorder %s37, 1
      %p270 = scmp.ne.s32.totalorder %s265, %s267
      %p271 = scmp.eq.s32.totalorder %s37, 0
      %p272 = por %p270, %p271
      %p273 = scmp.ne.s32.totalorder %s265, %s267
      %p274 = scmp.eq.s32.totalorder %s42, 1
      %p275 = por %p273, %p274
      %p276 = scmp.ne.s32.totalorder %s267, %s268
      %p277 = scmp.eq.s32.totalorder %s42, 0
      %p278 = por %p276, %p277
      %p279 = scmp.ne.s32.totalorder %s267, %s268
      %p280 = scmp.eq.s32.totalorder %s43, 1
      %p281 = por %p279, %p280
      %p283 = scmp.ne.s32.totalorder %s268, %s282
      %p284 = scmp.eq.s32.totalorder %s43, 0
      %p285 = por %p283, %p284
      %s287 = sadd.s32 %s286, 1
      %p290 = scmp.eq.s32.totalorder %s37, 1
      %p291 = scmp.ne.s32.totalorder %s286, %s288
      %p292 = scmp.eq.s32.totalorder %s37, 0
      %p293 = por %p291, %p292
      %p294 = scmp.ne.s32.totalorder %s286, %s288
      %p295 = scmp.eq.s32.totalorder %s42, 1
      %p296 = por %p294, %p295
      %p297 = scmp.ne.s32.totalorder %s288, %s289
      %p298 = scmp.eq.s32.totalorder %s42, 0
      %p299 = por %p297, %p298
      %p300 = scmp.ne.s32.totalorder %s288, %s289
      %p301 = scmp.eq.s32.totalorder %s43, 1
      %p302 = por %p300, %p301
      %p304 = scmp.ne.s32.totalorder %s289, %s303
      %p305 = scmp.eq.s32.totalorder %s43, 0
      %p306 = por %p304, %p305
      %s308 = sadd.s32 %s307, 1
      %p311 = scmp.eq.s32.totalorder %s37, 1
      %p312 = scmp.ne.s32.totalorder %s307, %s309
      %p313 = scmp.eq.s32.totalorder %s37, 0
      %p314 = por %p312, %p313
      %p315 = scmp.ne.s32.totalorder %s307, %s309
      %p316 = scmp.eq.s32.totalorder %s42, 1
      %p317 = por %p315, %p316
      %p318 = scmp.ne.s32.totalorder %s309, %s310
      %p319 = scmp.eq.s32.totalorder %s42, 0
      %p320 = por %p318, %p319
      %p321 = scmp.ne.s32.totalorder %s309, %s310
      %p322 = scmp.eq.s32.totalorder %s43, 1
      %p323 = por %p321, %p322
      %p325 = scmp.ne.s32.totalorder %s310, %s324
      %p326 = scmp.eq.s32.totalorder %s43, 0
      %p327 = por %p325, %p326
      %s329 = sadd.s32 %s328, 1
      %p332 = scmp.eq.s32.totalorder %s37, 1
      %p333 = scmp.ne.s32.totalorder %s328, %s330
      %p334 = scmp.eq.s32.totalorder %s37, 0
      %p335 = por %p333, %p334
      %p336 = scmp.ne.s32.totalorder %s328, %s330
      %p337 = scmp.eq.s32.totalorder %s42, 1
      %p338 = por %p336, %p337
      %p339 = scmp.ne.s32.totalorder %s330, %s331
      %p340 = scmp.eq.s32.totalorder %s42, 0
      %p341 = por %p339, %p340
      %p342 = scmp.ne.s32.totalorder %s330, %s331
      %p343 = scmp.eq.s32.totalorder %s43, 1
      %p344 = por %p342, %p343
      %p346 = scmp.ne.s32.totalorder %s331, %s345
      %p347 = scmp.eq.s32.totalorder %s43, 0
      %p348 = por %p346, %p347
      %s350 = sadd.s32 %s349, 1
      %p353 = scmp.eq.s32.totalorder %s37, 1
      %p354 = scmp.ne.s32.totalorder %s349, %s351
      %p355 = scmp.eq.s32.totalorder %s37, 0
      %p356 = por %p354, %p355
      %p357 = scmp.ne.s32.totalorder %s349, %s351
      %p358 = scmp.eq.s32.totalorder %s42, 1
      %p359 = por %p357, %p358
      %p360 = scmp.ne.s32.totalorder %s351, %s352
      %p361 = scmp.eq.s32.totalorder %s42, 0
      %p362 = por %p360, %p361
      %p363 = scmp.ne.s32.totalorder %s351, %s352
      %p364 = scmp.eq.s32.totalorder %s43, 1
      %p365 = por %p363, %p364
      %p367 = scmp.ne.s32.totalorder %s352, %s366
      %p368 = scmp.eq.s32.totalorder %s43, 0
      %p369 = por %p367, %p368
      %s371 = sadd.s32 %s370, 1
      %p374 = scmp.eq.s32.totalorder %s37, 1
      %p375 = scmp.ne.s32.totalorder %s370, %s372
      %p376 = scmp.eq.s32.totalorder %s37, 0
      %p377 = por %p375, %p376
      %p378 = scmp.ne.s32.totalorder %s370, %s372
      %p379 = scmp.eq.s32.totalorder %s42, 1
      %p380 = por %p378, %p379
      %p381 = scmp.ne.s32.totalorder %s372, %s373
      %p382 = scmp.eq.s32.totalorder %s42, 0
      %p383 = por %p381, %p382
      %p384 = scmp.ne.s32.totalorder %s372, %s373
      %p385 = scmp.eq.s32.totalorder %s43, 1
      %p386 = por %p384, %p385
      %p388 = scmp.ne.s32.totalorder %s373, %s387
      %p389 = scmp.eq.s32.totalorder %s43, 0
      %p390 = por %p388, %p389
      %s392 = sadd.s32 %s391, 1
      %p395 = scmp.eq.s32.totalorder %s37, 1
      %p396 = scmp.ne.s32.totalorder %s391, %s393
      %p397 = scmp.eq.s32.totalorder %s37, 0
      %p398 = por %p396, %p397
      %p399 = scmp.ne.s32.totalorder %s391, %s393
      %p400 = scmp.eq.s32.totalorder %s42, 1
      %p401 = por %p399, %p400
      %p402 = scmp.ne.s32.totalorder %s393, %s394
      %p403 = scmp.eq.s32.totalorder %s42, 0
      %p404 = por %p402, %p403
      %p405 = scmp.ne.s32.totalorder %s393, %s394
      %p406 = scmp.eq.s32.totalorder %s43, 1
      %p407 = por %p405, %p406
      %p409 = scmp.ne.s32.totalorder %s394, %s408
      %p410 = scmp.eq.s32.totalorder %s43, 0
      %p411 = por %p409, %p410
      %s413 = sadd.s32 %s412, 1
      %p416 = scmp.eq.s32.totalorder %s37, 1
      %p417 = scmp.ne.s32.totalorder %s412, %s414
      %p418 = scmp.eq.s32.totalorder %s37, 0
      %p419 = por %p417, %p418
      %p420 = scmp.ne.s32.totalorder %s412, %s414
      %p421 = scmp.eq.s32.totalorder %s42, 1
      %p422 = por %p420, %p421
      %p423 = scmp.ne.s32.totalorder %s414, %s415
      %p424 = scmp.eq.s32.totalorder %s42, 0
      %p425 = por %p423, %p424
      %p426 = scmp.ne.s32.totalorder %s414, %s415
      %p427 = scmp.eq.s32.totalorder %s43, 1
      %p428 = por %p426, %p427
      %p430 = scmp.ne.s32.totalorder %s415, %s429
      %p431 = scmp.eq.s32.totalorder %s43, 0
      %p432 = por %p430, %p431
      %s434 = sadd.s32 %s433, 1
      %p437 = scmp.eq.s32.totalorder %s37, 1
      %p438 = scmp.ne.s32.totalorder %s433, %s435
      %p439 = scmp.eq.s32.totalorder %s37, 0
      %p440 = por %p438, %p439
      %p441 = scmp.ne.s32.totalorder %s433, %s435
      %p442 = scmp.eq.s32.totalorder %s42, 1
      %p443 = por %p441, %p442
      %p444 = scmp.ne.s32.totalorder %s435, %s436
      %p445 = scmp.eq.s32.totalorder %s42, 0
      %p446 = por %p444, %p445
      %p447 = scmp.ne.s32.totalorder %s435, %s436
      %p448 = scmp.eq.s32.totalorder %s43, 1
      %p449 = por %p447, %p448
      %p451 = scmp.ne.s32.totalorder %s436, %s450
      %p452 = scmp.eq.s32.totalorder %s43, 0
      %p453 = por %p451, %p452
      %s455 = sadd.s32 %s454, 1
      %p458 = scmp.eq.s32.totalorder %s37, 1
      %p459 = scmp.ne.s32.totalorder %s454, %s456
      %p460 = scmp.eq.s32.totalorder %s37, 0
      %p461 = por %p459, %p460
      %p462 = scmp.ne.s32.totalorder %s454, %s456
      %p463 = scmp.eq.s32.totalorder %s42, 1
      %p464 = por %p462, %p463
      %p465 = scmp.ne.s32.totalorder %s456, %s457
      %p466 = scmp.eq.s32.totalorder %s42, 0
      %p467 = por %p465, %p466
      %p468 = scmp.ne.s32.totalorder %s456, %s457
      %p469 = scmp.eq.s32.totalorder %s43, 1
      %p470 = por %p468, %p469
      %p472 = scmp.ne.s32.totalorder %s457, %s471
      %p473 = scmp.eq.s32.totalorder %s43, 0
      %p474 = por %p472, %p473
      %s476 = sadd.s32 %s475, 1
      %p479 = scmp.eq.s32.totalorder %s37, 1
      %p480 = scmp.ne.s32.totalorder %s475, %s477
      %p481 = scmp.eq.s32.totalorder %s37, 0
      %p482 = por %p480, %p481
      %p483 = scmp.ne.s32.totalorder %s475, %s477
      %p484 = scmp.eq.s32.totalorder %s42, 1
      %p485 = por %p483, %p484
      %p486 = scmp.ne.s32.totalorder %s477, %s478
      %p487 = scmp.eq.s32.totalorder %s42, 0
      %p488 = por %p486, %p487
      %p489 = scmp.ne.s32.totalorder %s477, %s478
      %p490 = scmp.eq.s32.totalorder %s43, 1
      %p491 = por %p489, %p490
      %p493 = scmp.ne.s32.totalorder %s478, %s492
      %p494 = scmp.eq.s32.totalorder %s43, 0
      %p495 = por %p493, %p494
      %s497 = sadd.s32 %s496, 1
      %p500 = scmp.eq.s32.totalorder %s37, 1
      %p501 = scmp.ne.s32.totalorder %s496, %s498
      %p502 = scmp.eq.s32.totalorder %s37, 0
      %p503 = por %p501, %p502
      %p504 = scmp.ne.s32.totalorder %s496, %s498
      %p505 = scmp.eq.s32.totalorder %s42, 1
      %p506 = por %p504, %p505
      %p507 = scmp.ne.s32.totalorder %s498, %s499
      %p508 = scmp.eq.s32.totalorder %s42, 0
      %p509 = por %p507, %p508
      %p510 = scmp.ne.s32.totalorder %s498, %s499
      %p511 = scmp.eq.s32.totalorder %s43, 1
      %p512 = por %p510, %p511
      %p514 = scmp.ne.s32.totalorder %s499, %s513
      %p515 = scmp.eq.s32.totalorder %s43, 0
      %p516 = por %p514, %p515
      %s518 = sadd.s32 %s517, 1
      %p521 = scmp.eq.s32.totalorder %s37, 1
      %p522 = scmp.ne.s32.totalorder %s517, %s519
      %p523 = scmp.eq.s32.totalorder %s37, 0
      %p524 = por %p522, %p523
      %p525 = scmp.ne.s32.totalorder %s517, %s519
      %p526 = scmp.eq.s32.totalorder %s42, 1
      %p527 = por %p525, %p526
      %p528 = scmp.ne.s32.totalorder %s519, %s520
      %p529 = scmp.eq.s32.totalorder %s42, 0
      %p530 = por %p528, %p529
      %p531 = scmp.ne.s32.totalorder %s519, %s520
      %p532 = scmp.eq.s32.totalorder %s43, 1
      %p533 = por %p531, %p532
      %p535 = scmp.ne.s32.totalorder %s520, %s534
      %p536 = scmp.eq.s32.totalorder %s43, 0
      %p537 = por %p535, %p536
      %s538 = ssub.s32 %s37, %s44
      %p539 = scmp.eq.s32.totalorder %s538, 0
      %s541 = sadd.s32 %s540, 1
      %s542 = scalar_select %p539, %s540, %s541
      %p545 = pneg %p539
      %p546 = scmp.eq.s32.totalorder %s37, 1
      %p547 = por %p545, %p546
      %p548 = scmp.ne.s32.totalorder %s540, %s543
      %p549 = scmp.eq.s32.totalorder %s37, 0
      %p550 = por %p548, %p549
      %p551 = scmp.ne.s32.totalorder %s540, %s543
      %p552 = scmp.eq.s32.totalorder %s42, 1
      %p553 = por %p551, %p552
      %p554 = scmp.ne.s32.totalorder %s543, %s544
      %p555 = scmp.eq.s32.totalorder %s42, 0
      %p556 = por %p554, %p555
      %p557 = scmp.ne.s32.totalorder %s543, %s544
      %p558 = scmp.eq.s32.totalorder %s43, 1
      %p559 = por %p557, %p558
      %p561 = scmp.ne.s32.totalorder %s544, %s560
      %p562 = scmp.eq.s32.totalorder %s43, 0
      %p563 = por %p561, %p562
      %s564 = ssub.s32 %s37, %s44
      %p565 = scmp.eq.s32.totalorder %s564, 0
      %s567 = sadd.s32 %s566, 1
      %s568 = scalar_select %p565, %s566, %s567
      %p571 = pneg %p565
      %p572 = scmp.eq.s32.totalorder %s37, 1
      %p573 = por %p571, %p572
      %p574 = scmp.ne.s32.totalorder %s566, %s569
      %p575 = scmp.eq.s32.totalorder %s37, 0
      %p576 = por %p574, %p575
      %p577 = scmp.ne.s32.totalorder %s566, %s569
      %p578 = scmp.eq.s32.totalorder %s42, 1
      %p579 = por %p577, %p578
      %p580 = scmp.ne.s32.totalorder %s569, %s570
      %p581 = scmp.eq.s32.totalorder %s42, 0
      %p582 = por %p580, %p581
      %p583 = scmp.ne.s32.totalorder %s569, %s570
      %p584 = scmp.eq.s32.totalorder %s43, 1
      %p585 = por %p583, %p584
      %p587 = scmp.ne.s32.totalorder %s570, %s586
      %p588 = scmp.eq.s32.totalorder %s43, 0
      %p589 = por %p587, %p588
      %s590 = ssub.s32 %s37, %s44
      %p591 = scmp.eq.s32.totalorder %s590, 0
      %s593 = sadd.s32 %s592, 1
      %s594 = scalar_select %p591, %s592, %s593
      %p597 = pneg %p591
      %p598 = scmp.eq.s32.totalorder %s37, 1
      %p599 = por %p597, %p598
      %p600 = scmp.ne.s32.totalorder %s592, %s595
      %p601 = scmp.eq.s32.totalorder %s37, 0
      %p602 = por %p600, %p601
      %p603 = scmp.ne.s32.totalorder %s592, %s595
      %p604 = scmp.eq.s32.totalorder %s42, 1
      %p605 = por %p603, %p604
      %p606 = scmp.ne.s32.totalorder %s595, %s596
      %p607 = scmp.eq.s32.totalorder %s42, 0
      %p608 = por %p606, %p607
      %p609 = scmp.ne.s32.totalorder %s595, %s596
      %p610 = scmp.eq.s32.totalorder %s43, 1
      %p611 = por %p609, %p610
      %p613 = scmp.ne.s32.totalorder %s596, %s612
      %p614 = scmp.eq.s32.totalorder %s43, 0
      %p615 = por %p613, %p614
      %s616 = ssub.s32 %s37, %s44
      %p617 = scmp.eq.s32.totalorder %s616, 0
      %s619 = sadd.s32 %s618, 1
      %s620 = scalar_select %p617, %s618, %s619
      %p623 = pneg %p617
      %p624 = scmp.eq.s32.totalorder %s37, 1
      %p625 = por %p623, %p624
      %p626 = scmp.ne.s32.totalorder %s618, %s621
      %p627 = scmp.eq.s32.totalorder %s37, 0
      %p628 = por %p626, %p627
      %p629 = scmp.ne.s32.totalorder %s618, %s621
      %p630 = scmp.eq.s32.totalorder %s42, 1
      %p631 = por %p629, %p630
      %p632 = scmp.ne.s32.totalorder %s621, %s622
      %p633 = scmp.eq.s32.totalorder %s42, 0
      %p634 = por %p632, %p633
      %p635 = scmp.ne.s32.totalorder %s621, %s622
      %p636 = scmp.eq.s32.totalorder %s43, 1
      %p637 = por %p635, %p636
      %p639 = scmp.ne.s32.totalorder %s622, %s638
      %p640 = scmp.eq.s32.totalorder %s43, 0
      %p641 = por %p639, %p640
      %s642 = ssub.s32 %s37, %s44
      %p643 = scmp.eq.s32.totalorder %s642, 0
      %s645 = sadd.s32 %s644, 1
      %s646 = scalar_select %p643, %s644, %s645
      %p649 = pneg %p643
      %p650 = scmp.eq.s32.totalorder %s37, 1
      %p651 = por %p649, %p650
      %p652 = scmp.ne.s32.totalorder %s644, %s647
      %p653 = scmp.eq.s32.totalorder %s37, 0
      %p654 = por %p652, %p653
      %p655 = scmp.ne.s32.totalorder %s644, %s647
      %p656 = scmp.eq.s32.totalorder %s42, 1
      %p657 = por %p655, %p656
      %p658 = scmp.ne.s32.totalorder %s647, %s648
      %p659 = scmp.eq.s32.totalorder %s42, 0
      %p660 = por %p658, %p659
      %p661 = scmp.ne.s32.totalorder %s647, %s648
      %p662 = scmp.eq.s32.totalorder %s43, 1
      %p663 = por %p661, %p662
      %p665 = scmp.ne.s32.totalorder %s648, %s664
      %p666 = scmp.eq.s32.totalorder %s43, 0
      %p667 = por %p665, %p666
      %p668 = scmp.le.s32.totalorder 1, %s37
      %p669 = scmp.lt.s32.totalorder %s37, 3
      %p670 = pnand %p668, %p669
      %p671 = pneg %p670
      // Predicated region
      $region9: #{mann_forward.1} parent=5 // pred_check
        _
      $region10: #{mann_forward.1} parent=5 // pred_check_branch
        %673 = sbr.rel (%p670) target = $region12
      $region11: #{mann_forward.1} parent=5 // pred_region
        %s674 = ssub.s32 %s37, 1
        // Predicated region
        $region13: #{mann_forward.1} parent=11 // pred_check
          %p675 = pneg %p110
        $region14: #{mann_forward.1} parent=11 // pred_check_branch
          %677 = sbr.rel (%p675) target = $region16
        $region15: #{mann_forward.1} parent=11 // pred_region
          _
        $region16: #{mann_forward.1} parent=11 // pred_fallthru
          _
        // Predicated region
        $region17: #{mann_forward.1} parent=11 // pred_check
          %p678 = pneg %p131
        $region18: #{mann_forward.1} parent=11 // pred_check_branch
          %680 = sbr.rel (%p678) target = $region20
        $region19: #{mann_forward.1} parent=11 // pred_region
          _
        $region20: #{mann_forward.1} parent=11 // pred_fallthru
          _
        // Predicated region
        $region21: #{mann_forward.1} parent=11 // pred_check
          %p681 = pneg %p152
        $region22: #{mann_forward.1} parent=11 // pred_check_branch
          %683 = sbr.rel (%p681) target = $region24
        $region23: #{mann_forward.1} parent=11 // pred_region
          _
        $region24: #{mann_forward.1} parent=11 // pred_fallthru
          _
        // Predicated region
        $region25: #{mann_forward.1} parent=11 // pred_check
          %p684 = pneg %p173
        $region26: #{mann_forward.1} parent=11 // pred_check_branch
          %686 = sbr.rel (%p684) target = $region28
        $region27: #{mann_forward.1} parent=11 // pred_region
          _
        $region28: #{mann_forward.1} parent=11 // pred_fallthru
          _
        // Predicated region
        $region29: #{mann_forward.1} parent=11 // pred_check
          %p687 = pneg %p194
        $region30: #{mann_forward.1} parent=11 // pred_check_branch
          %689 = sbr.rel (%p687) target = $region32
        $region31: #{mann_forward.1} parent=11 // pred_region
          _
        $region32: #{mann_forward.1} parent=11 // pred_fallthru
          _
        // Predicated region
        $region33: #{mann_forward.1} parent=11 // pred_check
          %p690 = pneg %p215
        $region34: #{mann_forward.1} parent=11 // pred_check_branch
          %692 = sbr.rel (%p690) target = $region36
        $region35: #{mann_forward.1} parent=11 // pred_region
          _
        $region36: #{mann_forward.1} parent=11 // pred_fallthru
          _
        // Predicated region
        $region37: #{mann_forward.1} parent=11 // pred_check
          %p693 = pneg %p236
        $region38: #{mann_forward.1} parent=11 // pred_check_branch
          %695 = sbr.rel (%p693) target = $region40
        $region39: #{mann_forward.1} parent=11 // pred_region
          _
        $region40: #{mann_forward.1} parent=11 // pred_fallthru
          _
        // Predicated region
        $region41: #{mann_forward.1} parent=11 // pred_check
          %p696 = pneg %p257
        $region42: #{mann_forward.1} parent=11 // pred_check_branch
          %698 = sbr.rel (%p696) target = $region44
        $region43: #{mann_forward.1} parent=11 // pred_region
          _
        $region44: #{mann_forward.1} parent=11 // pred_fallthru
          _
        // Predicated region
        $region45: #{mann_forward.1} parent=11 // pred_check
          %p699 = pneg %p278
        $region46: #{mann_forward.1} parent=11 // pred_check_branch
          %701 = sbr.rel (%p699) target = $region48
        $region47: #{mann_forward.1} parent=11 // pred_region
          _
        $region48: #{mann_forward.1} parent=11 // pred_fallthru
          _
        // Predicated region
        $region49: #{mann_forward.1} parent=11 // pred_check
          %p702 = pneg %p299
        $region50: #{mann_forward.1} parent=11 // pred_check_branch
          %704 = sbr.rel (%p702) target = $region52
        $region51: #{mann_forward.1} parent=11 // pred_region
          _
        $region52: #{mann_forward.1} parent=11 // pred_fallthru
          _
        // Predicated region
        $region53: #{mann_forward.1} parent=11 // pred_check
          %p705 = pneg %p320
        $region54: #{mann_forward.1} parent=11 // pred_check_branch
          %707 = sbr.rel (%p705) target = $region56
        $region55: #{mann_forward.1} parent=11 // pred_region
          _
        $region56: #{mann_forward.1} parent=11 // pred_fallthru
          _
        // Predicated region
        $region57: #{mann_forward.1} parent=11 // pred_check
          %p708 = pneg %p341
        $region58: #{mann_forward.1} parent=11 // pred_check_branch
          %710 = sbr.rel (%p708) target = $region60
        $region59: #{mann_forward.1} parent=11 // pred_region
          _
        $region60: #{mann_forward.1} parent=11 // pred_fallthru
          _
        // Predicated region
        $region61: #{mann_forward.1} parent=11 // pred_check
          %p711 = pneg %p362
        $region62: #{mann_forward.1} parent=11 // pred_check_branch
          %713 = sbr.rel (%p711) target = $region64
        $region63: #{mann_forward.1} parent=11 // pred_region
          _
        $region64: #{mann_forward.1} parent=11 // pred_fallthru
          _
        // Predicated region
        $region65: #{mann_forward.1} parent=11 // pred_check
          %p714 = pneg %p383
        $region66: #{mann_forward.1} parent=11 // pred_check_branch
          %716 = sbr.rel (%p714) target = $region68
        $region67: #{mann_forward.1} parent=11 // pred_region
          _
        $region68: #{mann_forward.1} parent=11 // pred_fallthru
          _
        // Predicated region
        $region69: #{mann_forward.1} parent=11 // pred_check
          %p717 = pneg %p404
        $region70: #{mann_forward.1} parent=11 // pred_check_branch
          %719 = sbr.rel (%p717) target = $region72
        $region71: #{mann_forward.1} parent=11 // pred_region
          _
        $region72: #{mann_forward.1} parent=11 // pred_fallthru
          _
        // Predicated region
        $region73: #{mann_forward.1} parent=11 // pred_check
          %p720 = pneg %p425
        $region74: #{mann_forward.1} parent=11 // pred_check_branch
          %722 = sbr.rel (%p720) target = $region76
        $region75: #{mann_forward.1} parent=11 // pred_region
          _
        $region76: #{mann_forward.1} parent=11 // pred_fallthru
          _
        // Predicated region
        $region77: #{mann_forward.1} parent=11 // pred_check
          %p723 = pneg %p446
        $region78: #{mann_forward.1} parent=11 // pred_check_branch
          %725 = sbr.rel (%p723) target = $region80
        $region79: #{mann_forward.1} parent=11 // pred_region
          _
        $region80: #{mann_forward.1} parent=11 // pred_fallthru
          _
        // Predicated region
        $region81: #{mann_forward.1} parent=11 // pred_check
          %p726 = pneg %p467
        $region82: #{mann_forward.1} parent=11 // pred_check_branch
          %728 = sbr.rel (%p726) target = $region84
        $region83: #{mann_forward.1} parent=11 // pred_region
          _
        $region84: #{mann_forward.1} parent=11 // pred_fallthru
          _
        // Predicated region
        $region85: #{mann_forward.1} parent=11 // pred_check
          %p729 = pneg %p488
        $region86: #{mann_forward.1} parent=11 // pred_check_branch
          %731 = sbr.rel (%p729) target = $region88
        $region87: #{mann_forward.1} parent=11 // pred_region
          _
        $region88: #{mann_forward.1} parent=11 // pred_fallthru
          _
        // Predicated region
        $region89: #{mann_forward.1} parent=11 // pred_check
          %p732 = pneg %p509
        $region90: #{mann_forward.1} parent=11 // pred_check_branch
          %734 = sbr.rel (%p732) target = $region92
        $region91: #{mann_forward.1} parent=11 // pred_region
          _
        $region92: #{mann_forward.1} parent=11 // pred_fallthru
          _
        // Predicated region
        $region93: #{mann_forward.1} parent=11 // pred_check
          %p735 = pneg %p530
        $region94: #{mann_forward.1} parent=11 // pred_check_branch
          %737 = sbr.rel (%p735) target = $region96
        $region95: #{mann_forward.1} parent=11 // pred_region
          _
        $region96: #{mann_forward.1} parent=11 // pred_fallthru
          _
      $region12: #{mann_forward.1} parent=5 // pred_fallthru
        _
      %p738 = scmp.lt.s32.totalorder %s37, 2
      // Predicated region
      $region97: #{mann_forward.1} parent=5 // pred_check
        %p739 = pneg %p738
      $region98: #{mann_forward.1} parent=5 // pred_check_branch
        %741 = sbr.rel (%p739) target = $region100
      $region99: #{mann_forward.1} parent=5 // pred_region
        // Predicated region
        $region101: #{mann_forward.1} parent=99 // pred_check
          %p742 = pneg %p57
        $region102: #{mann_forward.1} parent=99 // pred_check_branch
          %744 = sbr.rel (%p742) target = $region104
        $region103: #{mann_forward.1} parent=99 // pred_region
          %p745 = scmp.lt.s32.totalorder %s37, 1
          %s746 = scalar_select %p745, %s37, 1
          %s747 = smul.addr %s746, 8
          %s748 = scalar_lea.vmem %s0, %s747
        $region104: #{mann_forward.1} parent=99 // pred_fallthru
          _
        // Predicated region
        $region105: #{mann_forward.1} parent=99 // pred_check
          %p749 = pneg %p83
        $region106: #{mann_forward.1} parent=99 // pred_check_branch
          %751 = sbr.rel (%p749) target = $region108
        $region107: #{mann_forward.1} parent=99 // pred_region
          %p752 = scmp.lt.s32.totalorder %s37, 1
          %s753 = scalar_select %p752, %s37, 1
          %s754 = smul.addr %s753, 8
          %s755 = scalar_lea.vmem %s1, %s754
        $region108: #{mann_forward.1} parent=99 // pred_fallthru
          _
      $region100: #{mann_forward.1} parent=5 // pred_fallthru
        _
      %p756 = scmp.le.s32.totalorder 1, %s37
      %p757 = scmp.lt.s32.totalorder %s37, 3
      %p758 = pnand %p756, %p757
      %p759 = pneg %p758
      // Predicated region
      $region109: #{mann_forward.1} parent=5 // pred_check
        _
      $region110: #{mann_forward.1} parent=5 // pred_check_branch
        %761 = sbr.rel (%p758) target = $region112
      $region111: #{mann_forward.1} parent=5 // pred_region
        %s762 = ssub.s32 %s37, 1
        %p763 = scmp.lt.s32.totalorder %s42, 1
        %s764 = scalar_select %p763, %s42, 1
        %s765 = smul.addr %s764, 8
        %s766 = scalar_lea.vmem %s0, %s765
        %p767 = pneg %p63
        %p768 = pneg %p60
        %p769 = scmp.lt.s32.totalorder %s42, 1
        %s770 = scalar_select %p769, %s42, 1
        %s771 = smul.addr %s770, 8
        %s772 = scalar_lea.vmem %s1, %s771
        %p773 = pneg %p89
        %p774 = pneg %p86
        %p775 = pneg %p110
        %p776 = pneg %p107
        %p777 = pneg %p131
        %p778 = pneg %p128
        %p779 = pneg %p152
        %p780 = pneg %p149
        %p781 = pneg %p173
        %p782 = pneg %p170
        %p783 = pneg %p194
        %p784 = pneg %p191
        %p785 = pneg %p215
        %p786 = pneg %p212
        %p787 = pneg %p236
        %p788 = pneg %p233
        %p789 = pneg %p257
        %p790 = pneg %p254
        %p791 = pneg %p278
        %p792 = pneg %p275
        %p793 = pneg %p299
        %p794 = pneg %p296
        %p795 = pneg %p320
        %p796 = pneg %p317
        %p797 = pneg %p341
        %p798 = pneg %p338
        %p799 = pneg %p362
        %p800 = pneg %p359
        %p801 = pneg %p383
        %p802 = pneg %p380
        %p803 = pneg %p404
        %p804 = pneg %p401
        %p805 = pneg %p425
        %p806 = pneg %p422
        %p807 = pneg %p446
        %p808 = pneg %p443
        %p809 = pneg %p467
        %p810 = pneg %p464
        %p811 = pneg %p488
        %p812 = pneg %p485
        %p813 = pneg %p509
        %p814 = pneg %p506
        %p815 = pneg %p530
        %p816 = pneg %p527
        %p817 = pneg %p556
        %p818 = pneg %p553
        %s819 = sand.u32 %s543, 1
        %s820 = scalar_lea.sflag [#allocation3], %s819
        %s821 = sand.u32 %s543, 1
        %s822 = smul.addr %s821, 8
        %s823 = scalar_lea.vmem [#allocation2], %s822
        %p824 = pneg %p582
        %p825 = pneg %p579
        %p826 = scmp.lt.s32.totalorder %s42, 1
        %s827 = scalar_select %p826, %s42, 1
        %s828 = smul.addr %s827, 8
        %s829 = scalar_lea.vmem %s24, %s828
        %p830 = pneg %p608
        %p831 = pneg %p605
        %p832 = scmp.lt.s32.totalorder %s42, 1
        %s833 = scalar_select %p832, %s42, 1
        %s834 = smul.addr %s833, 12
        %s835 = smul.addr %s834, 8
        %s836 = scalar_lea.vmem %s25, %s835
        %p837 = pneg %p634
        %p838 = pneg %p631
        %p839 = scmp.lt.s32.totalorder %s42, 1
        %s840 = scalar_select %p839, %s42, 1
        %s841 = smul.addr %s840, 8
        %s842 = smul.addr %s841, 8
        %s843 = scalar_lea.vmem %s26, %s842
        %p844 = pneg %p660
        %p845 = pneg %p657
        %p846 = scmp.lt.s32.totalorder %s42, 1
        %s847 = scalar_select %p846, %s42, 1
        %s848 = smul.addr %s847, 4
        %s849 = smul.addr %s848, 8
        %s850 = scalar_lea.vmem %s27, %s849
        %p851 = scmp.lt.s32.totalorder %s42, 1
        %s852 = scalar_select %p851, %s42, 1
        %s853 = smul.addr %s852, 8
        %s854 = scalar_lea.vmem %s0, %s853
        %p855 = scmp.lt.s32.totalorder %s42, 1
        %s856 = scalar_select %p855, %s42, 1
        %s857 = smul.addr %s856, 8
        %s858 = scalar_lea.vmem %s1, %s857
        %p859 = scmp.lt.s32.totalorder %s42, 1
        %s860 = scalar_select %p859, %s42, 1
        %s861 = smul.addr %s860, 8
        %s862 = scalar_lea.vmem %s24, %s861
        %p863 = scmp.lt.s32.totalorder %s42, 1
        %s864 = scalar_select %p863, %s42, 1
        %s865 = smul.addr %s864, 12
        %s866 = smul.addr %s865, 8
        %s867 = scalar_lea.vmem %s25, %s866
        %p868 = scmp.lt.s32.totalorder %s42, 1
        %s869 = scalar_select %p868, %s42, 1
        %s870 = smul.addr %s869, 8
        %s871 = smul.addr %s870, 8
        %s872 = scalar_lea.vmem %s26, %s871
        %p873 = scmp.lt.s32.totalorder %s42, 1
        %s874 = scalar_select %p873, %s42, 1
        %s875 = smul.addr %s874, 4
        %s876 = smul.addr %s875, 8
        %s877 = scalar_lea.vmem %s27, %s876
        %v878 = vld [vmem:[%s854] sm:$0xff]
        %v879 = vld [vmem:[%s2] sm:$0x1]
        %v881 = vlaneseq
        %v882 = vshrl.u32 %v881, 7
        %v883 = vsub.s32 0, %v882
        %v884 = vrot.slane %v879, %v883
        %v886 = vsub.f32 %v878, %v884
        %v887 = vld [vmem:[%s3] sm:$0x1]
        %v889 = vlaneseq
        %v890 = vshrl.u32 %v889, 7
        %v891 = vsub.s32 0, %v890
        %v892 = vrot.slane %v887, %v891
        %v894 = vmul.f32 %v886, %v892
        %v895 = vld [vmem:[%s858] sm:$0xff]
        %v896 = vld [vmem:[%s4] sm:$0x1]
        %v898 = vlaneseq
        %v899 = vshrl.u32 %v898, 7
        %v900 = vsub.s32 0, %v899
        %v901 = vrot.slane %v896, %v900
        %v903 = vsub.f32 %v895, %v901
        %v904 = vld [vmem:[%s5] sm:$0x1]
        %v906 = vlaneseq
        %v907 = vshrl.u32 %v906, 7
        %v908 = vsub.s32 0, %v907
        %v909 = vrot.slane %v904, %v908
        %v911 = vmul.f32 %v903, %v909
        %v912 = vld [vmem:[%s6] sm:$0xff]
        %v913 = vld [vmem:[%s6 + $0x8] sm:$0xff]
        %v914 = vld [vmem:[%s7] sm:$0x1]
        %v916 = vlaneseq
        %v917 = vshrl.u32 %v916, 7
        %v918 = vsub.s32 0, %v917
        %v919 = vrot.slane %v914, %v918
        %vm921 = vcmask 130048
        %v923 = vsel %vm921, %v894, 0
        %925 = vmatprep.subr.mxu0 0.0
        %926 = vmatpush1.msra.mxu0 0.0
        %927 = vmatprep.subr.mxu0 0.0
        %928 = vmatpush1.msra.mxu0 0.0
        %929 = vmatprep.subr.mxu0 0.0
        %930 = vmatpush1.msra.mxu0 0.0
        %931 = vmatprep.subr.mxu0 0.0
        %932 = vmatpush1.msra.mxu0 0.0
        %933 = vmatprep.subr.mxu0 0.0
        %934 = vmatpush1.msra.mxu0 0.0
        %935 = vmatprep.subr.mxu0 0.0
        %936 = vmatpush1.msra.mxu0 0.0
        %937 = vmatprep.subr.mxu0 0.0
        %938 = vmatpush1.msra.mxu0 0.0
        %939 = vmatprep.subr.mxu0 0.0
        %940 = vmatpush1.msra.mxu0 0.0
        %941 = vmatprep.subr.mxu0 0.0
        %942 = vmatpush1.msra.mxu0 0.0
        %943 = vmatprep.subr.mxu0 0.0
        %944 = vmatpush1.msra.mxu0 0.0
        %945 = vmatprep.subr.mxu0 0.0
        %946 = vmatpush1.msra.mxu0 0.0
        %947 = vmatprep.subr.mxu0 0.0
        %948 = vmatpush1.msra.mxu0 0.0
        %949 = vmatprep.subr.mxu0 0.0
        %950 = vmatpush1.msra.mxu0 0.0
        %951 = vmatprep.subr.mxu0 0.0
        %952 = vmatpush1.msra.mxu0 0.0
        %953 = vmatprep.subr.mxu0 0.0
        %954 = vmatpush1.msra.mxu0 %v913
        %955 = vmatprep.subr.mxu0 0.0
        %956 = vmatpush1.msra.mxu0 %v912
        %957 = vmatprep.subr.mxu0 0.0
        %958 = vmatpush2.msra.mxu0 0.0
        %959 = vmatprep.subr.mxu0 0.0
        %960 = vmatpush2.msra.mxu0 0.0
        %961 = vmatprep.subr.mxu0 0.0
        %962 = vmatpush2.msra.mxu0 0.0
        %963 = vmatprep.subr.mxu0 0.0
        %964 = vmatpush2.msra.mxu0 0.0
        %965 = vmatprep.subr.mxu0 0.0
        %966 = vmatpush2.msra.mxu0 0.0
        %967 = vmatprep.subr.mxu0 0.0
        %968 = vmatpush2.msra.mxu0 0.0
        %969 = vmatprep.subr.mxu0 0.0
        %970 = vmatpush2.msra.mxu0 0.0
        %971 = vmatprep.subr.mxu0 0.0
        %972 = vmatpush2.msra.mxu0 0.0
        %973 = vmatprep.subr.mxu0 0.0
        %974 = vmatpush2.msra.mxu0 0.0
        %975 = vmatprep.subr.mxu0 0.0
        %976 = vmatpush2.msra.mxu0 0.0
        %977 = vmatprep.subr.mxu0 0.0
        %978 = vmatpush2.msra.mxu0 0.0
        %979 = vmatprep.subr.mxu0 0.0
        %980 = vmatpush2.msra.mxu0 0.0
        %981 = vmatprep.subr.mxu0 0.0
        %982 = vmatpush2.msra.mxu0 0.0
        %983 = vmatprep.subr.mxu0 0.0
        %984 = vmatpush2.msra.mxu0 0.0
        %985 = vmatprep.subr.mxu0 0.0
        %986 = vmatpush2.msra.mxu0 0.0
        %987 = vmatprep.subr.mxu0 0.0
        %988 = vmatpush2.msra.mxu0 0.0
        %989 = vmatprep.mubr.f32.mxu0 0.0
        %990 = vmatmul.mubr.f32.gmra.mxu0 %v923
        %v991 = vpop.f32.mrf.mxu0
        %v992 = vadd.f32 %v919, %v991
        %v993 = vpop.f32.mrf.mxu0
        %994 = vdwg.mxu0
        %vm995 = vcmp.gt.f32.partialorder %v992, 0.0
        %v996 = vmin.f32 %v992, 0.0
        %v997 = vmul.f32 %v996, 1.442695
        %v998 = vpow.pop %v997
        %v999 = vsub.f32 %v998, 1.0
        %v1000 = vsel %vm995, %v992, %v999
        %v1001 = vld [vmem:[%s8] sm:$0xff]
        %v1002 = vld [vmem:[%s8 + $0x8] sm:$0xff]
        %v1003 = vld [vmem:[%s8 + $0x10] sm:$0xff]
        %v1004 = vld [vmem:[%s8 + $0x18] sm:$0xff]
        %v1005 = vld [vmem:[%s9] sm:$0x1]
        %v1007 = vlaneseq
        %v1008 = vshrl.u32 %v1007, 7
        %v1009 = vsub.s32 0, %v1008
        %v1010 = vrot.slane %v1005, %v1009
        %vm1012 = vcmask 261120
        %v1014 = vsel %vm1012, %v1000, 0
        %1016 = vmatprep.subr.mxu0 0.0
        %1017 = vmatpush1.msra.mxu0 0.0
        %1018 = vmatprep.subr.mxu0 0.0
        %1019 = vmatpush1.msra.mxu0 0.0
        %1020 = vmatprep.subr.mxu0 0.0
        %1021 = vmatpush1.msra.mxu0 0.0
        %1022 = vmatprep.subr.mxu0 0.0
        %1023 = vmatpush1.msra.mxu0 0.0
        %1024 = vmatprep.subr.mxu0 0.0
        %1025 = vmatpush1.msra.mxu0 0.0
        %1026 = vmatprep.subr.mxu0 0.0
        %1027 = vmatpush1.msra.mxu0 0.0
        %1028 = vmatprep.subr.mxu0 0.0
        %1029 = vmatpush1.msra.mxu0 0.0
        %1030 = vmatprep.subr.mxu0 0.0
        %1031 = vmatpush1.msra.mxu0 0.0
        %1032 = vmatprep.subr.mxu0 0.0
        %1033 = vmatpush1.msra.mxu0 0.0
        %1034 = vmatprep.subr.mxu0 0.0
        %1035 = vmatpush1.msra.mxu0 0.0
        %1036 = vmatprep.subr.mxu0 0.0
        %1037 = vmatpush1.msra.mxu0 0.0
        %1038 = vmatprep.subr.mxu0 0.0
        %1039 = vmatpush1.msra.mxu0 0.0
        %1040 = vmatprep.subr.mxu0 0.0
        %1041 = vmatpush1.msra.mxu0 %v1004
        %1042 = vmatprep.subr.mxu0 0.0
        %1043 = vmatpush1.msra.mxu0 %v1003
        %1044 = vmatprep.subr.mxu0 0.0
        %1045 = vmatpush1.msra.mxu0 %v1002
        %1046 = vmatprep.subr.mxu0 0.0
        %1047 = vmatpush1.msra.mxu0 %v1001
        %1048 = vmatprep.subr.mxu0 0.0
        %1049 = vmatpush2.msra.mxu0 0.0
        %1050 = vmatprep.subr.mxu0 0.0
        %1051 = vmatpush2.msra.mxu0 0.0
        %1052 = vmatprep.subr.mxu0 0.0
        %1053 = vmatpush2.msra.mxu0 0.0
        %1054 = vmatprep.subr.mxu0 0.0
        %1055 = vmatpush2.msra.mxu0 0.0
        %1056 = vmatprep.subr.mxu0 0.0
        %1057 = vmatpush2.msra.mxu0 0.0
        %1058 = vmatprep.subr.mxu0 0.0
        %1059 = vmatpush2.msra.mxu0 0.0
        %1060 = vmatprep.subr.mxu0 0.0
        %1061 = vmatpush2.msra.mxu0 0.0
        %1062 = vmatprep.subr.mxu0 0.0
        %1063 = vmatpush2.msra.mxu0 0.0
        %1064 = vmatprep.subr.mxu0 0.0
        %1065 = vmatpush2.msra.mxu0 0.0
        %1066 = vmatprep.subr.mxu0 0.0
        %1067 = vmatpush2.msra.mxu0 0.0
        %1068 = vmatprep.subr.mxu0 0.0
        %1069 = vmatpush2.msra.mxu0 0.0
        %1070 = vmatprep.subr.mxu0 0.0
        %1071 = vmatpush2.msra.mxu0 0.0
        %1072 = vmatprep.subr.mxu0 0.0
        %1073 = vmatpush2.msra.mxu0 0.0
        %1074 = vmatprep.subr.mxu0 0.0
        %1075 = vmatpush2.msra.mxu0 0.0
        %1076 = vmatprep.subr.mxu0 0.0
        %1077 = vmatpush2.msra.mxu0 0.0
        %1078 = vmatprep.subr.mxu0 0.0
        %1079 = vmatpush2.msra.mxu0 0.0
        %1080 = vmatprep.mubr.f32.mxu0 0.0
        %1081 = vmatmul.mubr.f32.gmra.mxu0 %v1014
        %v1082 = vpop.f32.mrf.mxu0
        %v1083 = vadd.f32 %v1010, %v1082
        %v1084 = vpop.f32.mrf.mxu0
        %1085 = vdwg.mxu0
        %vm1086 = vcmp.gt.f32.partialorder %v1083, 0.0
        %v1087 = vmin.f32 %v1083, 0.0
        %v1088 = vmul.f32 %v1087, 1.442695
        %v1089 = vpow.pop %v1088
        %v1090 = vsub.f32 %v1089, 1.0
        %v1091 = vsel %vm1086, %v1083, %v1090
        %v1092 = vld [vmem:[%s10] sm:$0xff]
        %v1093 = vld [vmem:[%s10 + $0x8] sm:$0xff]
        %v1094 = vld [vmem:[%s10 + $0x10] sm:$0xff]
        %v1095 = vld [vmem:[%s10 + $0x18] sm:$0xff]
        %v1096 = vld [vmem:[%s11] sm:$0x1]
        %v1098 = vlaneseq
        %v1099 = vshrl.u32 %v1098, 7
        %v1100 = vsub.s32 0, %v1099
        %v1101 = vrot.slane %v1096, %v1100
        %v1104 = vsel %vm1012, %v1091, 0
        %1106 = vmatprep.subr.mxu0 0.0
        %1107 = vmatpush1.msra.mxu0 0.0
        %1108 = vmatprep.subr.mxu0 0.0
        %1109 = vmatpush1.msra.mxu0 0.0
        %1110 = vmatprep.subr.mxu0 0.0
        %1111 = vmatpush1.msra.mxu0 0.0
        %1112 = vmatprep.subr.mxu0 0.0
        %1113 = vmatpush1.msra.mxu0 0.0
        %1114 = vmatprep.subr.mxu0 0.0
        %1115 = vmatpush1.msra.mxu0 0.0
        %1116 = vmatprep.subr.mxu0 0.0
        %1117 = vmatpush1.msra.mxu0 0.0
        %1118 = vmatprep.subr.mxu0 0.0
        %1119 = vmatpush1.msra.mxu0 0.0
        %1120 = vmatprep.subr.mxu0 0.0
        %1121 = vmatpush1.msra.mxu0 0.0
        %1122 = vmatprep.subr.mxu0 0.0
        %1123 = vmatpush1.msra.mxu0 0.0
        %1124 = vmatprep.subr.mxu0 0.0
        %1125 = vmatpush1.msra.mxu0 0.0
        %1126 = vmatprep.subr.mxu0 0.0
        %1127 = vmatpush1.msra.mxu0 0.0
        %1128 = vmatprep.subr.mxu0 0.0
        %1129 = vmatpush1.msra.mxu0 0.0
        %1130 = vmatprep.subr.mxu0 0.0
        %1131 = vmatpush1.msra.mxu0 %v1095
        %1132 = vmatprep.subr.mxu0 0.0
        %1133 = vmatpush1.msra.mxu0 %v1094
        %1134 = vmatprep.subr.mxu0 0.0
        %1135 = vmatpush1.msra.mxu0 %v1093
        %1136 = vmatprep.subr.mxu0 0.0
        %1137 = vmatpush1.msra.mxu0 %v1092
        %1138 = vmatprep.subr.mxu0 0.0
        %1139 = vmatpush2.msra.mxu0 0.0
        %1140 = vmatprep.subr.mxu0 0.0
        %1141 = vmatpush2.msra.mxu0 0.0
        %1142 = vmatprep.subr.mxu0 0.0
        %1143 = vmatpush2.msra.mxu0 0.0
        %1144 = vmatprep.subr.mxu0 0.0
        %1145 = vmatpush2.msra.mxu0 0.0
        %1146 = vmatprep.subr.mxu0 0.0
        %1147 = vmatpush2.msra.mxu0 0.0
        %1148 = vmatprep.subr.mxu0 0.0
        %1149 = vmatpush2.msra.mxu0 0.0
        %1150 = vmatprep.subr.mxu0 0.0
        %1151 = vmatpush2.msra.mxu0 0.0
        %1152 = vmatprep.subr.mxu0 0.0
        %1153 = vmatpush2.msra.mxu0 0.0
        %1154 = vmatprep.subr.mxu0 0.0
        %1155 = vmatpush2.msra.mxu0 0.0
        %1156 = vmatprep.subr.mxu0 0.0
        %1157 = vmatpush2.msra.mxu0 0.0
        %1158 = vmatprep.subr.mxu0 0.0
        %1159 = vmatpush2.msra.mxu0 0.0
        %1160 = vmatprep.subr.mxu0 0.0
        %1161 = vmatpush2.msra.mxu0 0.0
        %1162 = vmatprep.subr.mxu0 0.0
        %1163 = vmatpush2.msra.mxu0 0.0
        %1164 = vmatprep.subr.mxu0 0.0
        %1165 = vmatpush2.msra.mxu0 0.0
        %1166 = vmatprep.subr.mxu0 0.0
        %1167 = vmatpush2.msra.mxu0 0.0
        %1168 = vmatprep.subr.mxu0 0.0
        %1169 = vmatpush2.msra.mxu0 0.0
        %1170 = vmatprep.mubr.f32.mxu0 0.0
        %1171 = vmatmul.mubr.f32.gmra.mxu0 %v1104
        %v1172 = vpop.f32.mrf.mxu0
        %v1173 = vadd.f32 %v1101, %v1172
        %v1174 = vpop.f32.mrf.mxu0
        %1175 = vdwg.mxu0
        %vm1176 = vcmask 31744
        %v1177 = vsel %vm1176, %v1173, -inf
        %1178 = vmax.xlane.f32.xlu0 %v1177
        %v1179 = vpop.xlane.xlu0 %1178
        %v1180 = vsub.f32 %v1173, %v1179
        %v1181 = vmul.f32 %v1180, 1.442695
        %v1182 = vpow.pop %v1181
        %v1183 = vsel %vm1176, %v1182, 0.0
        %1184 = vadd.xlane.f32.xlu0 %v1183
        %v1185 = vpop.xlane.xlu0 %1184
        %v1186 = vrcp.pop %v1185
        %v1187 = vmul.f32 %v1182, %v1186
        %1188 = vst.msk [vmem:[%s862] sm:$0xff] %vm1176, %v1187
        %v1189 = vld [vmem:[%s12] sm:$0xff]
        %v1190 = vld [vmem:[%s12 + $0x8] sm:$0xff]
        %v1191 = vld [vmem:[%s12 + $0x10] sm:$0xff]
        %v1192 = vld [vmem:[%s12 + $0x18] sm:$0xff]
        %v1193 = vld [vmem:[%s12 + $0x20] sm:$0xff]
        %v1194 = vld [vmem:[%s12 + $0x28] sm:$0xff]
        %v1201 = vcombine.high %v1189, %v1189
        %v1202 = vcombine.high %v1190, %v1190
        %v1203 = vcombine.high %v1191, %v1191
        %v1204 = vcombine.high %v1192, %v1192
        %v1205 = vcombine.high %v1193, %v1193
        %v1206 = vcombine.high %v1194, %v1194
        %v1208 = vsel %vm1176, %v1187, 0
        %vm1210 = vcmask 1043456
        %v1211 = vsel %vm1210, %v1189, 0
        %v1213 = vsel %vm1210, %v1201, 0
        %v1215 = vsel %vm1210, %v1190, 0
        %v1217 = vsel %vm1210, %v1202, 0
        %v1219 = vsel %vm1210, %v1191, 0
        %v1221 = vsel %vm1210, %v1203, 0
        %v1223 = vsel %vm1210, %v1192, 0
        %v1225 = vsel %vm1210, %v1204, 0
        %v1227 = vsel %vm1210, %v1193, 0
        %v1229 = vsel %vm1210, %v1205, 0
        %v1231 = vsel %vm1210, %v1194, 0
        %v1233 = vsel %vm1210, %v1206, 0
        %1235 = vmatprep.subr.mxu0 0.0
        %1236 = vmatpush1.msra.mxu0 0.0
        %1237 = vmatprep.subr.mxu0 0.0
        %1238 = vmatpush1.msra.mxu0 0.0
        %1239 = vmatprep.subr.mxu0 0.0
        %1240 = vmatpush1.msra.mxu0 0.0
        %1241 = vmatprep.subr.mxu0 0.0
        %1242 = vmatpush1.msra.mxu0 0.0
        %1243 = vmatprep.subr.mxu0 0.0
        %1244 = vmatpush1.msra.mxu0 0.0
        %1245 = vmatprep.subr.mxu0 0.0
        %1246 = vmatpush1.msra.mxu0 0.0
        %1247 = vmatprep.subr.mxu0 0.0
        %1248 = vmatpush1.msra.mxu0 0.0
        %1249 = vmatprep.subr.mxu0 0.0
        %1250 = vmatpush1.msra.mxu0 0.0
        %1251 = vmatprep.subr.mxu0 0.0
        %1252 = vmatpush1.msra.mxu0 0.0
        %1253 = vmatprep.subr.mxu0 0.0
        %1254 = vmatpush1.msra.mxu0 0.0
        %1255 = vmatprep.subr.mxu0 0.0
        %1256 = vmatpush1.msra.mxu0 0.0
        %1257 = vmatprep.subr.mxu0 0.0
        %1258 = vmatpush1.msra.mxu0 0.0
        %1259 = vmatprep.subr.mxu0 0.0
        %1260 = vmatpush1.msra.mxu0 0.0
        %1261 = vmatprep.subr.mxu0 0.0
        %1262 = vmatpush1.msra.mxu0 0.0
        %1263 = vmatprep.subr.mxu0 0.0
        %1264 = vmatpush1.msra.mxu0 0.0
        %1265 = vmatprep.subr.mxu0 %v1213
        %1266 = vmatpush1.msra.mxu0 %v1211
        %1267 = vmatprep.subr.mxu0 0.0
        %1268 = vmatpush2.msra.mxu0 0.0
        %1269 = vmatprep.subr.mxu0 0.0
        %1270 = vmatpush2.msra.mxu0 0.0
        %1271 = vmatprep.subr.mxu0 0.0
        %1272 = vmatpush2.msra.mxu0 0.0
        %1273 = vmatprep.subr.mxu0 0.0
        %1274 = vmatpush2.msra.mxu0 0.0
        %1275 = vmatprep.subr.mxu0 0.0
        %1276 = vmatpush2.msra.mxu0 0.0
        %1277 = vmatprep.subr.mxu0 0.0
        %1278 = vmatpush2.msra.mxu0 0.0
        %1279 = vmatprep.subr.mxu0 0.0
        %1280 = vmatpush2.msra.mxu0 0.0
        %1281 = vmatprep.subr.mxu0 0.0
        %1282 = vmatpush2.msra.mxu0 0.0
        %1283 = vmatprep.subr.mxu0 0.0
        %1284 = vmatpush2.msra.mxu0 0.0
        %1285 = vmatprep.subr.mxu0 0.0
        %1286 = vmatpush2.msra.mxu0 0.0
        %1287 = vmatprep.subr.mxu0 0.0
        %1288 = vmatpush2.msra.mxu0 0.0
        %1289 = vmatprep.subr.mxu0 0.0
        %1290 = vmatpush2.msra.mxu0 0.0
        %1291 = vmatprep.subr.mxu0 0.0
        %1292 = vmatpush2.msra.mxu0 0.0
        %1293 = vmatprep.subr.mxu0 0.0
        %1294 = vmatpush2.msra.mxu0 0.0
        %1295 = vmatprep.subr.mxu0 0.0
        %1296 = vmatpush2.msra.mxu0 0.0
        %1297 = vmatprep.subr.mxu0 0.0
        %1298 = vmatpush2.msra.mxu0 0.0
        %1299 = vmatprep.mubr.f32.mxu0 0.0
        %1300 = vmatmul.mubr.f32.gmra.mxu0 %v1208
        %v1301 = vpop.f32.mrf.mxu0
        %v1302 = vadd.f32 0.0, %v1301
        %v1303 = vpop.f32.mrf.mxu0
        %v1304 = vadd.f32 0.0, %v1303
        %1305 = vdwg.mxu0
        %1306 = vmatprep.subr.mxu0 0.0
        %1307 = vmatpush1.msra.mxu0 0.0
        %1308 = vmatprep.subr.mxu0 0.0
        %1309 = vmatpush1.msra.mxu0 0.0
        %1310 = vmatprep.subr.mxu0 0.0
        %1311 = vmatpush1.msra.mxu0 0.0
        %1312 = vmatprep.subr.mxu0 0.0
        %1313 = vmatpush1.msra.mxu0 0.0
        %1314 = vmatprep.subr.mxu0 0.0
        %1315 = vmatpush1.msra.mxu0 0.0
        %1316 = vmatprep.subr.mxu0 0.0
        %1317 = vmatpush1.msra.mxu0 0.0
        %1318 = vmatprep.subr.mxu0 0.0
        %1319 = vmatpush1.msra.mxu0 0.0
        %1320 = vmatprep.subr.mxu0 0.0
        %1321 = vmatpush1.msra.mxu0 0.0
        %1322 = vmatprep.subr.mxu0 0.0
        %1323 = vmatpush1.msra.mxu0 0.0
        %1324 = vmatprep.subr.mxu0 0.0
        %1325 = vmatpush1.msra.mxu0 0.0
        %1326 = vmatprep.subr.mxu0 0.0
        %1327 = vmatpush1.msra.mxu0 0.0
        %1328 = vmatprep.subr.mxu0 0.0
        %1329 = vmatpush1.msra.mxu0 0.0
        %1330 = vmatprep.subr.mxu0 0.0
        %1331 = vmatpush1.msra.mxu0 0.0
        %1332 = vmatprep.subr.mxu0 0.0
        %1333 = vmatpush1.msra.mxu0 0.0
        %1334 = vmatprep.subr.mxu0 0.0
        %1335 = vmatpush1.msra.mxu0 0.0
        %1336 = vmatprep.subr.mxu0 %v1217
        %1337 = vmatpush1.msra.mxu0 %v1215
        %1338 = vmatprep.subr.mxu0 0.0
        %1339 = vmatpush2.msra.mxu0 0.0
        %1340 = vmatprep.subr.mxu0 0.0
        %1341 = vmatpush2.msra.mxu0 0.0
        %1342 = vmatprep.subr.mxu0 0.0
        %1343 = vmatpush2.msra.mxu0 0.0
        %1344 = vmatprep.subr.mxu0 0.0
        %1345 = vmatpush2.msra.mxu0 0.0
        %1346 = vmatprep.subr.mxu0 0.0
        %1347 = vmatpush2.msra.mxu0 0.0
        %1348 = vmatprep.subr.mxu0 0.0
        %1349 = vmatpush2.msra.mxu0 0.0
        %1350 = vmatprep.subr.mxu0 0.0
        %1351 = vmatpush2.msra.mxu0 0.0
        %1352 = vmatprep.subr.mxu0 0.0
        %1353 = vmatpush2.msra.mxu0 0.0
        %1354 = vmatprep.subr.mxu0 0.0
        %1355 = vmatpush2.msra.mxu0 0.0
        %1356 = vmatprep.subr.mxu0 0.0
        %1357 = vmatpush2.msra.mxu0 0.0
        %1358 = vmatprep.subr.mxu0 0.0
        %1359 = vmatpush2.msra.mxu0 0.0
        %1360 = vmatprep.subr.mxu0 0.0
        %1361 = vmatpush2.msra.mxu0 0.0
        %1362 = vmatprep.subr.mxu0 0.0
        %1363 = vmatpush2.msra.mxu0 0.0
        %1364 = vmatprep.subr.mxu0 0.0
        %1365 = vmatpush2.msra.mxu0 0.0
        %1366 = vmatprep.subr.mxu0 0.0
        %1367 = vmatpush2.msra.mxu0 0.0
        %1368 = vmatprep.subr.mxu0 0.0
        %1369 = vmatpush2.msra.mxu0 0.0
        %1370 = vmatprep.mubr.f32.mxu0 0.0
        %1371 = vmatmul.mubr.f32.gmra.mxu0 %v1208
        %v1372 = vpop.f32.mrf.mxu0
        %v1373 = vadd.f32 0.0, %v1372
        %v1374 = vpop.f32.mrf.mxu0
        %v1375 = vadd.f32 0.0, %v1374
        %1376 = vdwg.mxu0
        %1377 = vmatprep.subr.mxu0 0.0
        %1378 = vmatpush1.msra.mxu0 0.0
        %1379 = vmatprep.subr.mxu0 0.0
        %1380 = vmatpush1.msra.mxu0 0.0
        %1381 = vmatprep.subr.mxu0 0.0
        %1382 = vmatpush1.msra.mxu0 0.0
        %1383 = vmatprep.subr.mxu0 0.0
        %1384 = vmatpush1.msra.mxu0 0.0
        %1385 = vmatprep.subr.mxu0 0.0
        %1386 = vmatpush1.msra.mxu0 0.0
        %1387 = vmatprep.subr.mxu0 0.0
        %1388 = vmatpush1.msra.mxu0 0.0
        %1389 = vmatprep.subr.mxu0 0.0
        %1390 = vmatpush1.msra.mxu0 0.0
        %1391 = vmatprep.subr.mxu0 0.0
        %1392 = vmatpush1.msra.mxu0 0.0
        %1393 = vmatprep.subr.mxu0 0.0
        %1394 = vmatpush1.msra.mxu0 0.0
        %1395 = vmatprep.subr.mxu0 0.0
        %1396 = vmatpush1.msra.mxu0 0.0
        %1397 = vmatprep.subr.mxu0 0.0
        %1398 = vmatpush1.msra.mxu0 0.0
        %1399 = vmatprep.subr.mxu0 0.0
        %1400 = vmatpush1.msra.mxu0 0.0
        %1401 = vmatprep.subr.mxu0 0.0
        %1402 = vmatpush1.msra.mxu0 0.0
        %1403 = vmatprep.subr.mxu0 0.0
        %1404 = vmatpush1.msra.mxu0 0.0
        %1405 = vmatprep.subr.mxu0 0.0
        %1406 = vmatpush1.msra.mxu0 0.0
        %1407 = vmatprep.subr.mxu0 %v1221
        %1408 = vmatpush1.msra.mxu0 %v1219
        %1409 = vmatprep.subr.mxu0 0.0
        %1410 = vmatpush2.msra.mxu0 0.0
        %1411 = vmatprep.subr.mxu0 0.0
        %1412 = vmatpush2.msra.mxu0 0.0
        %1413 = vmatprep.subr.mxu0 0.0
        %1414 = vmatpush2.msra.mxu0 0.0
        %1415 = vmatprep.subr.mxu0 0.0
        %1416 = vmatpush2.msra.mxu0 0.0
        %1417 = vmatprep.subr.mxu0 0.0
        %1418 = vmatpush2.msra.mxu0 0.0
        %1419 = vmatprep.subr.mxu0 0.0
        %1420 = vmatpush2.msra.mxu0 0.0
        %1421 = vmatprep.subr.mxu0 0.0
        %1422 = vmatpush2.msra.mxu0 0.0
        %1423 = vmatprep.subr.mxu0 0.0
        %1424 = vmatpush2.msra.mxu0 0.0
        %1425 = vmatprep.subr.mxu0 0.0
        %1426 = vmatpush2.msra.mxu0 0.0
        %1427 = vmatprep.subr.mxu0 0.0
        %1428 = vmatpush2.msra.mxu0 0.0
        %1429 = vmatprep.subr.mxu0 0.0
        %1430 = vmatpush2.msra.mxu0 0.0
        %1431 = vmatprep.subr.mxu0 0.0
        %1432 = vmatpush2.msra.mxu0 0.0
        %1433 = vmatprep.subr.mxu0 0.0
        %1434 = vmatpush2.msra.mxu0 0.0
        %1435 = vmatprep.subr.mxu0 0.0
        %1436 = vmatpush2.msra.mxu0 0.0
        %1437 = vmatprep.subr.mxu0 0.0
        %1438 = vmatpush2.msra.mxu0 0.0
        %1439 = vmatprep.subr.mxu0 0.0
        %1440 = vmatpush2.msra.mxu0 0.0
        %1441 = vmatprep.mubr.f32.mxu0 0.0
        %1442 = vmatmul.mubr.f32.gmra.mxu0 %v1208
        %v1443 = vpop.f32.mrf.mxu0
        %v1444 = vadd.f32 0.0, %v1443
        %v1445 = vpop.f32.mrf.mxu0
        %v1446 = vadd.f32 0.0, %v1445
        %1447 = vdwg.mxu0
        %1448 = vmatprep.subr.mxu0 0.0
        %1449 = vmatpush1.msra.mxu0 0.0
        %1450 = vmatprep.subr.mxu0 0.0
        %1451 = vmatpush1.msra.mxu0 0.0
        %1452 = vmatprep.subr.mxu0 0.0
        %1453 = vmatpush1.msra.mxu0 0.0
        %1454 = vmatprep.subr.mxu0 0.0
        %1455 = vmatpush1.msra.mxu0 0.0
        %1456 = vmatprep.subr.mxu0 0.0
        %1457 = vmatpush1.msra.mxu0 0.0
        %1458 = vmatprep.subr.mxu0 0.0
        %1459 = vmatpush1.msra.mxu0 0.0
        %1460 = vmatprep.subr.mxu0 0.0
        %1461 = vmatpush1.msra.mxu0 0.0
        %1462 = vmatprep.subr.mxu0 0.0
        %1463 = vmatpush1.msra.mxu0 0.0
        %1464 = vmatprep.subr.mxu0 0.0
        %1465 = vmatpush1.msra.mxu0 0.0
        %1466 = vmatprep.subr.mxu0 0.0
        %1467 = vmatpush1.msra.mxu0 0.0
        %1468 = vmatprep.subr.mxu0 0.0
        %1469 = vmatpush1.msra.mxu0 0.0
        %1470 = vmatprep.subr.mxu0 0.0
        %1471 = vmatpush1.msra.mxu0 0.0
        %1472 = vmatprep.subr.mxu0 0.0
        %1473 = vmatpush1.msra.mxu0 0.0
        %1474 = vmatprep.subr.mxu0 0.0
        %1475 = vmatpush1.msra.mxu0 0.0
        %1476 = vmatprep.subr.mxu0 0.0
        %1477 = vmatpush1.msra.mxu0 0.0
        %1478 = vmatprep.subr.mxu0 %v1225
        %1479 = vmatpush1.msra.mxu0 %v1223
        %1480 = vmatprep.subr.mxu0 0.0
        %1481 = vmatpush2.msra.mxu0 0.0
        %1482 = vmatprep.subr.mxu0 0.0
        %1483 = vmatpush2.msra.mxu0 0.0
        %1484 = vmatprep.subr.mxu0 0.0
        %1485 = vmatpush2.msra.mxu0 0.0
        %1486 = vmatprep.subr.mxu0 0.0
        %1487 = vmatpush2.msra.mxu0 0.0
        %1488 = vmatprep.subr.mxu0 0.0
        %1489 = vmatpush2.msra.mxu0 0.0
        %1490 = vmatprep.subr.mxu0 0.0
        %1491 = vmatpush2.msra.mxu0 0.0
        %1492 = vmatprep.subr.mxu0 0.0
        %1493 = vmatpush2.msra.mxu0 0.0
        %1494 = vmatprep.subr.mxu0 0.0
        %1495 = vmatpush2.msra.mxu0 0.0
        %1496 = vmatprep.subr.mxu0 0.0
        %1497 = vmatpush2.msra.mxu0 0.0
        %1498 = vmatprep.subr.mxu0 0.0
        %1499 = vmatpush2.msra.mxu0 0.0
        %1500 = vmatprep.subr.mxu0 0.0
        %1501 = vmatpush2.msra.mxu0 0.0
        %1502 = vmatprep.subr.mxu0 0.0
        %1503 = vmatpush2.msra.mxu0 0.0
        %1504 = vmatprep.subr.mxu0 0.0
        %1505 = vmatpush2.msra.mxu0 0.0
        %1506 = vmatprep.subr.mxu0 0.0
        %1507 = vmatpush2.msra.mxu0 0.0
        %1508 = vmatprep.subr.mxu0 0.0
        %1509 = vmatpush2.msra.mxu0 0.0
        %1510 = vmatprep.subr.mxu0 0.0
        %1511 = vmatpush2.msra.mxu0 0.0
        %1512 = vmatprep.mubr.f32.mxu0 0.0
        %1513 = vmatmul.mubr.f32.gmra.mxu0 %v1208
        %v1514 = vpop.f32.mrf.mxu0
        %v1515 = vadd.f32 0.0, %v1514
        %v1516 = vpop.f32.mrf.mxu0
        %v1517 = vadd.f32 0.0, %v1516
        %1518 = vdwg.mxu0
        %1519 = vmatprep.subr.mxu0 0.0
        %1520 = vmatpush1.msra.mxu0 0.0
        %1521 = vmatprep.subr.mxu0 0.0
        %1522 = vmatpush1.msra.mxu0 0.0
        %1523 = vmatprep.subr.mxu0 0.0
        %1524 = vmatpush1.msra.mxu0 0.0
        %1525 = vmatprep.subr.mxu0 0.0
        %1526 = vmatpush1.msra.mxu0 0.0
        %1527 = vmatprep.subr.mxu0 0.0
        %1528 = vmatpush1.msra.mxu0 0.0
        %1529 = vmatprep.subr.mxu0 0.0
        %1530 = vmatpush1.msra.mxu0 0.0
        %1531 = vmatprep.subr.mxu0 0.0
        %1532 = vmatpush1.msra.mxu0 0.0
        %1533 = vmatprep.subr.mxu0 0.0
        %1534 = vmatpush1.msra.mxu0 0.0
        %1535 = vmatprep.subr.mxu0 0.0
        %1536 = vmatpush1.msra.mxu0 0.0
        %1537 = vmatprep.subr.mxu0 0.0
        %1538 = vmatpush1.msra.mxu0 0.0
        %1539 = vmatprep.subr.mxu0 0.0
        %1540 = vmatpush1.msra.mxu0 0.0
        %1541 = vmatprep.subr.mxu0 0.0
        %1542 = vmatpush1.msra.mxu0 0.0
        %1543 = vmatprep.subr.mxu0 0.0
        %1544 = vmatpush1.msra.mxu0 0.0
        %1545 = vmatprep.subr.mxu0 0.0
        %1546 = vmatpush1.msra.mxu0 0.0
        %1547 = vmatprep.subr.mxu0 0.0
        %1548 = vmatpush1.msra.mxu0 0.0
        %1549 = vmatprep.subr.mxu0 %v1229
        %1550 = vmatpush1.msra.mxu0 %v1227
        %1551 = vmatprep.subr.mxu0 0.0
        %1552 = vmatpush2.msra.mxu0 0.0
        %1553 = vmatprep.subr.mxu0 0.0
        %1554 = vmatpush2.msra.mxu0 0.0
        %1555 = vmatprep.subr.mxu0 0.0
        %1556 = vmatpush2.msra.mxu0 0.0
        %1557 = vmatprep.subr.mxu0 0.0
        %1558 = vmatpush2.msra.mxu0 0.0
        %1559 = vmatprep.subr.mxu0 0.0
        %1560 = vmatpush2.msra.mxu0 0.0
        %1561 = vmatprep.subr.mxu0 0.0
        %1562 = vmatpush2.msra.mxu0 0.0
        %1563 = vmatprep.subr.mxu0 0.0
        %1564 = vmatpush2.msra.mxu0 0.0
        %1565 = vmatprep.subr.mxu0 0.0
        %1566 = vmatpush2.msra.mxu0 0.0
        %1567 = vmatprep.subr.mxu0 0.0
        %1568 = vmatpush2.msra.mxu0 0.0
        %1569 = vmatprep.subr.mxu0 0.0
        %1570 = vmatpush2.msra.mxu0 0.0
        %1571 = vmatprep.subr.mxu0 0.0
        %1572 = vmatpush2.msra.mxu0 0.0
        %1573 = vmatprep.subr.mxu0 0.0
        %1574 = vmatpush2.msra.mxu0 0.0
        %1575 = vmatprep.subr.mxu0 0.0
        %1576 = vmatpush2.msra.mxu0 0.0
        %1577 = vmatprep.subr.mxu0 0.0
        %1578 = vmatpush2.msra.mxu0 0.0
        %1579 = vmatprep.subr.mxu0 0.0
        %1580 = vmatpush2.msra.mxu0 0.0
        %1581 = vmatprep.subr.mxu0 0.0
        %1582 = vmatpush2.msra.mxu0 0.0
        %1583 = vmatprep.mubr.f32.mxu0 0.0
        %1584 = vmatmul.mubr.f32.gmra.mxu0 %v1208
        %v1585 = vpop.f32.mrf.mxu0
        %v1586 = vadd.f32 0.0, %v1585
        %v1587 = vpop.f32.mrf.mxu0
        %v1588 = vadd.f32 0.0, %v1587
        %1589 = vdwg.mxu0
        %1590 = vmatprep.subr.mxu0 0.0
        %1591 = vmatpush1.msra.mxu0 0.0
        %1592 = vmatprep.subr.mxu0 0.0
        %1593 = vmatpush1.msra.mxu0 0.0
        %1594 = vmatprep.subr.mxu0 0.0
        %1595 = vmatpush1.msra.mxu0 0.0
        %1596 = vmatprep.subr.mxu0 0.0
        %1597 = vmatpush1.msra.mxu0 0.0
        %1598 = vmatprep.subr.mxu0 0.0
        %1599 = vmatpush1.msra.mxu0 0.0
        %1600 = vmatprep.subr.mxu0 0.0
        %1601 = vmatpush1.msra.mxu0 0.0
        %1602 = vmatprep.subr.mxu0 0.0
        %1603 = vmatpush1.msra.mxu0 0.0
        %1604 = vmatprep.subr.mxu0 0.0
        %1605 = vmatpush1.msra.mxu0 0.0
        %1606 = vmatprep.subr.mxu0 0.0
        %1607 = vmatpush1.msra.mxu0 0.0
        %1608 = vmatprep.subr.mxu0 0.0
        %1609 = vmatpush1.msra.mxu0 0.0
        %1610 = vmatprep.subr.mxu0 0.0
        %1611 = vmatpush1.msra.mxu0 0.0
        %1612 = vmatprep.subr.mxu0 0.0
        %1613 = vmatpush1.msra.mxu0 0.0
        %1614 = vmatprep.subr.mxu0 0.0
        %1615 = vmatpush1.msra.mxu0 0.0
        %1616 = vmatprep.subr.mxu0 0.0
        %1617 = vmatpush1.msra.mxu0 0.0
        %1618 = vmatprep.subr.mxu0 0.0
        %1619 = vmatpush1.msra.mxu0 0.0
        %1620 = vmatprep.subr.mxu0 %v1233
        %1621 = vmatpush1.msra.mxu0 %v1231
        %1622 = vmatprep.subr.mxu0 0.0
        %1623 = vmatpush2.msra.mxu0 0.0
        %1624 = vmatprep.subr.mxu0 0.0
        %1625 = vmatpush2.msra.mxu0 0.0
        %1626 = vmatprep.subr.mxu0 0.0
        %1627 = vmatpush2.msra.mxu0 0.0
        %1628 = vmatprep.subr.mxu0 0.0
        %1629 = vmatpush2.msra.mxu0 0.0
        %1630 = vmatprep.subr.mxu0 0.0
        %1631 = vmatpush2.msra.mxu0 0.0
        %1632 = vmatprep.subr.mxu0 0.0
        %1633 = vmatpush2.msra.mxu0 0.0
        %1634 = vmatprep.subr.mxu0 0.0
        %1635 = vmatpush2.msra.mxu0 0.0
        %1636 = vmatprep.subr.mxu0 0.0
        %1637 = vmatpush2.msra.mxu0 0.0
        %1638 = vmatprep.subr.mxu0 0.0
        %1639 = vmatpush2.msra.mxu0 0.0
        %1640 = vmatprep.subr.mxu0 0.0
        %1641 = vmatpush2.msra.mxu0 0.0
        %1642 = vmatprep.subr.mxu0 0.0
        %1643 = vmatpush2.msra.mxu0 0.0
        %1644 = vmatprep.subr.mxu0 0.0
        %1645 = vmatpush2.msra.mxu0 0.0
        %1646 = vmatprep.subr.mxu0 0.0
        %1647 = vmatpush2.msra.mxu0 0.0
        %1648 = vmatprep.subr.mxu0 0.0
        %1649 = vmatpush2.msra.mxu0 0.0
        %1650 = vmatprep.subr.mxu0 0.0
        %1651 = vmatpush2.msra.mxu0 0.0
        %1652 = vmatprep.subr.mxu0 0.0
        %1653 = vmatpush2.msra.mxu0 0.0
        %1654 = vmatprep.mubr.f32.mxu0 0.0
        %1655 = vmatmul.mubr.f32.gmra.mxu0 %v1208
        %v1656 = vpop.f32.mrf.mxu0
        %v1657 = vadd.f32 0.0, %v1656
        %v1658 = vpop.f32.mrf.mxu0
        %v1659 = vadd.f32 0.0, %v1658
        %1660 = vdwg.mxu0
        %1661 = vst [vmem:[%s867] sm:$0xff] %v1302
        %1662 = vst [vmem:[%s867 + $0x8] sm:$0xff] %v1304
        %1663 = vst [vmem:[%s867 + $0x10] sm:$0xff] %v1373
        %1664 = vst [vmem:[%s867 + $0x18] sm:$0xff] %v1375
        %1665 = vst [vmem:[%s867 + $0x20] sm:$0xff] %v1444
        %1666 = vst [vmem:[%s867 + $0x28] sm:$0xff] %v1446
        %1667 = vst [vmem:[%s867 + $0x30] sm:$0xff] %v1515
        %1668 = vst [vmem:[%s867 + $0x38] sm:$0xff] %v1517
        %1669 = vst [vmem:[%s867 + $0x40] sm:$0xff] %v1586
        %1670 = vst [vmem:[%s867 + $0x48] sm:$0xff] %v1588
        %1671 = vst [vmem:[%s867 + $0x50] sm:$0xff] %v1657
        %1672 = vst [vmem:[%s867 + $0x58] sm:$0xff] %v1659
        %v1673 = vld [vmem:[%s13] sm:$0xff]
        %v1674 = vld [vmem:[%s13 + $0x8] sm:$0xff]
        %v1675 = vld [vmem:[%s13 + $0x10] sm:$0xff]
        %v1676 = vld [vmem:[%s13 + $0x18] sm:$0xff]
        %v1681 = vcombine.high %v1673, %v1673
        %v1682 = vcombine.high %v1674, %v1674
        %v1683 = vcombine.high %v1675, %v1675
        %v1684 = vcombine.high %v1676, %v1676
        %v1685 = vsel %vm1210, %v1673, 0
        %v1687 = vsel %vm1210, %v1681, 0
        %v1689 = vsel %vm1210, %v1674, 0
        %v1691 = vsel %vm1210, %v1682, 0
        %v1693 = vsel %vm1210, %v1675, 0
        %v1695 = vsel %vm1210, %v1683, 0
        %v1697 = vsel %vm1210, %v1676, 0
        %v1699 = vsel %vm1210, %v1684, 0
        %1701 = vmatprep.subr.mxu0 0.0
        %1702 = vmatpush1.msra.mxu0 0.0
        %1703 = vmatprep.subr.mxu0 0.0
        %1704 = vmatpush1.msra.mxu0 0.0
        %1705 = vmatprep.subr.mxu0 0.0
        %1706 = vmatpush1.msra.mxu0 0.0
        %1707 = vmatprep.subr.mxu0 0.0
        %1708 = vmatpush1.msra.mxu0 0.0
        %1709 = vmatprep.subr.mxu0 0.0
        %1710 = vmatpush1.msra.mxu0 0.0
        %1711 = vmatprep.subr.mxu0 0.0
        %1712 = vmatpush1.msra.mxu0 0.0
        %1713 = vmatprep.subr.mxu0 0.0
        %1714 = vmatpush1.msra.mxu0 0.0
        %1715 = vmatprep.subr.mxu0 0.0
        %1716 = vmatpush1.msra.mxu0 0.0
        %1717 = vmatprep.subr.mxu0 0.0
        %1718 = vmatpush1.msra.mxu0 0.0
        %1719 = vmatprep.subr.mxu0 0.0
        %1720 = vmatpush1.msra.mxu0 0.0
        %1721 = vmatprep.subr.mxu0 0.0
        %1722 = vmatpush1.msra.mxu0 0.0
        %1723 = vmatprep.subr.mxu0 0.0
        %1724 = vmatpush1.msra.mxu0 0.0
        %1725 = vmatprep.subr.mxu0 0.0
        %1726 = vmatpush1.msra.mxu0 0.0
        %1727 = vmatprep.subr.mxu0 0.0
        %1728 = vmatpush1.msra.mxu0 0.0
        %1729 = vmatprep.subr.mxu0 0.0
        %1730 = vmatpush1.msra.mxu0 0.0
        %1731 = vmatprep.subr.mxu0 %v1687
        %1732 = vmatpush1.msra.mxu0 %v1685
        %1733 = vmatprep.subr.mxu0 0.0
        %1734 = vmatpush2.msra.mxu0 0.0
        %1735 = vmatprep.subr.mxu0 0.0
        %1736 = vmatpush2.msra.mxu0 0.0
        %1737 = vmatprep.subr.mxu0 0.0
        %1738 = vmatpush2.msra.mxu0 0.0
        %1739 = vmatprep.subr.mxu0 0.0
        %1740 = vmatpush2.msra.mxu0 0.0
        %1741 = vmatprep.subr.mxu0 0.0
        %1742 = vmatpush2.msra.mxu0 0.0
        %1743 = vmatprep.subr.mxu0 0.0
        %1744 = vmatpush2.msra.mxu0 0.0
        %1745 = vmatprep.subr.mxu0 0.0
        %1746 = vmatpush2.msra.mxu0 0.0
        %1747 = vmatprep.subr.mxu0 0.0
        %1748 = vmatpush2.msra.mxu0 0.0
        %1749 = vmatprep.subr.mxu0 0.0
        %1750 = vmatpush2.msra.mxu0 0.0
        %1751 = vmatprep.subr.mxu0 0.0
        %1752 = vmatpush2.msra.mxu0 0.0
        %1753 = vmatprep.subr.mxu0 0.0
        %1754 = vmatpush2.msra.mxu0 0.0
        %1755 = vmatprep.subr.mxu0 0.0
        %1756 = vmatpush2.msra.mxu0 0.0
        %1757 = vmatprep.subr.mxu0 0.0
        %1758 = vmatpush2.msra.mxu0 0.0
        %1759 = vmatprep.subr.mxu0 0.0
        %1760 = vmatpush2.msra.mxu0 0.0
        %1761 = vmatprep.subr.mxu0 0.0
        %1762 = vmatpush2.msra.mxu0 0.0
        %1763 = vmatprep.subr.mxu0 0.0
        %1764 = vmatpush2.msra.mxu0 0.0
        %1765 = vmatprep.mubr.f32.mxu0 0.0
        %1766 = vmatmul.mubr.f32.gmra.mxu0 %v1208
        %v1767 = vpop.f32.mrf.mxu0
        %v1768 = vadd.f32 0.0, %v1767
        %v1769 = vpop.f32.mrf.mxu0
        %v1770 = vadd.f32 0.0, %v1769
        %1771 = vdwg.mxu0
        %1772 = vmatprep.subr.mxu0 0.0
        %1773 = vmatpush1.msra.mxu0 0.0
        %1774 = vmatprep.subr.mxu0 0.0
        %1775 = vmatpush1.msra.mxu0 0.0
        %1776 = vmatprep.subr.mxu0 0.0
        %1777 = vmatpush1.msra.mxu0 0.0
        %1778 = vmatprep.subr.mxu0 0.0
        %1779 = vmatpush1.msra.mxu0 0.0
        %1780 = vmatprep.subr.mxu0 0.0
        %1781 = vmatpush1.msra.mxu0 0.0
        %1782 = vmatprep.subr.mxu0 0.0
        %1783 = vmatpush1.msra.mxu0 0.0
        %1784 = vmatprep.subr.mxu0 0.0
        %1785 = vmatpush1.msra.mxu0 0.0
        %1786 = vmatprep.subr.mxu0 0.0
        %1787 = vmatpush1.msra.mxu0 0.0
        %1788 = vmatprep.subr.mxu0 0.0
        %1789 = vmatpush1.msra.mxu0 0.0
        %1790 = vmatprep.subr.mxu0 0.0
        %1791 = vmatpush1.msra.mxu0 0.0
        %1792 = vmatprep.subr.mxu0 0.0
        %1793 = vmatpush1.msra.mxu0 0.0
        %1794 = vmatprep.subr.mxu0 0.0
        %1795 = vmatpush1.msra.mxu0 0.0
        %1796 = vmatprep.subr.mxu0 0.0
        %1797 = vmatpush1.msra.mxu0 0.0
        %1798 = vmatprep.subr.mxu0 0.0
        %1799 = vmatpush1.msra.mxu0 0.0
        %1800 = vmatprep.subr.mxu0 0.0
        %1801 = vmatpush1.msra.mxu0 0.0
        %1802 = vmatprep.subr.mxu0 %v1691
        %1803 = vmatpush1.msra.mxu0 %v1689
        %1804 = vmatprep.subr.mxu0 0.0
        %1805 = vmatpush2.msra.mxu0 0.0
        %1806 = vmatprep.subr.mxu0 0.0
        %1807 = vmatpush2.msra.mxu0 0.0
        %1808 = vmatprep.subr.mxu0 0.0
        %1809 = vmatpush2.msra.mxu0 0.0
        %1810 = vmatprep.subr.mxu0 0.0
        %1811 = vmatpush2.msra.mxu0 0.0
        %1812 = vmatprep.subr.mxu0 0.0
        %1813 = vmatpush2.msra.mxu0 0.0
        %1814 = vmatprep.subr.mxu0 0.0
        %1815 = vmatpush2.msra.mxu0 0.0
        %1816 = vmatprep.subr.mxu0 0.0
        %1817 = vmatpush2.msra.mxu0 0.0
        %1818 = vmatprep.subr.mxu0 0.0
        %1819 = vmatpush2.msra.mxu0 0.0
        %1820 = vmatprep.subr.mxu0 0.0
        %1821 = vmatpush2.msra.mxu0 0.0
        %1822 = vmatprep.subr.mxu0 0.0
        %1823 = vmatpush2.msra.mxu0 0.0
        %1824 = vmatprep.subr.mxu0 0.0
        %1825 = vmatpush2.msra.mxu0 0.0
        %1826 = vmatprep.subr.mxu0 0.0
        %1827 = vmatpush2.msra.mxu0 0.0
        %1828 = vmatprep.subr.mxu0 0.0
        %1829 = vmatpush2.msra.mxu0 0.0
        %1830 = vmatprep.subr.mxu0 0.0
        %1831 = vmatpush2.msra.mxu0 0.0
        %1832 = vmatprep.subr.mxu0 0.0
        %1833 = vmatpush2.msra.mxu0 0.0
        %1834 = vmatprep.subr.mxu0 0.0
        %1835 = vmatpush2.msra.mxu0 0.0
        %1836 = vmatprep.mubr.f32.mxu0 0.0
        %1837 = vmatmul.mubr.f32.gmra.mxu0 %v1208
        %v1838 = vpop.f32.mrf.mxu0
        %v1839 = vadd.f32 0.0, %v1838
        %v1840 = vpop.f32.mrf.mxu0
        %v1841 = vadd.f32 0.0, %v1840
        %1842 = vdwg.mxu0
        %1843 = vmatprep.subr.mxu0 0.0
        %1844 = vmatpush1.msra.mxu0 0.0
        %1845 = vmatprep.subr.mxu0 0.0
        %1846 = vmatpush1.msra.mxu0 0.0
        %1847 = vmatprep.subr.mxu0 0.0
        %1848 = vmatpush1.msra.mxu0 0.0
        %1849 = vmatprep.subr.mxu0 0.0
        %1850 = vmatpush1.msra.mxu0 0.0
        %1851 = vmatprep.subr.mxu0 0.0
        %1852 = vmatpush1.msra.mxu0 0.0
        %1853 = vmatprep.subr.mxu0 0.0
        %1854 = vmatpush1.msra.mxu0 0.0
        %1855 = vmatprep.subr.mxu0 0.0
        %1856 = vmatpush1.msra.mxu0 0.0
        %1857 = vmatprep.subr.mxu0 0.0
        %1858 = vmatpush1.msra.mxu0 0.0
        %1859 = vmatprep.subr.mxu0 0.0
        %1860 = vmatpush1.msra.mxu0 0.0
        %1861 = vmatprep.subr.mxu0 0.0
        %1862 = vmatpush1.msra.mxu0 0.0
        %1863 = vmatprep.subr.mxu0 0.0
        %1864 = vmatpush1.msra.mxu0 0.0
        %1865 = vmatprep.subr.mxu0 0.0
        %1866 = vmatpush1.msra.mxu0 0.0
        %1867 = vmatprep.subr.mxu0 0.0
        %1868 = vmatpush1.msra.mxu0 0.0
        %1869 = vmatprep.subr.mxu0 0.0
        %1870 = vmatpush1.msra.mxu0 0.0
        %1871 = vmatprep.subr.mxu0 0.0
        %1872 = vmatpush1.msra.mxu0 0.0
        %1873 = vmatprep.subr.mxu0 %v1695
        %1874 = vmatpush1.msra.mxu0 %v1693
        %1875 = vmatprep.subr.mxu0 0.0
        %1876 = vmatpush2.msra.mxu0 0.0
        %1877 = vmatprep.subr.mxu0 0.0
        %1878 = vmatpush2.msra.mxu0 0.0
        %1879 = vmatprep.subr.mxu0 0.0
        %1880 = vmatpush2.msra.mxu0 0.0
        %1881 = vmatprep.subr.mxu0 0.0
        %1882 = vmatpush2.msra.mxu0 0.0
        %1883 = vmatprep.subr.mxu0 0.0
        %1884 = vmatpush2.msra.mxu0 0.0
        %1885 = vmatprep.subr.mxu0 0.0
        %1886 = vmatpush2.msra.mxu0 0.0
        %1887 = vmatprep.subr.mxu0 0.0
        %1888 = vmatpush2.msra.mxu0 0.0
        %1889 = vmatprep.subr.mxu0 0.0
        %1890 = vmatpush2.msra.mxu0 0.0
        %1891 = vmatprep.subr.mxu0 0.0
        %1892 = vmatpush2.msra.mxu0 0.0
        %1893 = vmatprep.subr.mxu0 0.0
        %1894 = vmatpush2.msra.mxu0 0.0
        %1895 = vmatprep.subr.mxu0 0.0
        %1896 = vmatpush2.msra.mxu0 0.0
        %1897 = vmatprep.subr.mxu0 0.0
        %1898 = vmatpush2.msra.mxu0 0.0
        %1899 = vmatprep.subr.mxu0 0.0
        %1900 = vmatpush2.msra.mxu0 0.0
        %1901 = vmatprep.subr.mxu0 0.0
        %1902 = vmatpush2.msra.mxu0 0.0
        %1903 = vmatprep.subr.mxu0 0.0
        %1904 = vmatpush2.msra.mxu0 0.0
        %1905 = vmatprep.subr.mxu0 0.0
        %1906 = vmatpush2.msra.mxu0 0.0
        %1907 = vmatprep.mubr.f32.mxu0 0.0
        %1908 = vmatmul.mubr.f32.gmra.mxu0 %v1208
        %v1909 = vpop.f32.mrf.mxu0
        %v1910 = vadd.f32 0.0, %v1909
        %v1911 = vpop.f32.mrf.mxu0
        %v1912 = vadd.f32 0.0, %v1911
        %1913 = vdwg.mxu0
        %1914 = vmatprep.subr.mxu0 0.0
        %1915 = vmatpush1.msra.mxu0 0.0
        %1916 = vmatprep.subr.mxu0 0.0
        %1917 = vmatpush1.msra.mxu0 0.0
        %1918 = vmatprep.subr.mxu0 0.0
        %1919 = vmatpush1.msra.mxu0 0.0
        %1920 = vmatprep.subr.mxu0 0.0
        %1921 = vmatpush1.msra.mxu0 0.0
        %1922 = vmatprep.subr.mxu0 0.0
        %1923 = vmatpush1.msra.mxu0 0.0
        %1924 = vmatprep.subr.mxu0 0.0
        %1925 = vmatpush1.msra.mxu0 0.0
        %1926 = vmatprep.subr.mxu0 0.0
        %1927 = vmatpush1.msra.mxu0 0.0
        %1928 = vmatprep.subr.mxu0 0.0
        %1929 = vmatpush1.msra.mxu0 0.0
        %1930 = vmatprep.subr.mxu0 0.0
        %1931 = vmatpush1.msra.mxu0 0.0
        %1932 = vmatprep.subr.mxu0 0.0
        %1933 = vmatpush1.msra.mxu0 0.0
        %1934 = vmatprep.subr.mxu0 0.0
        %1935 = vmatpush1.msra.mxu0 0.0
        %1936 = vmatprep.subr.mxu0 0.0
        %1937 = vmatpush1.msra.mxu0 0.0
        %1938 = vmatprep.subr.mxu0 0.0
        %1939 = vmatpush1.msra.mxu0 0.0
        %1940 = vmatprep.subr.mxu0 0.0
        %1941 = vmatpush1.msra.mxu0 0.0
        %1942 = vmatprep.subr.mxu0 0.0
        %1943 = vmatpush1.msra.mxu0 0.0
        %1944 = vmatprep.subr.mxu0 %v1699
        %1945 = vmatpush1.msra.mxu0 %v1697
        %1946 = vmatprep.subr.mxu0 0.0
        %1947 = vmatpush2.msra.mxu0 0.0
        %1948 = vmatprep.subr.mxu0 0.0
        %1949 = vmatpush2.msra.mxu0 0.0
        %1950 = vmatprep.subr.mxu0 0.0
        %1951 = vmatpush2.msra.mxu0 0.0
        %1952 = vmatprep.subr.mxu0 0.0
        %1953 = vmatpush2.msra.mxu0 0.0
        %1954 = vmatprep.subr.mxu0 0.0
        %1955 = vmatpush2.msra.mxu0 0.0
        %1956 = vmatprep.subr.mxu0 0.0
        %1957 = vmatpush2.msra.mxu0 0.0
        %1958 = vmatprep.subr.mxu0 0.0
        %1959 = vmatpush2.msra.mxu0 0.0
        %1960 = vmatprep.subr.mxu0 0.0
        %1961 = vmatpush2.msra.mxu0 0.0
        %1962 = vmatprep.subr.mxu0 0.0
        %1963 = vmatpush2.msra.mxu0 0.0
        %1964 = vmatprep.subr.mxu0 0.0
        %1965 = vmatpush2.msra.mxu0 0.0
        %1966 = vmatprep.subr.mxu0 0.0
        %1967 = vmatpush2.msra.mxu0 0.0
        %1968 = vmatprep.subr.mxu0 0.0
        %1969 = vmatpush2.msra.mxu0 0.0
        %1970 = vmatprep.subr.mxu0 0.0
        %1971 = vmatpush2.msra.mxu0 0.0
        %1972 = vmatprep.subr.mxu0 0.0
        %1973 = vmatpush2.msra.mxu0 0.0
        %1974 = vmatprep.subr.mxu0 0.0
        %1975 = vmatpush2.msra.mxu0 0.0
        %1976 = vmatprep.subr.mxu0 0.0
        %1977 = vmatpush2.msra.mxu0 0.0
        %1978 = vmatprep.mubr.f32.mxu0 0.0
        %1979 = vmatmul.mubr.f32.gmra.mxu0 %v1208
        %v1980 = vpop.f32.mrf.mxu0
        %v1981 = vadd.f32 0.0, %v1980
        %v1982 = vpop.f32.mrf.mxu0
        %v1983 = vadd.f32 0.0, %v1982
        %1984 = vdwg.mxu0
        %1985 = vst [vmem:[%s872] sm:$0xff] %v1768
        %1986 = vst [vmem:[%s872 + $0x8] sm:$0xff] %v1770
        %1987 = vst [vmem:[%s872 + $0x10] sm:$0xff] %v1839
        %1988 = vst [vmem:[%s872 + $0x18] sm:$0xff] %v1841
        %1989 = vst [vmem:[%s872 + $0x20] sm:$0xff] %v1910
        %1990 = vst [vmem:[%s872 + $0x28] sm:$0xff] %v1912
        %1991 = vst [vmem:[%s872 + $0x30] sm:$0xff] %v1981
        %1992 = vst [vmem:[%s872 + $0x38] sm:$0xff] %v1983
        %v1993 = vld [vmem:[%s14] sm:$0xff]
        %v1994 = vld [vmem:[%s14 + $0x8] sm:$0xff]
        %v1997 = vcombine.high %v1993, %v1993
        %v1998 = vcombine.high %v1994, %v1994
        %v1999 = vsel %vm1210, %v1993, 0
        %v2001 = vsel %vm1210, %v1997, 0
        %v2003 = vsel %vm1210, %v1994, 0
        %v2005 = vsel %vm1210, %v1998, 0
        %2007 = vmatprep.subr.mxu0 0.0
        %2008 = vmatpush1.msra.mxu0 0.0
        %2009 = vmatprep.subr.mxu0 0.0
        %2010 = vmatpush1.msra.mxu0 0.0
        %2011 = vmatprep.subr.mxu0 0.0
        %2012 = vmatpush1.msra.mxu0 0.0
        %2013 = vmatprep.subr.mxu0 0.0
        %2014 = vmatpush1.msra.mxu0 0.0
        %2015 = vmatprep.subr.mxu0 0.0
        %2016 = vmatpush1.msra.mxu0 0.0
        %2017 = vmatprep.subr.mxu0 0.0
        %2018 = vmatpush1.msra.mxu0 0.0
        %2019 = vmatprep.subr.mxu0 0.0
        %2020 = vmatpush1.msra.mxu0 0.0
        %2021 = vmatprep.subr.mxu0 0.0
        %2022 = vmatpush1.msra.mxu0 0.0
        %2023 = vmatprep.subr.mxu0 0.0
        %2024 = vmatpush1.msra.mxu0 0.0
        %2025 = vmatprep.subr.mxu0 0.0
        %2026 = vmatpush1.msra.mxu0 0.0
        %2027 = vmatprep.subr.mxu0 0.0
        %2028 = vmatpush1.msra.mxu0 0.0
        %2029 = vmatprep.subr.mxu0 0.0
        %2030 = vmatpush1.msra.mxu0 0.0
        %2031 = vmatprep.subr.mxu0 0.0
        %2032 = vmatpush1.msra.mxu0 0.0
        %2033 = vmatprep.subr.mxu0 0.0
        %2034 = vmatpush1.msra.mxu0 0.0
        %2035 = vmatprep.subr.mxu0 0.0
        %2036 = vmatpush1.msra.mxu0 0.0
        %2037 = vmatprep.subr.mxu0 %v2001
        %2038 = vmatpush1.msra.mxu0 %v1999
        %2039 = vmatprep.subr.mxu0 0.0
        %2040 = vmatpush2.msra.mxu0 0.0
        %2041 = vmatprep.subr.mxu0 0.0
        %2042 = vmatpush2.msra.mxu0 0.0
        %2043 = vmatprep.subr.mxu0 0.0
        %2044 = vmatpush2.msra.mxu0 0.0
        %2045 = vmatprep.subr.mxu0 0.0
        %2046 = vmatpush2.msra.mxu0 0.0
        %2047 = vmatprep.subr.mxu0 0.0
        %2048 = vmatpush2.msra.mxu0 0.0
        %2049 = vmatprep.subr.mxu0 0.0
        %2050 = vmatpush2.msra.mxu0 0.0
        %2051 = vmatprep.subr.mxu0 0.0
        %2052 = vmatpush2.msra.mxu0 0.0
        %2053 = vmatprep.subr.mxu0 0.0
        %2054 = vmatpush2.msra.mxu0 0.0
        %2055 = vmatprep.subr.mxu0 0.0
        %2056 = vmatpush2.msra.mxu0 0.0
        %2057 = vmatprep.subr.mxu0 0.0
        %2058 = vmatpush2.msra.mxu0 0.0
        %2059 = vmatprep.subr.mxu0 0.0
        %2060 = vmatpush2.msra.mxu0 0.0
        %2061 = vmatprep.subr.mxu0 0.0
        %2062 = vmatpush2.msra.mxu0 0.0
        %2063 = vmatprep.subr.mxu0 0.0
        %2064 = vmatpush2.msra.mxu0 0.0
        %2065 = vmatprep.subr.mxu0 0.0
        %2066 = vmatpush2.msra.mxu0 0.0
        %2067 = vmatprep.subr.mxu0 0.0
        %2068 = vmatpush2.msra.mxu0 0.0
        %2069 = vmatprep.subr.mxu0 0.0
        %2070 = vmatpush2.msra.mxu0 0.0
        %2071 = vmatprep.mubr.f32.mxu0 0.0
        %2072 = vmatmul.mubr.f32.gmra.mxu0 %v1208
        %v2073 = vpop.f32.mrf.mxu0
        %v2074 = vadd.f32 0.0, %v2073
        %v2075 = vpop.f32.mrf.mxu0
        %v2076 = vadd.f32 0.0, %v2075
        %2077 = vdwg.mxu0
        %2078 = vmatprep.subr.mxu0 0.0
        %2079 = vmatpush1.msra.mxu0 0.0
        %2080 = vmatprep.subr.mxu0 0.0
        %2081 = vmatpush1.msra.mxu0 0.0
        %2082 = vmatprep.subr.mxu0 0.0
        %2083 = vmatpush1.msra.mxu0 0.0
        %2084 = vmatprep.subr.mxu0 0.0
        %2085 = vmatpush1.msra.mxu0 0.0
        %2086 = vmatprep.subr.mxu0 0.0
        %2087 = vmatpush1.msra.mxu0 0.0
        %2088 = vmatprep.subr.mxu0 0.0
        %2089 = vmatpush1.msra.mxu0 0.0
        %2090 = vmatprep.subr.mxu0 0.0
        %2091 = vmatpush1.msra.mxu0 0.0
        %2092 = vmatprep.subr.mxu0 0.0
        %2093 = vmatpush1.msra.mxu0 0.0
        %2094 = vmatprep.subr.mxu0 0.0
        %2095 = vmatpush1.msra.mxu0 0.0
        %2096 = vmatprep.subr.mxu0 0.0
        %2097 = vmatpush1.msra.mxu0 0.0
        %2098 = vmatprep.subr.mxu0 0.0
        %2099 = vmatpush1.msra.mxu0 0.0
        %2100 = vmatprep.subr.mxu0 0.0
        %2101 = vmatpush1.msra.mxu0 0.0
        %2102 = vmatprep.subr.mxu0 0.0
        %2103 = vmatpush1.msra.mxu0 0.0
        %2104 = vmatprep.subr.mxu0 0.0
        %2105 = vmatpush1.msra.mxu0 0.0
        %2106 = vmatprep.subr.mxu0 0.0
        %2107 = vmatpush1.msra.mxu0 0.0
        %2108 = vmatprep.subr.mxu0 %v2005
        %2109 = vmatpush1.msra.mxu0 %v2003
        %2110 = vmatprep.subr.mxu0 0.0
        %2111 = vmatpush2.msra.mxu0 0.0
        %2112 = vmatprep.subr.mxu0 0.0
        %2113 = vmatpush2.msra.mxu0 0.0
        %2114 = vmatprep.subr.mxu0 0.0
        %2115 = vmatpush2.msra.mxu0 0.0
        %2116 = vmatprep.subr.mxu0 0.0
        %2117 = vmatpush2.msra.mxu0 0.0
        %2118 = vmatprep.subr.mxu0 0.0
        %2119 = vmatpush2.msra.mxu0 0.0
        %2120 = vmatprep.subr.mxu0 0.0
        %2121 = vmatpush2.msra.mxu0 0.0
        %2122 = vmatprep.subr.mxu0 0.0
        %2123 = vmatpush2.msra.mxu0 0.0
        %2124 = vmatprep.subr.mxu0 0.0
        %2125 = vmatpush2.msra.mxu0 0.0
        %2126 = vmatprep.subr.mxu0 0.0
        %2127 = vmatpush2.msra.mxu0 0.0
        %2128 = vmatprep.subr.mxu0 0.0
        %2129 = vmatpush2.msra.mxu0 0.0
        %2130 = vmatprep.subr.mxu0 0.0
        %2131 = vmatpush2.msra.mxu0 0.0
        %2132 = vmatprep.subr.mxu0 0.0
        %2133 = vmatpush2.msra.mxu0 0.0
        %2134 = vmatprep.subr.mxu0 0.0
        %2135 = vmatpush2.msra.mxu0 0.0
        %2136 = vmatprep.subr.mxu0 0.0
        %2137 = vmatpush2.msra.mxu0 0.0
        %2138 = vmatprep.subr.mxu0 0.0
        %2139 = vmatpush2.msra.mxu0 0.0
        %2140 = vmatprep.subr.mxu0 0.0
        %2141 = vmatpush2.msra.mxu0 0.0
        %2142 = vmatprep.mubr.f32.mxu0 0.0
        %2143 = vmatmul.mubr.f32.gmra.mxu0 %v1208
        %v2144 = vpop.f32.mrf.mxu0
        %v2145 = vadd.f32 0.0, %v2144
        %v2146 = vpop.f32.mrf.mxu0
        %v2147 = vadd.f32 0.0, %v2146
        %2148 = vdwg.mxu0
        %2149 = vst [vmem:[%s877] sm:$0xff] %v2074
        %2150 = vst [vmem:[%s877 + $0x8] sm:$0xff] %v2076
        %2151 = vst [vmem:[%s877 + $0x10] sm:$0xff] %v2145
        %2152 = vst [vmem:[%s877 + $0x18] sm:$0xff] %v2147
        %v2153 = vld [vmem:[%s18] sm:$0xf]
        %v2154 = vld [vmem:[%s19] sm:$0xf]
        %v2155 = vld [vmem:[%s20] sm:$0xf]
        %v2156 = vld [vmem:[%s15] sm:$0xff]
        %v2157 = vld [vmem:[%s15 + $0x8] sm:$0xff]
        %v2158 = vld [vmem:[%s15 + $0x10] sm:$0xff]
        %v2159 = vld [vmem:[%s15 + $0x18] sm:$0xff]
        %v2160 = vld [vmem:[%s15 + $0x20] sm:$0xff]
        %v2161 = vld [vmem:[%s15 + $0x28] sm:$0xff]
        %vm2162 = vcmask 392192
        %v2164 = vsel %vm2162, %v911, 0
        %2166 = vmatprep.subr.mxu0 0.0
        %2167 = vmatpush1.msra.mxu0 0.0
        %2168 = vmatprep.subr.mxu0 0.0
        %2169 = vmatpush1.msra.mxu0 0.0
        %2170 = vmatprep.subr.mxu0 0.0
        %2171 = vmatpush1.msra.mxu0 0.0
        %2172 = vmatprep.subr.mxu0 0.0
        %2173 = vmatpush1.msra.mxu0 0.0
        %2174 = vmatprep.subr.mxu0 0.0
        %2175 = vmatpush1.msra.mxu0 0.0
        %2176 = vmatprep.subr.mxu0 0.0
        %2177 = vmatpush1.msra.mxu0 0.0
        %2178 = vmatprep.subr.mxu0 0.0
        %2179 = vmatpush1.msra.mxu0 0.0
        %2180 = vmatprep.subr.mxu0 0.0
        %2181 = vmatpush1.msra.mxu0 0.0
        %2182 = vmatprep.subr.mxu0 0.0
        %2183 = vmatpush1.msra.mxu0 0.0
        %2184 = vmatprep.subr.mxu0 0.0
        %2185 = vmatpush1.msra.mxu0 0.0
        %2186 = vmatprep.subr.mxu0 0.0
        %2187 = vmatpush1.msra.mxu0 %v2161
        %2188 = vmatprep.subr.mxu0 0.0
        %2189 = vmatpush1.msra.mxu0 %v2160
        %2190 = vmatprep.subr.mxu0 0.0
        %2191 = vmatpush1.msra.mxu0 %v2159
        %2192 = vmatprep.subr.mxu0 0.0
        %2193 = vmatpush1.msra.mxu0 %v2158
        %2194 = vmatprep.subr.mxu0 0.0
        %2195 = vmatpush1.msra.mxu0 %v2157
        %2196 = vmatprep.subr.mxu0 0.0
        %2197 = vmatpush1.msra.mxu0 %v2156
        %2198 = vmatprep.subr.mxu0 0.0
        %2199 = vmatpush2.msra.mxu0 0.0
        %2200 = vmatprep.subr.mxu0 0.0
        %2201 = vmatpush2.msra.mxu0 0.0
        %2202 = vmatprep.subr.mxu0 0.0
        %2203 = vmatpush2.msra.mxu0 0.0
        %2204 = vmatprep.subr.mxu0 0.0
        %2205 = vmatpush2.msra.mxu0 0.0
        %2206 = vmatprep.subr.mxu0 0.0
        %2207 = vmatpush2.msra.mxu0 0.0
        %2208 = vmatprep.subr.mxu0 0.0
        %2209 = vmatpush2.msra.mxu0 0.0
        %2210 = vmatprep.subr.mxu0 0.0
        %2211 = vmatpush2.msra.mxu0 0.0
        %2212 = vmatprep.subr.mxu0 0.0
        %2213 = vmatpush2.msra.mxu0 0.0
        %2214 = vmatprep.subr.mxu0 0.0
        %2215 = vmatpush2.msra.mxu0 0.0
        %2216 = vmatprep.subr.mxu0 0.0
        %2217 = vmatpush2.msra.mxu0 0.0
        %2218 = vmatprep.subr.mxu0 0.0
        %2219 = vmatpush2.msra.mxu0 0.0
        %2220 = vmatprep.subr.mxu0 0.0
        %2221 = vmatpush2.msra.mxu0 0.0
        %2222 = vmatprep.subr.mxu0 0.0
        %2223 = vmatpush2.msra.mxu0 0.0
        %2224 = vmatprep.subr.mxu0 0.0
        %2225 = vmatpush2.msra.mxu0 0.0
        %2226 = vmatprep.subr.mxu0 0.0
        %2227 = vmatpush2.msra.mxu0 0.0
        %2228 = vmatprep.subr.mxu0 0.0
        %2229 = vmatpush2.msra.mxu0 0.0
        %2230 = vmatprep.mubr.f32.mxu0 0.0
        %2231 = vmatmul.mubr.f32.gmra.mxu0 %v2164
        %v2232 = vpop.f32.mrf.mxu0
        %v2233 = vadd.f32 0.0, %v2232
        %v2234 = vpop.f32.mrf.mxu0
        %2235 = vdwg.mxu0
        %2236 = vset.pattern.permute.xlu0 0
        %2237 = vperm.xlu0 %2236, %v1187
        %v2238 = vpop.permute.xlu0 %2237
        %v2240 = vmul.f32 %v2238, %v2233
        %v2242 = vsel %vm1210, %v2153, 0
        %2244 = vmatprep.subr.mxu0 0.0
        %2245 = vmatpush1.msra.mxu0 0.0
        %2246 = vmatprep.subr.mxu0 0.0
        %2247 = vmatpush1.msra.mxu0 0.0
        %2248 = vmatprep.subr.mxu0 0.0
        %2249 = vmatpush1.msra.mxu0 0.0
        %2250 = vmatprep.subr.mxu0 0.0
        %2251 = vmatpush1.msra.mxu0 0.0
        %2252 = vmatprep.subr.mxu0 0.0
        %2253 = vmatpush1.msra.mxu0 0.0
        %2254 = vmatprep.subr.mxu0 0.0
        %2255 = vmatpush1.msra.mxu0 0.0
        %2256 = vmatprep.subr.mxu0 0.0
        %2257 = vmatpush1.msra.mxu0 0.0
        %2258 = vmatprep.subr.mxu0 0.0
        %2259 = vmatpush1.msra.mxu0 0.0
        %2260 = vmatprep.subr.mxu0 0.0
        %2261 = vmatpush1.msra.mxu0 0.0
        %2262 = vmatprep.subr.mxu0 0.0
        %2263 = vmatpush1.msra.mxu0 0.0
        %2264 = vmatprep.subr.mxu0 0.0
        %2265 = vmatpush1.msra.mxu0 0.0
        %2266 = vmatprep.subr.mxu0 0.0
        %2267 = vmatpush1.msra.mxu0 0.0
        %2268 = vmatprep.subr.mxu0 0.0
        %2269 = vmatpush1.msra.mxu0 0.0
        %2270 = vmatprep.subr.mxu0 0.0
        %2271 = vmatpush1.msra.mxu0 0.0
        %2272 = vmatprep.subr.mxu0 0.0
        %2273 = vmatpush1.msra.mxu0 0.0
        %2274 = vmatprep.subr.mxu0 0.0
        %2275 = vmatpush1.msra.mxu0 %v2242
        %2276 = vmatprep.subr.mxu0 0.0
        %2277 = vmatpush2.msra.mxu0 0.0
        %2278 = vmatprep.subr.mxu0 0.0
        %2279 = vmatpush2.msra.mxu0 0.0
        %2280 = vmatprep.subr.mxu0 0.0
        %2281 = vmatpush2.msra.mxu0 0.0
        %2282 = vmatprep.subr.mxu0 0.0
        %2283 = vmatpush2.msra.mxu0 0.0
        %2284 = vmatprep.subr.mxu0 0.0
        %2285 = vmatpush2.msra.mxu0 0.0
        %2286 = vmatprep.subr.mxu0 0.0
        %2287 = vmatpush2.msra.mxu0 0.0
        %2288 = vmatprep.subr.mxu0 0.0
        %2289 = vmatpush2.msra.mxu0 0.0
        %2290 = vmatprep.subr.mxu0 0.0
        %2291 = vmatpush2.msra.mxu0 0.0
        %2292 = vmatprep.subr.mxu0 0.0
        %2293 = vmatpush2.msra.mxu0 0.0
        %2294 = vmatprep.subr.mxu0 0.0
        %2295 = vmatpush2.msra.mxu0 0.0
        %2296 = vmatprep.subr.mxu0 0.0
        %2297 = vmatpush2.msra.mxu0 0.0
        %2298 = vmatprep.subr.mxu0 0.0
        %2299 = vmatpush2.msra.mxu0 0.0
        %2300 = vmatprep.subr.mxu0 0.0
        %2301 = vmatpush2.msra.mxu0 0.0
        %2302 = vmatprep.subr.mxu0 0.0
        %2303 = vmatpush2.msra.mxu0 0.0
        %2304 = vmatprep.subr.mxu0 0.0
        %2305 = vmatpush2.msra.mxu0 0.0
        %2306 = vmatprep.subr.mxu0 0.0
        %2307 = vmatpush2.msra.mxu0 0.0
        %2308 = vmatprep.mubr.f32.mxu0 0.0
        %2309 = vmatmul.mubr.f32.gmra.mxu0 %v1208
        %v2310 = vpop.f32.mrf.mxu0
        %v2311 = vadd.f32 %v2240, %v2310
        %v2312 = vpop.f32.mrf.mxu0
        %2313 = vdwg.mxu0
        %s2314 = scalar_lea.vmem %s15, 48
        %v2315 = vld [vmem:[%s2314] sm:$0xff]
        %v2316 = vld [vmem:[%s2314 + $0x8] sm:$0xff]
        %v2317 = vld [vmem:[%s2314 + $0x10] sm:$0xff]
        %v2318 = vld [vmem:[%s2314 + $0x18] sm:$0xff]
        %v2319 = vld [vmem:[%s2314 + $0x20] sm:$0xff]
        %v2320 = vld [vmem:[%s2314 + $0x28] sm:$0xff]
        %2321 = vmatprep.subr.mxu0 0.0
        %2322 = vmatpush1.msra.mxu0 0.0
        %2323 = vmatprep.subr.mxu0 0.0
        %2324 = vmatpush1.msra.mxu0 0.0
        %2325 = vmatprep.subr.mxu0 0.0
        %2326 = vmatpush1.msra.mxu0 0.0
        %2327 = vmatprep.subr.mxu0 0.0
        %2328 = vmatpush1.msra.mxu0 0.0
        %2329 = vmatprep.subr.mxu0 0.0
        %2330 = vmatpush1.msra.mxu0 0.0
        %2331 = vmatprep.subr.mxu0 0.0
        %2332 = vmatpush1.msra.mxu0 0.0
        %2333 = vmatprep.subr.mxu0 0.0
        %2334 = vmatpush1.msra.mxu0 0.0
        %2335 = vmatprep.subr.mxu0 0.0
        %2336 = vmatpush1.msra.mxu0 0.0
        %2337 = vmatprep.subr.mxu0 0.0
        %2338 = vmatpush1.msra.mxu0 0.0
        %2339 = vmatprep.subr.mxu0 0.0
        %2340 = vmatpush1.msra.mxu0 0.0
        %2341 = vmatprep.subr.mxu0 0.0
        %2342 = vmatpush1.msra.mxu0 %v2320
        %2343 = vmatprep.subr.mxu0 0.0
        %2344 = vmatpush1.msra.mxu0 %v2319
        %2345 = vmatprep.subr.mxu0 0.0
        %2346 = vmatpush1.msra.mxu0 %v2318
        %2347 = vmatprep.subr.mxu0 0.0
        %2348 = vmatpush1.msra.mxu0 %v2317
        %2349 = vmatprep.subr.mxu0 0.0
        %2350 = vmatpush1.msra.mxu0 %v2316
        %2351 = vmatprep.subr.mxu0 0.0
        %2352 = vmatpush1.msra.mxu0 %v2315
        %2353 = vmatprep.subr.mxu0 0.0
        %2354 = vmatpush2.msra.mxu0 0.0
        %2355 = vmatprep.subr.mxu0 0.0
        %2356 = vmatpush2.msra.mxu0 0.0
        %2357 = vmatprep.subr.mxu0 0.0
        %2358 = vmatpush2.msra.mxu0 0.0
        %2359 = vmatprep.subr.mxu0 0.0
        %2360 = vmatpush2.msra.mxu0 0.0
        %2361 = vmatprep.subr.mxu0 0.0
        %2362 = vmatpush2.msra.mxu0 0.0
        %2363 = vmatprep.subr.mxu0 0.0
        %2364 = vmatpush2.msra.mxu0 0.0
        %2365 = vmatprep.subr.mxu0 0.0
        %2366 = vmatpush2.msra.mxu0 0.0
        %2367 = vmatprep.subr.mxu0 0.0
        %2368 = vmatpush2.msra.mxu0 0.0
        %2369 = vmatprep.subr.mxu0 0.0
        %2370 = vmatpush2.msra.mxu0 0.0
        %2371 = vmatprep.subr.mxu0 0.0
        %2372 = vmatpush2.msra.mxu0 0.0
        %2373 = vmatprep.subr.mxu0 0.0
        %2374 = vmatpush2.msra.mxu0 0.0
        %2375 = vmatprep.subr.mxu0 0.0
        %2376 = vmatpush2.msra.mxu0 0.0
        %2377 = vmatprep.subr.mxu0 0.0
        %2378 = vmatpush2.msra.mxu0 0.0
        %2379 = vmatprep.subr.mxu0 0.0
        %2380 = vmatpush2.msra.mxu0 0.0
        %2381 = vmatprep.subr.mxu0 0.0
        %2382 = vmatpush2.msra.mxu0 0.0
        %2383 = vmatprep.subr.mxu0 0.0
        %2384 = vmatpush2.msra.mxu0 0.0
        %2385 = vmatprep.mubr.f32.mxu0 0.0
        %2386 = vmatmul.mubr.f32.gmra.mxu0 %v2164
        %v2387 = vpop.f32.mrf.mxu0
        %v2388 = vadd.f32 0.0, %v2387
        %v2389 = vpop.f32.mrf.mxu0
        %2390 = vdwg.mxu0
        %2391 = vset.pattern.permute.xlu0 1
        %2392 = vperm.xlu0 %2391, %v1187
        %v2393 = vpop.permute.xlu0 %2392
        %v2395 = vmul.f32 %v2393, %v2388
        %v2396 = vadd.f32 %v2311, %v2395
        %s2397 = scalar_lea.vmem %s15, 96
        %v2398 = vld [vmem:[%s2397] sm:$0xff]
        %v2399 = vld [vmem:[%s2397 + $0x8] sm:$0xff]
        %v2400 = vld [vmem:[%s2397 + $0x10] sm:$0xff]
        %v2401 = vld [vmem:[%s2397 + $0x18] sm:$0xff]
        %v2402 = vld [vmem:[%s2397 + $0x20] sm:$0xff]
        %v2403 = vld [vmem:[%s2397 + $0x28] sm:$0xff]
        %2404 = vmatprep.subr.mxu0 0.0
        %2405 = vmatpush1.msra.mxu0 0.0
        %2406 = vmatprep.subr.mxu0 0.0
        %2407 = vmatpush1.msra.mxu0 0.0
        %2408 = vmatprep.subr.mxu0 0.0
        %2409 = vmatpush1.msra.mxu0 0.0
        %2410 = vmatprep.subr.mxu0 0.0
        %2411 = vmatpush1.msra.mxu0 0.0
        %2412 = vmatprep.subr.mxu0 0.0
        %2413 = vmatpush1.msra.mxu0 0.0
        %2414 = vmatprep.subr.mxu0 0.0
        %2415 = vmatpush1.msra.mxu0 0.0
        %2416 = vmatprep.subr.mxu0 0.0
        %2417 = vmatpush1.msra.mxu0 0.0
        %2418 = vmatprep.subr.mxu0 0.0
        %2419 = vmatpush1.msra.mxu0 0.0
        %2420 = vmatprep.subr.mxu0 0.0
        %2421 = vmatpush1.msra.mxu0 0.0
        %2422 = vmatprep.subr.mxu0 0.0
        %2423 = vmatpush1.msra.mxu0 0.0
        %2424 = vmatprep.subr.mxu0 0.0
        %2425 = vmatpush1.msra.mxu0 %v2403
        %2426 = vmatprep.subr.mxu0 0.0
        %2427 = vmatpush1.msra.mxu0 %v2402
        %2428 = vmatprep.subr.mxu0 0.0
        %2429 = vmatpush1.msra.mxu0 %v2401
        %2430 = vmatprep.subr.mxu0 0.0
        %2431 = vmatpush1.msra.mxu0 %v2400
        %2432 = vmatprep.subr.mxu0 0.0
        %2433 = vmatpush1.msra.mxu0 %v2399
        %2434 = vmatprep.subr.mxu0 0.0
        %2435 = vmatpush1.msra.mxu0 %v2398
        %2436 = vmatprep.subr.mxu0 0.0
        %2437 = vmatpush2.msra.mxu0 0.0
        %2438 = vmatprep.subr.mxu0 0.0
        %2439 = vmatpush2.msra.mxu0 0.0
        %2440 = vmatprep.subr.mxu0 0.0
        %2441 = vmatpush2.msra.mxu0 0.0
        %2442 = vmatprep.subr.mxu0 0.0
        %2443 = vmatpush2.msra.mxu0 0.0
        %2444 = vmatprep.subr.mxu0 0.0
        %2445 = vmatpush2.msra.mxu0 0.0
        %2446 = vmatprep.subr.mxu0 0.0
        %2447 = vmatpush2.msra.mxu0 0.0
        %2448 = vmatprep.subr.mxu0 0.0
        %2449 = vmatpush2.msra.mxu0 0.0
        %2450 = vmatprep.subr.mxu0 0.0
        %2451 = vmatpush2.msra.mxu0 0.0
        %2452 = vmatprep.subr.mxu0 0.0
        %2453 = vmatpush2.msra.mxu0 0.0
        %2454 = vmatprep.subr.mxu0 0.0
        %2455 = vmatpush2.msra.mxu0 0.0
        %2456 = vmatprep.subr.mxu0 0.0
        %2457 = vmatpush2.msra.mxu0 0.0
        %2458 = vmatprep.subr.mxu0 0.0
        %2459 = vmatpush2.msra.mxu0 0.0
        %2460 = vmatprep.subr.mxu0 0.0
        %2461 = vmatpush2.msra.mxu0 0.0
        %2462 = vmatprep.subr.mxu0 0.0
        %2463 = vmatpush2.msra.mxu0 0.0
        %2464 = vmatprep.subr.mxu0 0.0
        %2465 = vmatpush2.msra.mxu0 0.0
        %2466 = vmatprep.subr.mxu0 0.0
        %2467 = vmatpush2.msra.mxu0 0.0
        %2468 = vmatprep.mubr.f32.mxu0 0.0
        %2469 = vmatmul.mubr.f32.gmra.mxu0 %v2164
        %v2470 = vpop.f32.mrf.mxu0
        %v2471 = vadd.f32 0.0, %v2470
        %v2472 = vpop.f32.mrf.mxu0
        %2473 = vdwg.mxu0
        %2474 = vset.pattern.permute.xlu0 2
        %2475 = vperm.xlu0 %2474, %v1187
        %v2476 = vpop.permute.xlu0 %2475
        %v2478 = vmul.f32 %v2476, %v2471
        %v2479 = vadd.f32 %v2396, %v2478
        %s2480 = scalar_lea.vmem %s15, 144
        %v2481 = vld [vmem:[%s2480] sm:$0xff]
        %v2482 = vld [vmem:[%s2480 + $0x8] sm:$0xff]
        %v2483 = vld [vmem:[%s2480 + $0x10] sm:$0xff]
        %v2484 = vld [vmem:[%s2480 + $0x18] sm:$0xff]
        %v2485 = vld [vmem:[%s2480 + $0x20] sm:$0xff]
        %v2486 = vld [vmem:[%s2480 + $0x28] sm:$0xff]
        %2487 = vmatprep.subr.mxu0 0.0
        %2488 = vmatpush1.msra.mxu0 0.0
        %2489 = vmatprep.subr.mxu0 0.0
        %2490 = vmatpush1.msra.mxu0 0.0
        %2491 = vmatprep.subr.mxu0 0.0
        %2492 = vmatpush1.msra.mxu0 0.0
        %2493 = vmatprep.subr.mxu0 0.0
        %2494 = vmatpush1.msra.mxu0 0.0
        %2495 = vmatprep.subr.mxu0 0.0
        %2496 = vmatpush1.msra.mxu0 0.0
        %2497 = vmatprep.subr.mxu0 0.0
        %2498 = vmatpush1.msra.mxu0 0.0
        %2499 = vmatprep.subr.mxu0 0.0
        %2500 = vmatpush1.msra.mxu0 0.0
        %2501 = vmatprep.subr.mxu0 0.0
        %2502 = vmatpush1.msra.mxu0 0.0
        %2503 = vmatprep.subr.mxu0 0.0
        %2504 = vmatpush1.msra.mxu0 0.0
        %2505 = vmatprep.subr.mxu0 0.0
        %2506 = vmatpush1.msra.mxu0 0.0
        %2507 = vmatprep.subr.mxu0 0.0
        %2508 = vmatpush1.msra.mxu0 %v2486
        %2509 = vmatprep.subr.mxu0 0.0
        %2510 = vmatpush1.msra.mxu0 %v2485
        %2511 = vmatprep.subr.mxu0 0.0
        %2512 = vmatpush1.msra.mxu0 %v2484
        %2513 = vmatprep.subr.mxu0 0.0
        %2514 = vmatpush1.msra.mxu0 %v2483
        %2515 = vmatprep.subr.mxu0 0.0
        %2516 = vmatpush1.msra.mxu0 %v2482
        %2517 = vmatprep.subr.mxu0 0.0
        %2518 = vmatpush1.msra.mxu0 %v2481
        %2519 = vmatprep.subr.mxu0 0.0
        %2520 = vmatpush2.msra.mxu0 0.0
        %2521 = vmatprep.subr.mxu0 0.0
        %2522 = vmatpush2.msra.mxu0 0.0
        %2523 = vmatprep.subr.mxu0 0.0
        %2524 = vmatpush2.msra.mxu0 0.0
        %2525 = vmatprep.subr.mxu0 0.0
        %2526 = vmatpush2.msra.mxu0 0.0
        %2527 = vmatprep.subr.mxu0 0.0
        %2528 = vmatpush2.msra.mxu0 0.0
        %2529 = vmatprep.subr.mxu0 0.0
        %2530 = vmatpush2.msra.mxu0 0.0
        %2531 = vmatprep.subr.mxu0 0.0
        %2532 = vmatpush2.msra.mxu0 0.0
        %2533 = vmatprep.subr.mxu0 0.0
        %2534 = vmatpush2.msra.mxu0 0.0
        %2535 = vmatprep.subr.mxu0 0.0
        %2536 = vmatpush2.msra.mxu0 0.0
        %2537 = vmatprep.subr.mxu0 0.0
        %2538 = vmatpush2.msra.mxu0 0.0
        %2539 = vmatprep.subr.mxu0 0.0
        %2540 = vmatpush2.msra.mxu0 0.0
        %2541 = vmatprep.subr.mxu0 0.0
        %2542 = vmatpush2.msra.mxu0 0.0
        %2543 = vmatprep.subr.mxu0 0.0
        %2544 = vmatpush2.msra.mxu0 0.0
        %2545 = vmatprep.subr.mxu0 0.0
        %2546 = vmatpush2.msra.mxu0 0.0
        %2547 = vmatprep.subr.mxu0 0.0
        %2548 = vmatpush2.msra.mxu0 0.0
        %2549 = vmatprep.subr.mxu0 0.0
        %2550 = vmatpush2.msra.mxu0 0.0
        %2551 = vmatprep.mubr.f32.mxu0 0.0
        %2552 = vmatmul.mubr.f32.gmra.mxu0 %v2164
        %v2553 = vpop.f32.mrf.mxu0
        %v2554 = vadd.f32 0.0, %v2553
        %v2555 = vpop.f32.mrf.mxu0
        %2556 = vdwg.mxu0
        %2557 = vset.pattern.permute.xlu0 3
        %2558 = vperm.xlu0 %2557, %v1187
        %v2559 = vpop.permute.xlu0 %2558
        %v2561 = vmul.f32 %v2559, %v2554
        %v2562 = vadd.f32 %v2479, %v2561
        %vm2563 = vcmp.gt.f32.partialorder %v2562, 0.0
        %v2564 = vmin.f32 %v2562, 0.0
        %v2565 = vmul.f32 %v2564, 1.442695
        %v2566 = vpow.pop %v2565
        %v2567 = vsub.f32 %v2566, 1.0
        %v2568 = vsel %vm2563, %v2562, %v2567
        %v2569 = vld [vmem:[%s16] sm:$0xff]
        %v2570 = vld [vmem:[%s16 + $0x8] sm:$0xff]
        %v2571 = vld [vmem:[%s16 + $0x10] sm:$0xff]
        %v2572 = vld [vmem:[%s16 + $0x18] sm:$0xff]
        %v2574 = vsel %vm1012, %v2568, 0
        %2576 = vmatprep.subr.mxu0 0.0
        %2577 = vmatpush1.msra.mxu0 0.0
        %2578 = vmatprep.subr.mxu0 0.0
        %2579 = vmatpush1.msra.mxu0 0.0
        %2580 = vmatprep.subr.mxu0 0.0
        %2581 = vmatpush1.msra.mxu0 0.0
        %2582 = vmatprep.subr.mxu0 0.0
        %2583 = vmatpush1.msra.mxu0 0.0
        %2584 = vmatprep.subr.mxu0 0.0
        %2585 = vmatpush1.msra.mxu0 0.0
        %2586 = vmatprep.subr.mxu0 0.0
        %2587 = vmatpush1.msra.mxu0 0.0
        %2588 = vmatprep.subr.mxu0 0.0
        %2589 = vmatpush1.msra.mxu0 0.0
        %2590 = vmatprep.subr.mxu0 0.0
        %2591 = vmatpush1.msra.mxu0 0.0
        %2592 = vmatprep.subr.mxu0 0.0
        %2593 = vmatpush1.msra.mxu0 0.0
        %2594 = vmatprep.subr.mxu0 0.0
        %2595 = vmatpush1.msra.mxu0 0.0
        %2596 = vmatprep.subr.mxu0 0.0
        %2597 = vmatpush1.msra.mxu0 0.0
        %2598 = vmatprep.subr.mxu0 0.0
        %2599 = vmatpush1.msra.mxu0 0.0
        %2600 = vmatprep.subr.mxu0 0.0
        %2601 = vmatpush1.msra.mxu0 %v2572
        %2602 = vmatprep.subr.mxu0 0.0
        %2603 = vmatpush1.msra.mxu0 %v2571
        %2604 = vmatprep.subr.mxu0 0.0
        %2605 = vmatpush1.msra.mxu0 %v2570
        %2606 = vmatprep.subr.mxu0 0.0
        %2607 = vmatpush1.msra.mxu0 %v2569
        %2608 = vmatprep.subr.mxu0 0.0
        %2609 = vmatpush2.msra.mxu0 0.0
        %2610 = vmatprep.subr.mxu0 0.0
        %2611 = vmatpush2.msra.mxu0 0.0
        %2612 = vmatprep.subr.mxu0 0.0
        %2613 = vmatpush2.msra.mxu0 0.0
        %2614 = vmatprep.subr.mxu0 0.0
        %2615 = vmatpush2.msra.mxu0 0.0
        %2616 = vmatprep.subr.mxu0 0.0
        %2617 = vmatpush2.msra.mxu0 0.0
        %2618 = vmatprep.subr.mxu0 0.0
        %2619 = vmatpush2.msra.mxu0 0.0
        %2620 = vmatprep.subr.mxu0 0.0
        %2621 = vmatpush2.msra.mxu0 0.0
        %2622 = vmatprep.subr.mxu0 0.0
        %2623 = vmatpush2.msra.mxu0 0.0
        %2624 = vmatprep.subr.mxu0 0.0
        %2625 = vmatpush2.msra.mxu0 0.0
        %2626 = vmatprep.subr.mxu0 0.0
        %2627 = vmatpush2.msra.mxu0 0.0
        %2628 = vmatprep.subr.mxu0 0.0
        %2629 = vmatpush2.msra.mxu0 0.0
        %2630 = vmatprep.subr.mxu0 0.0
        %2631 = vmatpush2.msra.mxu0 0.0
        %2632 = vmatprep.subr.mxu0 0.0
        %2633 = vmatpush2.msra.mxu0 0.0
        %2634 = vmatprep.subr.mxu0 0.0
        %2635 = vmatpush2.msra.mxu0 0.0
        %2636 = vmatprep.subr.mxu0 0.0
        %2637 = vmatpush2.msra.mxu0 0.0
        %2638 = vmatprep.subr.mxu0 0.0
        %2639 = vmatpush2.msra.mxu0 0.0
        %2640 = vmatprep.mubr.f32.mxu0 0.0
        %2641 = vmatmul.mubr.f32.gmra.mxu0 %v2574
        %v2642 = vpop.f32.mrf.mxu0
        %v2643 = vadd.f32 0.0, %v2642
        %v2644 = vpop.f32.mrf.mxu0
        %2645 = vdwg.mxu0
        %v2646 = vmul.f32 %v2238, %v2643
        %v2648 = vsel %vm1210, %v2154, 0
        %2650 = vmatprep.subr.mxu0 0.0
        %2651 = vmatpush1.msra.mxu0 0.0
        %2652 = vmatprep.subr.mxu0 0.0
        %2653 = vmatpush1.msra.mxu0 0.0
        %2654 = vmatprep.subr.mxu0 0.0
        %2655 = vmatpush1.msra.mxu0 0.0
        %2656 = vmatprep.subr.mxu0 0.0
        %2657 = vmatpush1.msra.mxu0 0.0
        %2658 = vmatprep.subr.mxu0 0.0
        %2659 = vmatpush1.msra.mxu0 0.0
        %2660 = vmatprep.subr.mxu0 0.0
        %2661 = vmatpush1.msra.mxu0 0.0
        %2662 = vmatprep.subr.mxu0 0.0
        %2663 = vmatpush1.msra.mxu0 0.0
        %2664 = vmatprep.subr.mxu0 0.0
        %2665 = vmatpush1.msra.mxu0 0.0
        %2666 = vmatprep.subr.mxu0 0.0
        %2667 = vmatpush1.msra.mxu0 0.0
        %2668 = vmatprep.subr.mxu0 0.0
        %2669 = vmatpush1.msra.mxu0 0.0
        %2670 = vmatprep.subr.mxu0 0.0
        %2671 = vmatpush1.msra.mxu0 0.0
        %2672 = vmatprep.subr.mxu0 0.0
        %2673 = vmatpush1.msra.mxu0 0.0
        %2674 = vmatprep.subr.mxu0 0.0
        %2675 = vmatpush1.msra.mxu0 0.0
        %2676 = vmatprep.subr.mxu0 0.0
        %2677 = vmatpush1.msra.mxu0 0.0
        %2678 = vmatprep.subr.mxu0 0.0
        %2679 = vmatpush1.msra.mxu0 0.0
        %2680 = vmatprep.subr.mxu0 0.0
        %2681 = vmatpush1.msra.mxu0 %v2648
        %2682 = vmatprep.subr.mxu0 0.0
        %2683 = vmatpush2.msra.mxu0 0.0
        %2684 = vmatprep.subr.mxu0 0.0
        %2685 = vmatpush2.msra.mxu0 0.0
        %2686 = vmatprep.subr.mxu0 0.0
        %2687 = vmatpush2.msra.mxu0 0.0
        %2688 = vmatprep.subr.mxu0 0.0
        %2689 = vmatpush2.msra.mxu0 0.0
        %2690 = vmatprep.subr.mxu0 0.0
        %2691 = vmatpush2.msra.mxu0 0.0
        %2692 = vmatprep.subr.mxu0 0.0
        %2693 = vmatpush2.msra.mxu0 0.0
        %2694 = vmatprep.subr.mxu0 0.0
        %2695 = vmatpush2.msra.mxu0 0.0
        %2696 = vmatprep.subr.mxu0 0.0
        %2697 = vmatpush2.msra.mxu0 0.0
        %2698 = vmatprep.subr.mxu0 0.0
        %2699 = vmatpush2.msra.mxu0 0.0
        %2700 = vmatprep.subr.mxu0 0.0
        %2701 = vmatpush2.msra.mxu0 0.0
        %2702 = vmatprep.subr.mxu0 0.0
        %2703 = vmatpush2.msra.mxu0 0.0
        %2704 = vmatprep.subr.mxu0 0.0
        %2705 = vmatpush2.msra.mxu0 0.0
        %2706 = vmatprep.subr.mxu0 0.0
        %2707 = vmatpush2.msra.mxu0 0.0
        %2708 = vmatprep.subr.mxu0 0.0
        %2709 = vmatpush2.msra.mxu0 0.0
        %2710 = vmatprep.subr.mxu0 0.0
        %2711 = vmatpush2.msra.mxu0 0.0
        %2712 = vmatprep.subr.mxu0 0.0
        %2713 = vmatpush2.msra.mxu0 0.0
        %2714 = vmatprep.mubr.f32.mxu0 0.0
        %2715 = vmatmul.mubr.f32.gmra.mxu0 %v1208
        %v2716 = vpop.f32.mrf.mxu0
        %v2717 = vadd.f32 %v2646, %v2716
        %v2718 = vpop.f32.mrf.mxu0
        %2719 = vdwg.mxu0
        %s2720 = scalar_lea.vmem %s16, 32
        %v2721 = vld [vmem:[%s2720] sm:$0xff]
        %v2722 = vld [vmem:[%s2720 + $0x8] sm:$0xff]
        %v2723 = vld [vmem:[%s2720 + $0x10] sm:$0xff]
        %v2724 = vld [vmem:[%s2720 + $0x18] sm:$0xff]
        %2725 = vmatprep.subr.mxu0 0.0
        %2726 = vmatpush1.msra.mxu0 0.0
        %2727 = vmatprep.subr.mxu0 0.0
        %2728 = vmatpush1.msra.mxu0 0.0
        %2729 = vmatprep.subr.mxu0 0.0
        %2730 = vmatpush1.msra.mxu0 0.0
        %2731 = vmatprep.subr.mxu0 0.0
        %2732 = vmatpush1.msra.mxu0 0.0
        %2733 = vmatprep.subr.mxu0 0.0
        %2734 = vmatpush1.msra.mxu0 0.0
        %2735 = vmatprep.subr.mxu0 0.0
        %2736 = vmatpush1.msra.mxu0 0.0
        %2737 = vmatprep.subr.mxu0 0.0
        %2738 = vmatpush1.msra.mxu0 0.0
        %2739 = vmatprep.subr.mxu0 0.0
        %2740 = vmatpush1.msra.mxu0 0.0
        %2741 = vmatprep.subr.mxu0 0.0
        %2742 = vmatpush1.msra.mxu0 0.0
        %2743 = vmatprep.subr.mxu0 0.0
        %2744 = vmatpush1.msra.mxu0 0.0
        %2745 = vmatprep.subr.mxu0 0.0
        %2746 = vmatpush1.msra.mxu0 0.0
        %2747 = vmatprep.subr.mxu0 0.0
        %2748 = vmatpush1.msra.mxu0 0.0
        %2749 = vmatprep.subr.mxu0 0.0
        %2750 = vmatpush1.msra.mxu0 %v2724
        %2751 = vmatprep.subr.mxu0 0.0
        %2752 = vmatpush1.msra.mxu0 %v2723
        %2753 = vmatprep.subr.mxu0 0.0
        %2754 = vmatpush1.msra.mxu0 %v2722
        %2755 = vmatprep.subr.mxu0 0.0
        %2756 = vmatpush1.msra.mxu0 %v2721
        %2757 = vmatprep.subr.mxu0 0.0
        %2758 = vmatpush2.msra.mxu0 0.0
        %2759 = vmatprep.subr.mxu0 0.0
        %2760 = vmatpush2.msra.mxu0 0.0
        %2761 = vmatprep.subr.mxu0 0.0
        %2762 = vmatpush2.msra.mxu0 0.0
        %2763 = vmatprep.subr.mxu0 0.0
        %2764 = vmatpush2.msra.mxu0 0.0
        %2765 = vmatprep.subr.mxu0 0.0
        %2766 = vmatpush2.msra.mxu0 0.0
        %2767 = vmatprep.subr.mxu0 0.0
        %2768 = vmatpush2.msra.mxu0 0.0
        %2769 = vmatprep.subr.mxu0 0.0
        %2770 = vmatpush2.msra.mxu0 0.0
        %2771 = vmatprep.subr.mxu0 0.0
        %2772 = vmatpush2.msra.mxu0 0.0
        %2773 = vmatprep.subr.mxu0 0.0
        %2774 = vmatpush2.msra.mxu0 0.0
        %2775 = vmatprep.subr.mxu0 0.0
        %2776 = vmatpush2.msra.mxu0 0.0
        %2777 = vmatprep.subr.mxu0 0.0
        %2778 = vmatpush2.msra.mxu0 0.0
        %2779 = vmatprep.subr.mxu0 0.0
        %2780 = vmatpush2.msra.mxu0 0.0
        %2781 = vmatprep.subr.mxu0 0.0
        %2782 = vmatpush2.msra.mxu0 0.0
        %2783 = vmatprep.subr.mxu0 0.0
        %2784 = vmatpush2.msra.mxu0 0.0
        %2785 = vmatprep.subr.mxu0 0.0
        %2786 = vmatpush2.msra.mxu0 0.0
        %2787 = vmatprep.subr.mxu0 0.0
        %2788 = vmatpush2.msra.mxu0 0.0
        %2789 = vmatprep.mubr.f32.mxu0 0.0
        %2790 = vmatmul.mubr.f32.gmra.mxu0 %v2574
        %v2791 = vpop.f32.mrf.mxu0
        %v2792 = vadd.f32 0.0, %v2791
        %v2793 = vpop.f32.mrf.mxu0
        %2794 = vdwg.mxu0
        %v2795 = vmul.f32 %v2393, %v2792
        %v2796 = vadd.f32 %v2717, %v2795
        %s2797 = scalar_lea.vmem %s16, 64
        %v2798 = vld [vmem:[%s2797] sm:$0xff]
        %v2799 = vld [vmem:[%s2797 + $0x8] sm:$0xff]
        %v2800 = vld [vmem:[%s2797 + $0x10] sm:$0xff]
        %v2801 = vld [vmem:[%s2797 + $0x18] sm:$0xff]
        %2802 = vmatprep.subr.mxu0 0.0
        %2803 = vmatpush1.msra.mxu0 0.0
        %2804 = vmatprep.subr.mxu0 0.0
        %2805 = vmatpush1.msra.mxu0 0.0
        %2806 = vmatprep.subr.mxu0 0.0
        %2807 = vmatpush1.msra.mxu0 0.0
        %2808 = vmatprep.subr.mxu0 0.0
        %2809 = vmatpush1.msra.mxu0 0.0
        %2810 = vmatprep.subr.mxu0 0.0
        %2811 = vmatpush1.msra.mxu0 0.0
        %2812 = vmatprep.subr.mxu0 0.0
        %2813 = vmatpush1.msra.mxu0 0.0
        %2814 = vmatprep.subr.mxu0 0.0
        %2815 = vmatpush1.msra.mxu0 0.0
        %2816 = vmatprep.subr.mxu0 0.0
        %2817 = vmatpush1.msra.mxu0 0.0
        %2818 = vmatprep.subr.mxu0 0.0
        %2819 = vmatpush1.msra.mxu0 0.0
        %2820 = vmatprep.subr.mxu0 0.0
        %2821 = vmatpush1.msra.mxu0 0.0
        %2822 = vmatprep.subr.mxu0 0.0
        %2823 = vmatpush1.msra.mxu0 0.0
        %2824 = vmatprep.subr.mxu0 0.0
        %2825 = vmatpush1.msra.mxu0 0.0
        %2826 = vmatprep.subr.mxu0 0.0
        %2827 = vmatpush1.msra.mxu0 %v2801
        %2828 = vmatprep.subr.mxu0 0.0
        %2829 = vmatpush1.msra.mxu0 %v2800
        %2830 = vmatprep.subr.mxu0 0.0
        %2831 = vmatpush1.msra.mxu0 %v2799
        %2832 = vmatprep.subr.mxu0 0.0
        %2833 = vmatpush1.msra.mxu0 %v2798
        %2834 = vmatprep.subr.mxu0 0.0
        %2835 = vmatpush2.msra.mxu0 0.0
        %2836 = vmatprep.subr.mxu0 0.0
        %2837 = vmatpush2.msra.mxu0 0.0
        %2838 = vmatprep.subr.mxu0 0.0
        %2839 = vmatpush2.msra.mxu0 0.0
        %2840 = vmatprep.subr.mxu0 0.0
        %2841 = vmatpush2.msra.mxu0 0.0
        %2842 = vmatprep.subr.mxu0 0.0
        %2843 = vmatpush2.msra.mxu0 0.0
        %2844 = vmatprep.subr.mxu0 0.0
        %2845 = vmatpush2.msra.mxu0 0.0
        %2846 = vmatprep.subr.mxu0 0.0
        %2847 = vmatpush2.msra.mxu0 0.0
        %2848 = vmatprep.subr.mxu0 0.0
        %2849 = vmatpush2.msra.mxu0 0.0
        %2850 = vmatprep.subr.mxu0 0.0
        %2851 = vmatpush2.msra.mxu0 0.0
        %2852 = vmatprep.subr.mxu0 0.0
        %2853 = vmatpush2.msra.mxu0 0.0
        %2854 = vmatprep.subr.mxu0 0.0
        %2855 = vmatpush2.msra.mxu0 0.0
        %2856 = vmatprep.subr.mxu0 0.0
        %2857 = vmatpush2.msra.mxu0 0.0
        %2858 = vmatprep.subr.mxu0 0.0
        %2859 = vmatpush2.msra.mxu0 0.0
        %2860 = vmatprep.subr.mxu0 0.0
        %2861 = vmatpush2.msra.mxu0 0.0
        %2862 = vmatprep.subr.mxu0 0.0
        %2863 = vmatpush2.msra.mxu0 0.0
        %2864 = vmatprep.subr.mxu0 0.0
        %2865 = vmatpush2.msra.mxu0 0.0
        %2866 = vmatprep.mubr.f32.mxu0 0.0
        %2867 = vmatmul.mubr.f32.gmra.mxu0 %v2574
        %v2868 = vpop.f32.mrf.mxu0
        %v2869 = vadd.f32 0.0, %v2868
        %v2870 = vpop.f32.mrf.mxu0
        %2871 = vdwg.mxu0
        %v2872 = vmul.f32 %v2476, %v2869
        %v2873 = vadd.f32 %v2796, %v2872
        %s2874 = scalar_lea.vmem %s16, 96
        %v2875 = vld [vmem:[%s2874] sm:$0xff]
        %v2876 = vld [vmem:[%s2874 + $0x8] sm:$0xff]
        %v2877 = vld [vmem:[%s2874 + $0x10] sm:$0xff]
        %v2878 = vld [vmem:[%s2874 + $0x18] sm:$0xff]
        %2879 = vmatprep.subr.mxu0 0.0
        %2880 = vmatpush1.msra.mxu0 0.0
        %2881 = vmatprep.subr.mxu0 0.0
        %2882 = vmatpush1.msra.mxu0 0.0
        %2883 = vmatprep.subr.mxu0 0.0
        %2884 = vmatpush1.msra.mxu0 0.0
        %2885 = vmatprep.subr.mxu0 0.0
        %2886 = vmatpush1.msra.mxu0 0.0
        %2887 = vmatprep.subr.mxu0 0.0
        %2888 = vmatpush1.msra.mxu0 0.0
        %2889 = vmatprep.subr.mxu0 0.0
        %2890 = vmatpush1.msra.mxu0 0.0
        %2891 = vmatprep.subr.mxu0 0.0
        %2892 = vmatpush1.msra.mxu0 0.0
        %2893 = vmatprep.subr.mxu0 0.0
        %2894 = vmatpush1.msra.mxu0 0.0
        %2895 = vmatprep.subr.mxu0 0.0
        %2896 = vmatpush1.msra.mxu0 0.0
        %2897 = vmatprep.subr.mxu0 0.0
        %2898 = vmatpush1.msra.mxu0 0.0
        %2899 = vmatprep.subr.mxu0 0.0
        %2900 = vmatpush1.msra.mxu0 0.0
        %2901 = vmatprep.subr.mxu0 0.0
        %2902 = vmatpush1.msra.mxu0 0.0
        %2903 = vmatprep.subr.mxu0 0.0
        %2904 = vmatpush1.msra.mxu0 %v2878
        %2905 = vmatprep.subr.mxu0 0.0
        %2906 = vmatpush1.msra.mxu0 %v2877
        %2907 = vmatprep.subr.mxu0 0.0
        %2908 = vmatpush1.msra.mxu0 %v2876
        %2909 = vmatprep.subr.mxu0 0.0
        %2910 = vmatpush1.msra.mxu0 %v2875
        %2911 = vmatprep.subr.mxu0 0.0
        %2912 = vmatpush2.msra.mxu0 0.0
        %2913 = vmatprep.subr.mxu0 0.0
        %2914 = vmatpush2.msra.mxu0 0.0
        %2915 = vmatprep.subr.mxu0 0.0
        %2916 = vmatpush2.msra.mxu0 0.0
        %2917 = vmatprep.subr.mxu0 0.0
        %2918 = vmatpush2.msra.mxu0 0.0
        %2919 = vmatprep.subr.mxu0 0.0
        %2920 = vmatpush2.msra.mxu0 0.0
        %2921 = vmatprep.subr.mxu0 0.0
        %2922 = vmatpush2.msra.mxu0 0.0
        %2923 = vmatprep.subr.mxu0 0.0
        %2924 = vmatpush2.msra.mxu0 0.0
        %2925 = vmatprep.subr.mxu0 0.0
        %2926 = vmatpush2.msra.mxu0 0.0
        %2927 = vmatprep.subr.mxu0 0.0
        %2928 = vmatpush2.msra.mxu0 0.0
        %2929 = vmatprep.subr.mxu0 0.0
        %2930 = vmatpush2.msra.mxu0 0.0
        %2931 = vmatprep.subr.mxu0 0.0
        %2932 = vmatpush2.msra.mxu0 0.0
        %2933 = vmatprep.subr.mxu0 0.0
        %2934 = vmatpush2.msra.mxu0 0.0
        %2935 = vmatprep.subr.mxu0 0.0
        %2936 = vmatpush2.msra.mxu0 0.0
        %2937 = vmatprep.subr.mxu0 0.0
        %2938 = vmatpush2.msra.mxu0 0.0
        %2939 = vmatprep.subr.mxu0 0.0
        %2940 = vmatpush2.msra.mxu0 0.0
        %2941 = vmatprep.subr.mxu0 0.0
        %2942 = vmatpush2.msra.mxu0 0.0
        %2943 = vmatprep.mubr.f32.mxu0 0.0
        %2944 = vmatmul.mubr.f32.gmra.mxu0 %v2574
        %v2945 = vpop.f32.mrf.mxu0
        %v2946 = vadd.f32 0.0, %v2945
        %v2947 = vpop.f32.mrf.mxu0
        %2948 = vdwg.mxu0
        %v2949 = vmul.f32 %v2559, %v2946
        %v2950 = vadd.f32 %v2873, %v2949
        %vm2951 = vcmp.gt.f32.partialorder %v2950, 0.0
        %v2952 = vmin.f32 %v2950, 0.0
        %v2953 = vmul.f32 %v2952, 1.442695
        %v2954 = vpow.pop %v2953
        %v2955 = vsub.f32 %v2954, 1.0
        %v2956 = vsel %vm2951, %v2950, %v2955
        %v2957 = vld [vmem:[%s17] sm:$0xff]
        %v2958 = vld [vmem:[%s17 + $0x8] sm:$0xff]
        %v2959 = vld [vmem:[%s17 + $0x10] sm:$0xff]
        %v2960 = vld [vmem:[%s17 + $0x18] sm:$0xff]
        %v2962 = vsel %vm1012, %v2956, 0
        %2964 = vmatprep.subr.mxu0 0.0
        %2965 = vmatpush1.msra.mxu0 0.0
        %2966 = vmatprep.subr.mxu0 0.0
        %2967 = vmatpush1.msra.mxu0 0.0
        %2968 = vmatprep.subr.mxu0 0.0
        %2969 = vmatpush1.msra.mxu0 0.0
        %2970 = vmatprep.subr.mxu0 0.0
        %2971 = vmatpush1.msra.mxu0 0.0
        %2972 = vmatprep.subr.mxu0 0.0
        %2973 = vmatpush1.msra.mxu0 0.0
        %2974 = vmatprep.subr.mxu0 0.0
        %2975 = vmatpush1.msra.mxu0 0.0
        %2976 = vmatprep.subr.mxu0 0.0
        %2977 = vmatpush1.msra.mxu0 0.0
        %2978 = vmatprep.subr.mxu0 0.0
        %2979 = vmatpush1.msra.mxu0 0.0
        %2980 = vmatprep.subr.mxu0 0.0
        %2981 = vmatpush1.msra.mxu0 0.0
        %2982 = vmatprep.subr.mxu0 0.0
        %2983 = vmatpush1.msra.mxu0 0.0
        %2984 = vmatprep.subr.mxu0 0.0
        %2985 = vmatpush1.msra.mxu0 0.0
        %2986 = vmatprep.subr.mxu0 0.0
        %2987 = vmatpush1.msra.mxu0 0.0
        %2988 = vmatprep.subr.mxu0 0.0
        %2989 = vmatpush1.msra.mxu0 %v2960
        %2990 = vmatprep.subr.mxu0 0.0
        %2991 = vmatpush1.msra.mxu0 %v2959
        %2992 = vmatprep.subr.mxu0 0.0
        %2993 = vmatpush1.msra.mxu0 %v2958
        %2994 = vmatprep.subr.mxu0 0.0
        %2995 = vmatpush1.msra.mxu0 %v2957
        %2996 = vmatprep.subr.mxu0 0.0
        %2997 = vmatpush2.msra.mxu0 0.0
        %2998 = vmatprep.subr.mxu0 0.0
        %2999 = vmatpush2.msra.mxu0 0.0
        %3000 = vmatprep.subr.mxu0 0.0
        %3001 = vmatpush2.msra.mxu0 0.0
        %3002 = vmatprep.subr.mxu0 0.0
        %3003 = vmatpush2.msra.mxu0 0.0
        %3004 = vmatprep.subr.mxu0 0.0
        %3005 = vmatpush2.msra.mxu0 0.0
        %3006 = vmatprep.subr.mxu0 0.0
        %3007 = vmatpush2.msra.mxu0 0.0
        %3008 = vmatprep.subr.mxu0 0.0
        %3009 = vmatpush2.msra.mxu0 0.0
        %3010 = vmatprep.subr.mxu0 0.0
        %3011 = vmatpush2.msra.mxu0 0.0
        %3012 = vmatprep.subr.mxu0 0.0
        %3013 = vmatpush2.msra.mxu0 0.0
        %3014 = vmatprep.subr.mxu0 0.0
        %3015 = vmatpush2.msra.mxu0 0.0
        %3016 = vmatprep.subr.mxu0 0.0
        %3017 = vmatpush2.msra.mxu0 0.0
        %3018 = vmatprep.subr.mxu0 0.0
        %3019 = vmatpush2.msra.mxu0 0.0
        %3020 = vmatprep.subr.mxu0 0.0
        %3021 = vmatpush2.msra.mxu0 0.0
        %3022 = vmatprep.subr.mxu0 0.0
        %3023 = vmatpush2.msra.mxu0 0.0
        %3024 = vmatprep.subr.mxu0 0.0
        %3025 = vmatpush2.msra.mxu0 0.0
        %3026 = vmatprep.subr.mxu0 0.0
        %3027 = vmatpush2.msra.mxu0 0.0
        %3028 = vmatprep.mubr.f32.mxu0 0.0
        %3029 = vmatmul.mubr.f32.gmra.mxu0 %v2962
        %v3030 = vpop.f32.mrf.mxu0
        %v3031 = vadd.f32 0.0, %v3030
        %v3032 = vpop.f32.mrf.mxu0
        %3033 = vdwg.mxu0
        %v3034 = vmul.f32 %v2238, %v3031
        %v3036 = vsel %vm1210, %v2155, 0
        %3038 = vmatprep.subr.mxu0 0.0
        %3039 = vmatpush1.msra.mxu0 0.0
        %3040 = vmatprep.subr.mxu0 0.0
        %3041 = vmatpush1.msra.mxu0 0.0
        %3042 = vmatprep.subr.mxu0 0.0
        %3043 = vmatpush1.msra.mxu0 0.0
        %3044 = vmatprep.subr.mxu0 0.0
        %3045 = vmatpush1.msra.mxu0 0.0
        %3046 = vmatprep.subr.mxu0 0.0
        %3047 = vmatpush1.msra.mxu0 0.0
        %3048 = vmatprep.subr.mxu0 0.0
        %3049 = vmatpush1.msra.mxu0 0.0
        %3050 = vmatprep.subr.mxu0 0.0
        %3051 = vmatpush1.msra.mxu0 0.0
        %3052 = vmatprep.subr.mxu0 0.0
        %3053 = vmatpush1.msra.mxu0 0.0
        %3054 = vmatprep.subr.mxu0 0.0
        %3055 = vmatpush1.msra.mxu0 0.0
        %3056 = vmatprep.subr.mxu0 0.0
        %3057 = vmatpush1.msra.mxu0 0.0
        %3058 = vmatprep.subr.mxu0 0.0
        %3059 = vmatpush1.msra.mxu0 0.0
        %3060 = vmatprep.subr.mxu0 0.0
        %3061 = vmatpush1.msra.mxu0 0.0
        %3062 = vmatprep.subr.mxu0 0.0
        %3063 = vmatpush1.msra.mxu0 0.0
        %3064 = vmatprep.subr.mxu0 0.0
        %3065 = vmatpush1.msra.mxu0 0.0
        %3066 = vmatprep.subr.mxu0 0.0
        %3067 = vmatpush1.msra.mxu0 0.0
        %3068 = vmatprep.subr.mxu0 0.0
        %3069 = vmatpush1.msra.mxu0 %v3036
        %3070 = vmatprep.subr.mxu0 0.0
        %3071 = vmatpush2.msra.mxu0 0.0
        %3072 = vmatprep.subr.mxu0 0.0
        %3073 = vmatpush2.msra.mxu0 0.0
        %3074 = vmatprep.subr.mxu0 0.0
        %3075 = vmatpush2.msra.mxu0 0.0
        %3076 = vmatprep.subr.mxu0 0.0
        %3077 = vmatpush2.msra.mxu0 0.0
        %3078 = vmatprep.subr.mxu0 0.0
        %3079 = vmatpush2.msra.mxu0 0.0
        %3080 = vmatprep.subr.mxu0 0.0
        %3081 = vmatpush2.msra.mxu0 0.0
        %3082 = vmatprep.subr.mxu0 0.0
        %3083 = vmatpush2.msra.mxu0 0.0
        %3084 = vmatprep.subr.mxu0 0.0
        %3085 = vmatpush2.msra.mxu0 0.0
        %3086 = vmatprep.subr.mxu0 0.0
        %3087 = vmatpush2.msra.mxu0 0.0
        %3088 = vmatprep.subr.mxu0 0.0
        %3089 = vmatpush2.msra.mxu0 0.0
        %3090 = vmatprep.subr.mxu0 0.0
        %3091 = vmatpush2.msra.mxu0 0.0
        %3092 = vmatprep.subr.mxu0 0.0
        %3093 = vmatpush2.msra.mxu0 0.0
        %3094 = vmatprep.subr.mxu0 0.0
        %3095 = vmatpush2.msra.mxu0 0.0
        %3096 = vmatprep.subr.mxu0 0.0
        %3097 = vmatpush2.msra.mxu0 0.0
        %3098 = vmatprep.subr.mxu0 0.0
        %3099 = vmatpush2.msra.mxu0 0.0
        %3100 = vmatprep.subr.mxu0 0.0
        %3101 = vmatpush2.msra.mxu0 0.0
        %3102 = vmatprep.mubr.f32.mxu0 0.0
        %3103 = vmatmul.mubr.f32.gmra.mxu0 %v1208
        %v3104 = vpop.f32.mrf.mxu0
        %v3105 = vadd.f32 %v3034, %v3104
        %v3106 = vpop.f32.mrf.mxu0
        %3107 = vdwg.mxu0
        %s3108 = scalar_lea.vmem %s17, 32
        %v3109 = vld [vmem:[%s3108] sm:$0xff]
        %v3110 = vld [vmem:[%s3108 + $0x8] sm:$0xff]
        %v3111 = vld [vmem:[%s3108 + $0x10] sm:$0xff]
        %v3112 = vld [vmem:[%s3108 + $0x18] sm:$0xff]
        %3113 = vmatprep.subr.mxu0 0.0
        %3114 = vmatpush1.msra.mxu0 0.0
        %3115 = vmatprep.subr.mxu0 0.0
        %3116 = vmatpush1.msra.mxu0 0.0
        %3117 = vmatprep.subr.mxu0 0.0
        %3118 = vmatpush1.msra.mxu0 0.0
        %3119 = vmatprep.subr.mxu0 0.0
        %3120 = vmatpush1.msra.mxu0 0.0
        %3121 = vmatprep.subr.mxu0 0.0
        %3122 = vmatpush1.msra.mxu0 0.0
        %3123 = vmatprep.subr.mxu0 0.0
        %3124 = vmatpush1.msra.mxu0 0.0
        %3125 = vmatprep.subr.mxu0 0.0
        %3126 = vmatpush1.msra.mxu0 0.0
        %3127 = vmatprep.subr.mxu0 0.0
        %3128 = vmatpush1.msra.mxu0 0.0
        %3129 = vmatprep.subr.mxu0 0.0
        %3130 = vmatpush1.msra.mxu0 0.0
        %3131 = vmatprep.subr.mxu0 0.0
        %3132 = vmatpush1.msra.mxu0 0.0
        %3133 = vmatprep.subr.mxu0 0.0
        %3134 = vmatpush1.msra.mxu0 0.0
        %3135 = vmatprep.subr.mxu0 0.0
        %3136 = vmatpush1.msra.mxu0 0.0
        %3137 = vmatprep.subr.mxu0 0.0
        %3138 = vmatpush1.msra.mxu0 %v3112
        %3139 = vmatprep.subr.mxu0 0.0
        %3140 = vmatpush1.msra.mxu0 %v3111
        %3141 = vmatprep.subr.mxu0 0.0
        %3142 = vmatpush1.msra.mxu0 %v3110
        %3143 = vmatprep.subr.mxu0 0.0
        %3144 = vmatpush1.msra.mxu0 %v3109
        %3145 = vmatprep.subr.mxu0 0.0
        %3146 = vmatpush2.msra.mxu0 0.0
        %3147 = vmatprep.subr.mxu0 0.0
        %3148 = vmatpush2.msra.mxu0 0.0
        %3149 = vmatprep.subr.mxu0 0.0
        %3150 = vmatpush2.msra.mxu0 0.0
        %3151 = vmatprep.subr.mxu0 0.0
        %3152 = vmatpush2.msra.mxu0 0.0
        %3153 = vmatprep.subr.mxu0 0.0
        %3154 = vmatpush2.msra.mxu0 0.0
        %3155 = vmatprep.subr.mxu0 0.0
        %3156 = vmatpush2.msra.mxu0 0.0
        %3157 = vmatprep.subr.mxu0 0.0
        %3158 = vmatpush2.msra.mxu0 0.0
        %3159 = vmatprep.subr.mxu0 0.0
        %3160 = vmatpush2.msra.mxu0 0.0
        %3161 = vmatprep.subr.mxu0 0.0
        %3162 = vmatpush2.msra.mxu0 0.0
        %3163 = vmatprep.subr.mxu0 0.0
        %3164 = vmatpush2.msra.mxu0 0.0
        %3165 = vmatprep.subr.mxu0 0.0
        %3166 = vmatpush2.msra.mxu0 0.0
        %3167 = vmatprep.subr.mxu0 0.0
        %3168 = vmatpush2.msra.mxu0 0.0
        %3169 = vmatprep.subr.mxu0 0.0
        %3170 = vmatpush2.msra.mxu0 0.0
        %3171 = vmatprep.subr.mxu0 0.0
        %3172 = vmatpush2.msra.mxu0 0.0
        %3173 = vmatprep.subr.mxu0 0.0
        %3174 = vmatpush2.msra.mxu0 0.0
        %3175 = vmatprep.subr.mxu0 0.0
        %3176 = vmatpush2.msra.mxu0 0.0
        %3177 = vmatprep.mubr.f32.mxu0 0.0
        %3178 = vmatmul.mubr.f32.gmra.mxu0 %v2962
        %v3179 = vpop.f32.mrf.mxu0
        %v3180 = vadd.f32 0.0, %v3179
        %v3181 = vpop.f32.mrf.mxu0
        %3182 = vdwg.mxu0
        %v3183 = vmul.f32 %v2393, %v3180
        %v3184 = vadd.f32 %v3105, %v3183
        %s3185 = scalar_lea.vmem %s17, 64
        %v3186 = vld [vmem:[%s3185] sm:$0xff]
        %v3187 = vld [vmem:[%s3185 + $0x8] sm:$0xff]
        %v3188 = vld [vmem:[%s3185 + $0x10] sm:$0xff]
        %v3189 = vld [vmem:[%s3185 + $0x18] sm:$0xff]
        %3190 = vmatprep.subr.mxu0 0.0
        %3191 = vmatpush1.msra.mxu0 0.0
        %3192 = vmatprep.subr.mxu0 0.0
        %3193 = vmatpush1.msra.mxu0 0.0
        %3194 = vmatprep.subr.mxu0 0.0
        %3195 = vmatpush1.msra.mxu0 0.0
        %3196 = vmatprep.subr.mxu0 0.0
        %3197 = vmatpush1.msra.mxu0 0.0
        %3198 = vmatprep.subr.mxu0 0.0
        %3199 = vmatpush1.msra.mxu0 0.0
        %3200 = vmatprep.subr.mxu0 0.0
        %3201 = vmatpush1.msra.mxu0 0.0
        %3202 = vmatprep.subr.mxu0 0.0
        %3203 = vmatpush1.msra.mxu0 0.0
        %3204 = vmatprep.subr.mxu0 0.0
        %3205 = vmatpush1.msra.mxu0 0.0
        %3206 = vmatprep.subr.mxu0 0.0
        %3207 = vmatpush1.msra.mxu0 0.0
        %3208 = vmatprep.subr.mxu0 0.0
        %3209 = vmatpush1.msra.mxu0 0.0
        %3210 = vmatprep.subr.mxu0 0.0
        %3211 = vmatpush1.msra.mxu0 0.0
        %3212 = vmatprep.subr.mxu0 0.0
        %3213 = vmatpush1.msra.mxu0 0.0
        %3214 = vmatprep.subr.mxu0 0.0
        %3215 = vmatpush1.msra.mxu0 %v3189
        %3216 = vmatprep.subr.mxu0 0.0
        %3217 = vmatpush1.msra.mxu0 %v3188
        %3218 = vmatprep.subr.mxu0 0.0
        %3219 = vmatpush1.msra.mxu0 %v3187
        %3220 = vmatprep.subr.mxu0 0.0
        %3221 = vmatpush1.msra.mxu0 %v3186
        %3222 = vmatprep.subr.mxu0 0.0
        %3223 = vmatpush2.msra.mxu0 0.0
        %3224 = vmatprep.subr.mxu0 0.0
        %3225 = vmatpush2.msra.mxu0 0.0
        %3226 = vmatprep.subr.mxu0 0.0
        %3227 = vmatpush2.msra.mxu0 0.0
        %3228 = vmatprep.subr.mxu0 0.0
        %3229 = vmatpush2.msra.mxu0 0.0
        %3230 = vmatprep.subr.mxu0 0.0
        %3231 = vmatpush2.msra.mxu0 0.0
        %3232 = vmatprep.subr.mxu0 0.0
        %3233 = vmatpush2.msra.mxu0 0.0
        %3234 = vmatprep.subr.mxu0 0.0
        %3235 = vmatpush2.msra.mxu0 0.0
        %3236 = vmatprep.subr.mxu0 0.0
        %3237 = vmatpush2.msra.mxu0 0.0
        %3238 = vmatprep.subr.mxu0 0.0
        %3239 = vmatpush2.msra.mxu0 0.0
        %3240 = vmatprep.subr.mxu0 0.0
        %3241 = vmatpush2.msra.mxu0 0.0
        %3242 = vmatprep.subr.mxu0 0.0
        %3243 = vmatpush2.msra.mxu0 0.0
        %3244 = vmatprep.subr.mxu0 0.0
        %3245 = vmatpush2.msra.mxu0 0.0
        %3246 = vmatprep.subr.mxu0 0.0
        %3247 = vmatpush2.msra.mxu0 0.0
        %3248 = vmatprep.subr.mxu0 0.0
        %3249 = vmatpush2.msra.mxu0 0.0
        %3250 = vmatprep.subr.mxu0 0.0
        %3251 = vmatpush2.msra.mxu0 0.0
        %3252 = vmatprep.subr.mxu0 0.0
        %3253 = vmatpush2.msra.mxu0 0.0
        %3254 = vmatprep.mubr.f32.mxu0 0.0
        %3255 = vmatmul.mubr.f32.gmra.mxu0 %v2962
        %v3256 = vpop.f32.mrf.mxu0
        %v3257 = vadd.f32 0.0, %v3256
        %v3258 = vpop.f32.mrf.mxu0
        %3259 = vdwg.mxu0
        %v3260 = vmul.f32 %v2476, %v3257
        %v3261 = vadd.f32 %v3184, %v3260
        %s3262 = scalar_lea.vmem %s17, 96
        %v3263 = vld [vmem:[%s3262] sm:$0xff]
        %v3264 = vld [vmem:[%s3262 + $0x8] sm:$0xff]
        %v3265 = vld [vmem:[%s3262 + $0x10] sm:$0xff]
        %v3266 = vld [vmem:[%s3262 + $0x18] sm:$0xff]
        %3267 = vmatprep.subr.mxu0 0.0
        %3268 = vmatpush1.msra.mxu0 0.0
        %3269 = vmatprep.subr.mxu0 0.0
        %3270 = vmatpush1.msra.mxu0 0.0
        %3271 = vmatprep.subr.mxu0 0.0
        %3272 = vmatpush1.msra.mxu0 0.0
        %3273 = vmatprep.subr.mxu0 0.0
        %3274 = vmatpush1.msra.mxu0 0.0
        %3275 = vmatprep.subr.mxu0 0.0
        %3276 = vmatpush1.msra.mxu0 0.0
        %3277 = vmatprep.subr.mxu0 0.0
        %3278 = vmatpush1.msra.mxu0 0.0
        %3279 = vmatprep.subr.mxu0 0.0
        %3280 = vmatpush1.msra.mxu0 0.0
        %3281 = vmatprep.subr.mxu0 0.0
        %3282 = vmatpush1.msra.mxu0 0.0
        %3283 = vmatprep.subr.mxu0 0.0
        %3284 = vmatpush1.msra.mxu0 0.0
        %3285 = vmatprep.subr.mxu0 0.0
        %3286 = vmatpush1.msra.mxu0 0.0
        %3287 = vmatprep.subr.mxu0 0.0
        %3288 = vmatpush1.msra.mxu0 0.0
        %3289 = vmatprep.subr.mxu0 0.0
        %3290 = vmatpush1.msra.mxu0 0.0
        %3291 = vmatprep.subr.mxu0 0.0
        %3292 = vmatpush1.msra.mxu0 %v3266
        %3293 = vmatprep.subr.mxu0 0.0
        %3294 = vmatpush1.msra.mxu0 %v3265
        %3295 = vmatprep.subr.mxu0 0.0
        %3296 = vmatpush1.msra.mxu0 %v3264
        %3297 = vmatprep.subr.mxu0 0.0
        %3298 = vmatpush1.msra.mxu0 %v3263
        %3299 = vmatprep.subr.mxu0 0.0
        %3300 = vmatpush2.msra.mxu0 0.0
        %3301 = vmatprep.subr.mxu0 0.0
        %3302 = vmatpush2.msra.mxu0 0.0
        %3303 = vmatprep.subr.mxu0 0.0
        %3304 = vmatpush2.msra.mxu0 0.0
        %3305 = vmatprep.subr.mxu0 0.0
        %3306 = vmatpush2.msra.mxu0 0.0
        %3307 = vmatprep.subr.mxu0 0.0
        %3308 = vmatpush2.msra.mxu0 0.0
        %3309 = vmatprep.subr.mxu0 0.0
        %3310 = vmatpush2.msra.mxu0 0.0
        %3311 = vmatprep.subr.mxu0 0.0
        %3312 = vmatpush2.msra.mxu0 0.0
        %3313 = vmatprep.subr.mxu0 0.0
        %3314 = vmatpush2.msra.mxu0 0.0
        %3315 = vmatprep.subr.mxu0 0.0
        %3316 = vmatpush2.msra.mxu0 0.0
        %3317 = vmatprep.subr.mxu0 0.0
        %3318 = vmatpush2.msra.mxu0 0.0
        %3319 = vmatprep.subr.mxu0 0.0
        %3320 = vmatpush2.msra.mxu0 0.0
        %3321 = vmatprep.subr.mxu0 0.0
        %3322 = vmatpush2.msra.mxu0 0.0
        %3323 = vmatprep.subr.mxu0 0.0
        %3324 = vmatpush2.msra.mxu0 0.0
        %3325 = vmatprep.subr.mxu0 0.0
        %3326 = vmatpush2.msra.mxu0 0.0
        %3327 = vmatprep.subr.mxu0 0.0
        %3328 = vmatpush2.msra.mxu0 0.0
        %3329 = vmatprep.subr.mxu0 0.0
        %3330 = vmatpush2.msra.mxu0 0.0
        %3331 = vmatprep.mubr.f32.mxu0 0.0
        %3332 = vmatmul.mubr.f32.gmra.mxu0 %v2962
        %v3333 = vpop.f32.mrf.mxu0
        %v3334 = vadd.f32 0.0, %v3333
        %v3335 = vpop.f32.mrf.mxu0
        %3336 = vdwg.mxu0
        %v3337 = vmul.f32 %v2559, %v3334
        %v3338 = vadd.f32 %v3261, %v3337
        %v3339 = vld [vmem:[%s22] sm:$0x1]
        %v3341 = vlaneseq
        %v3342 = vshrl.u32 %v3341, 7
        %v3343 = vsub.s32 0, %v3342
        %v3344 = vrot.slane %v3339, %v3343
        %v3346 = vmul.f32 %v3338, %v3344
        %v3347 = vld [vmem:[%s21] sm:$0x1]
        %v3349 = vlaneseq
        %v3350 = vshrl.u32 %v3349, 7
        %v3351 = vsub.s32 0, %v3350
        %v3352 = vrot.slane %v3347, %v3351
        %v3354 = vadd.f32 %v3346, %v3352
        %3355 = vst.msk [vmem:[%s823] sm:$0xff] %vm921, %v3354
        %s3356 = sand.u32 %s543, 1
        %s3357 = scalar_lea.sflag [#allocation3], %s3356
        %s3358 = sand.u32 %s543, 1
        %s3359 = smul.addr %s3358, 8
        %s3360 = scalar_lea.vmem [#allocation2], %s3359
        %p3361 = scmp.lt.s32.totalorder %s42, 1
        %s3362 = scalar_select %p3361, %s42, 1
        %s3363 = smul.addr %s3362, 8
        %s3364 = scalar_lea.vmem %s24, %s3363
        %p3365 = scmp.lt.s32.totalorder %s42, 1
        %s3366 = scalar_select %p3365, %s42, 1
        %s3367 = smul.addr %s3366, 12
        %s3368 = smul.addr %s3367, 8
        %s3369 = scalar_lea.vmem %s25, %s3368
        %p3370 = scmp.lt.s32.totalorder %s42, 1
        %s3371 = scalar_select %p3370, %s42, 1
        %s3372 = smul.addr %s3371, 8
        %s3373 = smul.addr %s3372, 8
        %s3374 = scalar_lea.vmem %s26, %s3373
        %p3375 = scmp.lt.s32.totalorder %s42, 1
        %s3376 = scalar_select %p3375, %s42, 1
        %s3377 = smul.addr %s3376, 4
        %s3378 = smul.addr %s3377, 8
        %s3379 = scalar_lea.vmem %s27, %s3378
        // Predicated region
        $region113: #{mann_forward.1} parent=111 // pred_check
          %p3380 = pneg %p553
        $region114: #{mann_forward.1} parent=111 // pred_check_branch
          %3382 = sbr.rel (%p3380) target = $region116
        $region115: #{mann_forward.1} parent=111 // pred_region
          %s3384 = ssub.s32 128, 128
          %3385 = vsyncadd %s3357, %s3384
          %s3386 = smul.addr %s42, 128
          %s3387 = scalar_lea.hbm %s23, %s3386
          %s3389 = sshll.u32 %s3360, 4
          %s3390 = int_to_ptr.vmem [resolvable:$true] %s3389
          %3392 = dma.vmem_to_hbm [thread:$0]  %s3390, 128, %s3387, %s3357
        $region116: #{mann_forward.1} parent=111 // pred_fallthru
          _
        // Predicated region
        $region117: #{mann_forward.1} parent=111 // pred_check
          %p3393 = pneg %p579
        $region118: #{mann_forward.1} parent=111 // pred_check_branch
          %3395 = sbr.rel (%p3393) target = $region120
        $region119: #{mann_forward.1} parent=111 // pred_region
          _
        $region120: #{mann_forward.1} parent=111 // pred_fallthru
          _
        // Predicated region
        $region121: #{mann_forward.1} parent=111 // pred_check
          %p3396 = pneg %p605
        $region122: #{mann_forward.1} parent=111 // pred_check_branch
          %3398 = sbr.rel (%p3396) target = $region124
        $region123: #{mann_forward.1} parent=111 // pred_region
          _
        $region124: #{mann_forward.1} parent=111 // pred_fallthru
          _
        // Predicated region
        $region125: #{mann_forward.1} parent=111 // pred_check
          %p3399 = pneg %p631
        $region126: #{mann_forward.1} parent=111 // pred_check_branch
          %3401 = sbr.rel (%p3399) target = $region128
        $region127: #{mann_forward.1} parent=111 // pred_region
          _
        $region128: #{mann_forward.1} parent=111 // pred_fallthru
          _
        // Predicated region
        $region129: #{mann_forward.1} parent=111 // pred_check
          %p3402 = pneg %p657
        $region130: #{mann_forward.1} parent=111 // pred_check_branch
          %3404 = sbr.rel (%p3402) target = $region132
        $region131: #{mann_forward.1} parent=111 // pred_region
          _
        $region132: #{mann_forward.1} parent=111 // pred_fallthru
          _
      $region112: #{mann_forward.1} parent=5 // pred_fallthru
        _
      %p3405 = scmp.le.s32.totalorder 2, %s37
      // Predicated region
      $region133: #{mann_forward.1} parent=5 // pred_check
        %p3406 = pneg %p3405
      $region134: #{mann_forward.1} parent=5 // pred_check_branch
        %3408 = sbr.rel (%p3406) target = $region136
      $region135: #{mann_forward.1} parent=5 // pred_region
        %s3409 = ssub.s32 %s37, 2
        // Predicated region
        $region137: #{mann_forward.1} parent=135 // pred_check
          %p3410 = pneg %p559
        $region138: #{mann_forward.1} parent=135 // pred_check_branch
          %3412 = sbr.rel (%p3410) target = $region140
        $region139: #{mann_forward.1} parent=135 // pred_region
          %s3413 = sand.u32 %s544, 1
          %s3414 = scalar_lea.sflag [#allocation3], %s3413
          %s3415 = sand.u32 %s544, 1
          %s3416 = smul.addr %s3415, 8
          %s3417 = scalar_lea.vmem [#allocation2], %s3416
          %3418 = dma.done %s3414, 128
        $region140: #{mann_forward.1} parent=135 // pred_fallthru
          _
        // Predicated region
        $region141: #{mann_forward.1} parent=135 // pred_check
          %p3419 = pneg %p585
        $region142: #{mann_forward.1} parent=135 // pred_check_branch
          %3421 = sbr.rel (%p3419) target = $region144
        $region143: #{mann_forward.1} parent=135 // pred_region
          %p3422 = scmp.lt.s32.totalorder %s43, 1
          %s3423 = scalar_select %p3422, %s43, 1
          %s3424 = smul.addr %s3423, 8
          %s3425 = scalar_lea.vmem %s24, %s3424
        $region144: #{mann_forward.1} parent=135 // pred_fallthru
          _
        // Predicated region
        $region145: #{mann_forward.1} parent=135 // pred_check
          %p3426 = pneg %p611
        $region146: #{mann_forward.1} parent=135 // pred_check_branch
          %3428 = sbr.rel (%p3426) target = $region148
        $region147: #{mann_forward.1} parent=135 // pred_region
          %p3429 = scmp.lt.s32.totalorder %s43, 1
          %s3430 = scalar_select %p3429, %s43, 1
          %s3431 = smul.addr %s3430, 12
          %s3432 = smul.addr %s3431, 8
          %s3433 = scalar_lea.vmem %s25, %s3432
        $region148: #{mann_forward.1} parent=135 // pred_fallthru
          _
        // Predicated region
        $region149: #{mann_forward.1} parent=135 // pred_check
          %p3434 = pneg %p637
        $region150: #{mann_forward.1} parent=135 // pred_check_branch
          %3436 = sbr.rel (%p3434) target = $region152
        $region151: #{mann_forward.1} parent=135 // pred_region
          %p3437 = scmp.lt.s32.totalorder %s43, 1
          %s3438 = scalar_select %p3437, %s43, 1
          %s3439 = smul.addr %s3438, 8
          %s3440 = smul.addr %s3439, 8
          %s3441 = scalar_lea.vmem %s26, %s3440
        $region152: #{mann_forward.1} parent=135 // pred_fallthru
          _
        // Predicated region
        $region153: #{mann_forward.1} parent=135 // pred_check
          %p3442 = pneg %p663
        $region154: #{mann_forward.1} parent=135 // pred_check_branch
          %3444 = sbr.rel (%p3442) target = $region156
        $region155: #{mann_forward.1} parent=135 // pred_region
          %p3445 = scmp.lt.s32.totalorder %s43, 1
          %s3446 = scalar_select %p3445, %s43, 1
          %s3447 = smul.addr %s3446, 4
          %s3448 = smul.addr %s3447, 8
          %s3449 = scalar_lea.vmem %s27, %s3448
        $region156: #{mann_forward.1} parent=135 // pred_fallthru
          _
      $region136: #{mann_forward.1} parent=5 // pred_fallthru
        _
    $region6: #{mann_forward.1} parent=1 // loop_footer
      %s41 = sadd.s32 1, %s37
    $region7: #{mann_forward.1} parent=1 // loop_footer_branch
      %36 = sbr.rel target = $region3
    $region8: #{mann_forward.1} parent=1 // loop_exit
      _
    %3450 = vsyncpa [#allocation3], 1
    %s3451 = scalar_lea.sflag [#allocation3], 1
    %3452 = vsyncpa %s3451, 1

</llo_original>
